<compile_context>
chip_gen: v7x
topology: tpu7x:2x2x1
jax: 0.10.0
libtpu: 0.0.40
codegen_flags: <defaults>
</compile_context>

<pallas_src>
import functools

import jax
import jax.numpy as jnp
from jax.experimental import pallas as pl
from jax.experimental.pallas import tpu as pltpu


def _attention_kernel(x_ref, wq_ref, wk_ref, wv_ref, wp_ref, bp_ref, o_ref,
                      q_scr, k_scr, v_scr, *, num_heads, scale):
    """One grid step == one batch element.

    x_ref  : (1, N, C)   f32   input tokens
    wq_ref : (H, C, hd)  bf16  per-head q weight, pre-transposed (y = x @ w)
    wk_ref : (H, C, hd)  bf16  per-head k weight
    wv_ref : (H, C, hd)  bf16  per-head v weight
    wp_ref : (H, hd, C)  bf16  per-head row-block of proj.weight.T
    bp_ref : (1, C)      f32   proj bias
    o_ref  : (1, N, C)         output tokens
    q/k/v_scr : (H, N, hd) bf16 scratch
    """
    x = x_ref[0].astype(jnp.bfloat16)                                   # (N, C)

    # Per-head projections -> (H, N, hd) scratch. Leading-dim stores only:
    # no in-kernel weight transposes, no lane slicing, no concatenation.
    for h in range(num_heads):
        q_scr[h] = (jnp.dot(x, wq_ref[h], preferred_element_type=jnp.float32)
                    * scale).astype(jnp.bfloat16)
        k_scr[h] = jnp.dot(x, wk_ref[h],
                           preferred_element_type=jnp.float32).astype(jnp.bfloat16)
        v_scr[h] = jnp.dot(x, wv_ref[h],
                           preferred_element_type=jnp.float32).astype(jnp.bfloat16)

    q = q_scr[...]                                                      # (H, N, hd)
    k = k_scr[...]
    v = v_scr[...]

    # Batched-head attention scores (MXU, bf16 in / f32 accumulate).
    s = jnp.einsum('hqd,hkd->hqk', q, k,
                   preferred_element_type=jnp.float32)                  # (H, N, N)

    # Softmax over keys in f32; reciprocal goes to the EUP slot.
    s = s - jnp.max(s, axis=-1, keepdims=True)
    p = jnp.exp(s)
    p = p * pl.reciprocal(jnp.sum(p, axis=-1, keepdims=True), approx=True)

    # Batched context, then fold the head-concat into the output projection:
    #   out = sum_h ctx_h @ (proj.weight.T)[h*hd:(h+1)*hd, :]
    ctx = jnp.einsum('hqk,hkd->hqd', p.astype(jnp.bfloat16), v,
                     preferred_element_type=jnp.float32)                # (H, N, hd)

    out = jnp.dot(ctx[0].astype(jnp.bfloat16), wp_ref[0],
                  preferred_element_type=jnp.float32)                   # (N, C)
    for h in range(1, num_heads):
        out = out + jnp.dot(ctx[h].astype(jnp.bfloat16), wp_ref[h],
                            preferred_element_type=jnp.float32)
    out = out + bp_ref[...]                                             # (1, C) broadcast

    o_ref[0] = out.astype(o_ref.dtype)


def attention_forward(x, wq, wkv, wp, bp, *, num_heads):
    """x: (B, N, C) float32; weights in PyTorch (out, in) layout. Returns (B, N, C)."""
    B, N, C = x.shape
    head_dim = C // num_heads
    scale = head_dim ** (-0.5)

    # Host-side weight re-layout (zero in-kernel cost):
    #   q/k/v : per-head (C, head_dim) column-blocks of W.T -> (H, C, hd), bf16
    #   proj  : per-head (head_dim, C) row-blocks   of W.T -> (H, hd, C), bf16
    wq_h = wq.reshape(num_heads, head_dim, C).transpose(0, 2, 1).astype(jnp.bfloat16)
    wk_h = wkv[:C].reshape(num_heads, head_dim, C).transpose(0, 2, 1).astype(jnp.bfloat16)
    wv_h = wkv[C:].reshape(num_heads, head_dim, C).transpose(0, 2, 1).astype(jnp.bfloat16)
    wp_h = wp.T.reshape(num_heads, head_dim, C).astype(jnp.bfloat16)
    bp_f = bp.astype(jnp.float32)

    kernel = functools.partial(_attention_kernel, num_heads=num_heads, scale=scale)

    return pl.pallas_call(
        kernel,
        out_shape=jax.ShapeDtypeStruct((B, N, C), x.dtype),
        grid_spec=pltpu.PrefetchScalarGridSpec(
            num_scalar_prefetch=0,
            grid=(B,),   # parallel axis length B (>= 2 keeps both v7x TCs busy)
            in_specs=[
                pl.BlockSpec((1, N, C), lambda b: (b, 0, 0)),               # x
                pl.BlockSpec((num_heads, C, head_dim), lambda b: (0, 0, 0)),  # wq
                pl.BlockSpec((num_heads, C, head_dim), lambda b: (0, 0, 0)),  # wk
                pl.BlockSpec((num_heads, C, head_dim), lambda b: (0, 0, 0)),  # wv
                pl.BlockSpec((num_heads, head_dim, C), lambda b: (0, 0, 0)),  # wproj
                pl.BlockSpec((1, C), lambda b: (0, 0)),                     # bproj
            ],
            out_specs=pl.BlockSpec((1, N, C), lambda b: (b, 0, 0)),
            scratch_shapes=[
                pltpu.VMEM((num_heads, N, head_dim), jnp.bfloat16),  # q
                pltpu.VMEM((num_heads, N, head_dim), jnp.bfloat16),  # k
                pltpu.VMEM((num_heads, N, head_dim), jnp.bfloat16),  # v
            ],
        ),
        compiler_params=pltpu.CompilerParams(
            dimension_semantics=("parallel",),
            vmem_limit_bytes=64 * 1024 * 1024,
        ),
    )(x, wq_h, wk_h, wv_h, wp_h, bp_f)


def attention_reference(x, wq, wkv, wp, bp, *, num_heads):
    """Pure-JAX f32 reference mirroring the PyTorch forward (sr_ratio=1, eval)."""
    B, N, C = x.shape
    hd = C // num_heads
    scale = hd ** (-0.5)
    q = (x @ wq.T).reshape(B, N, num_heads, hd).transpose(0, 2, 1, 3)
    kv = (x @ wkv.T).reshape(B, N, 2, num_heads, hd).transpose(2, 0, 3, 1, 4)
    k, v = kv[0], kv[1]
    attn = jnp.einsum("bhqd,bhkd->bhqk", q, k) * scale
    attn = jax.nn.softmax(attn, axis=-1)
    out = jnp.einsum("bhqk,bhkd->bhqd", attn, v)
    out = out.transpose(0, 2, 1, 3).reshape(B, N, C)
    return out @ wp.T + bp[0]


if __name__ == "__main__":
    # Small shapes consistent with the module: dim divisible by num_heads.
    B, H, W = 2, 8, 8
    N = H * W          # 64 tokens
    C = 32             # dim
    num_heads = 8      # head_dim = 4

    key = jax.random.PRNGKey(0)
    kx, kq, kkv, kp, kb = jax.random.split(key, 5)

    x = jax.random.normal(kx, (B, N, C), dtype=jnp.float32)
    # Deterministic synthetic "Linear" parameters in PyTorch (out, in) layout.
    wq = jax.random.normal(kq, (C, C), dtype=jnp.float32) * (C ** -0.5)
    wkv = jax.random.normal(kkv, (2 * C, C), dtype=jnp.float32) * (C ** -0.5)
    wp = jax.random.normal(kp, (C, C), dtype=jnp.float32) * (C ** -0.5)
    bp = jax.random.normal(kb, (1, C), dtype=jnp.float32) * 0.01

    out = attention_forward(x, wq, wkv, wp, bp, num_heads=num_heads)
    out = jax.block_until_ready(out)

    ref = attention_reference(x, wq, wkv, wp, bp, num_heads=num_heads)
    assert out.shape == (B, N, C)
    # Kernel uses bf16 MXU operands (f32 accumulation) -> loosened tolerance
    # against the f32 reference.
    assert jnp.allclose(out, ref, atol=5e-2, rtol=5e-2), "mismatch vs reference"

    print("KERNEL_OK")
</pallas_src>

<mosaic_0001>
module attributes {stable_mosaic.version = 11 : i64} {
  func.func @_attention_kernel(%arg0: i32, %arg1: memref<1x64x32xf32, #tpu.memory_space<vmem>>, %arg2: memref<8x32x4xbf16, #tpu.memory_space<vmem>>, %arg3: memref<8x32x4xbf16, #tpu.memory_space<vmem>>, %arg4: memref<8x32x4xbf16, #tpu.memory_space<vmem>>, %arg5: memref<8x4x32xbf16, #tpu.memory_space<vmem>>, %arg6: memref<1x32xf32, #tpu.memory_space<vmem>>, %arg7: memref<1x64x32xf32, #tpu.memory_space<vmem>>, %arg8: memref<8x64x4xbf16, #tpu.memory_space<vmem>>, %arg9: memref<8x64x4xbf16, #tpu.memory_space<vmem>>, %arg10: memref<8x64x4xbf16, #tpu.memory_space<vmem>>) attributes {dimension_semantics = [#tpu.dimension_semantics<parallel>], iteration_bounds = array<i64: 2>, scalar_prefetch = 0 : i64, scratch_operands = 3 : i64, tpu.core_type = #tpu.core_type<tc>, window_params = [{transform_indices = @transform_0, window_bounds = array<i64: 1, 64, 32>}, {pipeline_mode = #tpu.pipeline_mode<synchronous>, transform_indices = @transform_1, window_bounds = array<i64: 8, 32, 4>}, {pipeline_mode = #tpu.pipeline_mode<synchronous>, transform_indices = @transform_2, window_bounds = array<i64: 8, 32, 4>}, {pipeline_mode = #tpu.pipeline_mode<synchronous>, transform_indices = @transform_3, window_bounds = array<i64: 8, 32, 4>}, {pipeline_mode = #tpu.pipeline_mode<synchronous>, transform_indices = @transform_4, window_bounds = array<i64: 8, 4, 32>}, {pipeline_mode = #tpu.pipeline_mode<synchronous>, transform_indices = @transform_5, window_bounds = array<i64: 1, 32>}, {transform_indices = @transform_6, window_bounds = array<i64: 1, 64, 32>}]} {
    %c0 = arith.constant 0 : index
    %c0_0 = arith.constant 0 : index
    %c0_1 = arith.constant 0 : index
    %0 = vector.load %arg1[%c0, %c0_0, %c0_1] : memref<1x64x32xf32, #tpu.memory_space<vmem>>, vector<1x64x32xf32>
    %1 = vector.shape_cast %0 : vector<1x64x32xf32> to vector<64x32xf32>
    %2 = arith.truncf %1 : vector<64x32xf32> to vector<64x32xbf16>
    %c0_2 = arith.constant 0 : index
    %c0_3 = arith.constant 0 : index
    %c0_4 = arith.constant 0 : index
    %3 = vector.load %arg2[%c0_2, %c0_3, %c0_4] : memref<8x32x4xbf16, #tpu.memory_space<vmem>>, vector<1x32x4xbf16>
    %4 = vector.shape_cast %3 : vector<1x32x4xbf16> to vector<32x4xbf16>
    %cst = arith.constant dense<0.000000e+00> : vector<64x4xf32>
    %5 = tpu.matmul %2, %4, %cst {dimension_numbers = #tpu.dot_dimension_numbers<[1], [0], [0], [1], [0, 0, 1, 1], [], []>} : vector<64x32xbf16>, vector<32x4xbf16>, vector<64x4xf32> -> vector<64x4xf32>
    %cst_5 = arith.constant 5.000000e-01 : f32
    %6 = vector.broadcast %cst_5 : f32 to vector<64x4xf32>
    %7 = arith.mulf %5, %6 : vector<64x4xf32>
    %8 = arith.truncf %7 : vector<64x4xf32> to vector<64x4xbf16>
    %c0_6 = arith.constant 0 : index
    %c0_7 = arith.constant 0 : index
    %c0_8 = arith.constant 0 : index
    %9 = vector.load %arg8[%c0_6, %c0_7, %c0_8] : memref<8x64x4xbf16, #tpu.memory_space<vmem>>, vector<1x64x4xbf16>
    %10 = vector.shape_cast %9 : vector<1x64x4xbf16> to vector<64x4xbf16>
    %11 = vector.shape_cast %8 : vector<64x4xbf16> to vector<1x64x4xbf16>
    tpu.vector_store %arg8[%c0_6, %c0_7, %c0_8], %11 {strides = array<i32>} : memref<8x64x4xbf16, #tpu.memory_space<vmem>>, vector<1x64x4xbf16>,
    %c0_9 = arith.constant 0 : index
    %c0_10 = arith.constant 0 : index
    %c0_11 = arith.constant 0 : index
    %12 = vector.load %arg3[%c0_9, %c0_10, %c0_11] : memref<8x32x4xbf16, #tpu.memory_space<vmem>>, vector<1x32x4xbf16>
    %13 = vector.shape_cast %12 : vector<1x32x4xbf16> to vector<32x4xbf16>
    %cst_12 = arith.constant dense<0.000000e+00> : vector<64x4xf32>
    %14 = tpu.matmul %2, %13, %cst_12 {dimension_numbers = #tpu.dot_dimension_numbers<[1], [0], [0], [1], [0, 0, 1, 1], [], []>} : vector<64x32xbf16>, vector<32x4xbf16>, vector<64x4xf32> -> vector<64x4xf32>
    %15 = arith.truncf %14 : vector<64x4xf32> to vector<64x4xbf16>
    %c0_13 = arith.constant 0 : index
    %c0_14 = arith.constant 0 : index
    %c0_15 = arith.constant 0 : index
    %16 = vector.load %arg9[%c0_13, %c0_14, %c0_15] : memref<8x64x4xbf16, #tpu.memory_space<vmem>>, vector<1x64x4xbf16>
    %17 = vector.shape_cast %16 : vector<1x64x4xbf16> to vector<64x4xbf16>
    %18 = vector.shape_cast %15 : vector<64x4xbf16> to vector<1x64x4xbf16>
    tpu.vector_store %arg9[%c0_13, %c0_14, %c0_15], %18 {strides = array<i32>} : memref<8x64x4xbf16, #tpu.memory_space<vmem>>, vector<1x64x4xbf16>,
    %c0_16 = arith.constant 0 : index
    %c0_17 = arith.constant 0 : index
    %c0_18 = arith.constant 0 : index
    %19 = vector.load %arg4[%c0_16, %c0_17, %c0_18] : memref<8x32x4xbf16, #tpu.memory_space<vmem>>, vector<1x32x4xbf16>
    %20 = vector.shape_cast %19 : vector<1x32x4xbf16> to vector<32x4xbf16>
    %cst_19 = arith.constant dense<0.000000e+00> : vector<64x4xf32>
    %21 = tpu.matmul %2, %20, %cst_19 {dimension_numbers = #tpu.dot_dimension_numbers<[1], [0], [0], [1], [0, 0, 1, 1], [], []>} : vector<64x32xbf16>, vector<32x4xbf16>, vector<64x4xf32> -> vector<64x4xf32>
    %22 = arith.truncf %21 : vector<64x4xf32> to vector<64x4xbf16>
    %c0_20 = arith.constant 0 : index
    %c0_21 = arith.constant 0 : index
    %c0_22 = arith.constant 0 : index
    %23 = vector.load %arg10[%c0_20, %c0_21, %c0_22] : memref<8x64x4xbf16, #tpu.memory_space<vmem>>, vector<1x64x4xbf16>
    %24 = vector.shape_cast %23 : vector<1x64x4xbf16> to vector<64x4xbf16>
    %25 = vector.shape_cast %22 : vector<64x4xbf16> to vector<1x64x4xbf16>
    tpu.vector_store %arg10[%c0_20, %c0_21, %c0_22], %25 {strides = array<i32>} : memref<8x64x4xbf16, #tpu.memory_space<vmem>>, vector<1x64x4xbf16>,
    %c1 = arith.constant 1 : index
    %c0_23 = arith.constant 0 : index
    %c0_24 = arith.constant 0 : index
    %26 = vector.load %arg2[%c1, %c0_23, %c0_24] : memref<8x32x4xbf16, #tpu.memory_space<vmem>>, vector<1x32x4xbf16>
    %27 = vector.shape_cast %26 : vector<1x32x4xbf16> to vector<32x4xbf16>
    %cst_25 = arith.constant dense<0.000000e+00> : vector<64x4xf32>
    %28 = tpu.matmul %2, %27, %cst_25 {dimension_numbers = #tpu.dot_dimension_numbers<[1], [0], [0], [1], [0, 0, 1, 1], [], []>} : vector<64x32xbf16>, vector<32x4xbf16>, vector<64x4xf32> -> vector<64x4xf32>
    %cst_26 = arith.constant 5.000000e-01 : f32
    %29 = vector.broadcast %cst_26 : f32 to vector<64x4xf32>
    %30 = arith.mulf %28, %29 : vector<64x4xf32>
    %31 = arith.truncf %30 : vector<64x4xf32> to vector<64x4xbf16>
    %c1_27 = arith.constant 1 : index
    %c0_28 = arith.constant 0 : index
    %c0_29 = arith.constant 0 : index
    %32 = vector.load %arg8[%c1_27, %c0_28, %c0_29] : memref<8x64x4xbf16, #tpu.memory_space<vmem>>, vector<1x64x4xbf16>
    %33 = vector.shape_cast %32 : vector<1x64x4xbf16> to vector<64x4xbf16>
    %34 = vector.shape_cast %31 : vector<64x4xbf16> to vector<1x64x4xbf16>
    tpu.vector_store %arg8[%c1_27, %c0_28, %c0_29], %34 {strides = array<i32>} : memref<8x64x4xbf16, #tpu.memory_space<vmem>>, vector<1x64x4xbf16>,
    %c1_30 = arith.constant 1 : index
    %c0_31 = arith.constant 0 : index
    %c0_32 = arith.constant 0 : index
    %35 = vector.load %arg3[%c1_30, %c0_31, %c0_32] : memref<8x32x4xbf16, #tpu.memory_space<vmem>>, vector<1x32x4xbf16>
    %36 = vector.shape_cast %35 : vector<1x32x4xbf16> to vector<32x4xbf16>
    %cst_33 = arith.constant dense<0.000000e+00> : vector<64x4xf32>
    %37 = tpu.matmul %2, %36, %cst_33 {dimension_numbers = #tpu.dot_dimension_numbers<[1], [0], [0], [1], [0, 0, 1, 1], [], []>} : vector<64x32xbf16>, vector<32x4xbf16>, vector<64x4xf32> -> vector<64x4xf32>
    %38 = arith.truncf %37 : vector<64x4xf32> to vector<64x4xbf16>
    %c1_34 = arith.constant 1 : index
    %c0_35 = arith.constant 0 : index
    %c0_36 = arith.constant 0 : index
    %39 = vector.load %arg9[%c1_34, %c0_35, %c0_36] : memref<8x64x4xbf16, #tpu.memory_space<vmem>>, vector<1x64x4xbf16>
    %40 = vector.shape_cast %39 : vector<1x64x4xbf16> to vector<64x4xbf16>
    %41 = vector.shape_cast %38 : vector<64x4xbf16> to vector<1x64x4xbf16>
    tpu.vector_store %arg9[%c1_34, %c0_35, %c0_36], %41 {strides = array<i32>} : memref<8x64x4xbf16, #tpu.memory_space<vmem>>, vector<1x64x4xbf16>,
    %c1_37 = arith.constant 1 : index
    %c0_38 = arith.constant 0 : index
    %c0_39 = arith.constant 0 : index
    %42 = vector.load %arg4[%c1_37, %c0_38, %c0_39] : memref<8x32x4xbf16, #tpu.memory_space<vmem>>, vector<1x32x4xbf16>
    %43 = vector.shape_cast %42 : vector<1x32x4xbf16> to vector<32x4xbf16>
    %cst_40 = arith.constant dense<0.000000e+00> : vector<64x4xf32>
    %44 = tpu.matmul %2, %43, %cst_40 {dimension_numbers = #tpu.dot_dimension_numbers<[1], [0], [0], [1], [0, 0, 1, 1], [], []>} : vector<64x32xbf16>, vector<32x4xbf16>, vector<64x4xf32> -> vector<64x4xf32>
    %45 = arith.truncf %44 : vector<64x4xf32> to vector<64x4xbf16>
    %c1_41 = arith.constant 1 : index
    %c0_42 = arith.constant 0 : index
    %c0_43 = arith.constant 0 : index
    %46 = vector.load %arg10[%c1_41, %c0_42, %c0_43] : memref<8x64x4xbf16, #tpu.memory_space<vmem>>, vector<1x64x4xbf16>
    %47 = vector.shape_cast %46 : vector<1x64x4xbf16> to vector<64x4xbf16>
    %48 = vector.shape_cast %45 : vector<64x4xbf16> to vector<1x64x4xbf16>
    tpu.vector_store %arg10[%c1_41, %c0_42, %c0_43], %48 {strides = array<i32>} : memref<8x64x4xbf16, #tpu.memory_space<vmem>>, vector<1x64x4xbf16>,
    %c2 = arith.constant 2 : index
    %c0_44 = arith.constant 0 : index
    %c0_45 = arith.constant 0 : index
    %49 = vector.load %arg2[%c2, %c0_44, %c0_45] : memref<8x32x4xbf16, #tpu.memory_space<vmem>>, vector<1x32x4xbf16>
    %50 = vector.shape_cast %49 : vector<1x32x4xbf16> to vector<32x4xbf16>
    %cst_46 = arith.constant dense<0.000000e+00> : vector<64x4xf32>
    %51 = tpu.matmul %2, %50, %cst_46 {dimension_numbers = #tpu.dot_dimension_numbers<[1], [0], [0], [1], [0, 0, 1, 1], [], []>} : vector<64x32xbf16>, vector<32x4xbf16>, vector<64x4xf32> -> vector<64x4xf32>
    %cst_47 = arith.constant 5.000000e-01 : f32
    %52 = vector.broadcast %cst_47 : f32 to vector<64x4xf32>
    %53 = arith.mulf %51, %52 : vector<64x4xf32>
    %54 = arith.truncf %53 : vector<64x4xf32> to vector<64x4xbf16>
    %c2_48 = arith.constant 2 : index
    %c0_49 = arith.constant 0 : index
    %c0_50 = arith.constant 0 : index
    %55 = vector.load %arg8[%c2_48, %c0_49, %c0_50] : memref<8x64x4xbf16, #tpu.memory_space<vmem>>, vector<1x64x4xbf16>
    %56 = vector.shape_cast %55 : vector<1x64x4xbf16> to vector<64x4xbf16>
    %57 = vector.shape_cast %54 : vector<64x4xbf16> to vector<1x64x4xbf16>
    tpu.vector_store %arg8[%c2_48, %c0_49, %c0_50], %57 {strides = array<i32>} : memref<8x64x4xbf16, #tpu.memory_space<vmem>>, vector<1x64x4xbf16>,
    %c2_51 = arith.constant 2 : index
    %c0_52 = arith.constant 0 : index
    %c0_53 = arith.constant 0 : index
    %58 = vector.load %arg3[%c2_51, %c0_52, %c0_53] : memref<8x32x4xbf16, #tpu.memory_space<vmem>>, vector<1x32x4xbf16>
    %59 = vector.shape_cast %58 : vector<1x32x4xbf16> to vector<32x4xbf16>
    %cst_54 = arith.constant dense<0.000000e+00> : vector<64x4xf32>
    %60 = tpu.matmul %2, %59, %cst_54 {dimension_numbers = #tpu.dot_dimension_numbers<[1], [0], [0], [1], [0, 0, 1, 1], [], []>} : vector<64x32xbf16>, vector<32x4xbf16>, vector<64x4xf32> -> vector<64x4xf32>
    %61 = arith.truncf %60 : vector<64x4xf32> to vector<64x4xbf16>
    %c2_55 = arith.constant 2 : index
    %c0_56 = arith.constant 0 : index
    %c0_57 = arith.constant 0 : index
    %62 = vector.load %arg9[%c2_55, %c0_56, %c0_57] : memref<8x64x4xbf16, #tpu.memory_space<vmem>>, vector<1x64x4xbf16>
    %63 = vector.shape_cast %62 : vector<1x64x4xbf16> to vector<64x4xbf16>
    %64 = vector.shape_cast %61 : vector<64x4xbf16> to vector<1x64x4xbf16>
    tpu.vector_store %arg9[%c2_55, %c0_56, %c0_57], %64 {strides = array<i32>} : memref<8x64x4xbf16, #tpu.memory_space<vmem>>, vector<1x64x4xbf16>,
    %c2_58 = arith.constant 2 : index
    %c0_59 = arith.constant 0 : index
    %c0_60 = arith.constant 0 : index
    %65 = vector.load %arg4[%c2_58, %c0_59, %c0_60] : memref<8x32x4xbf16, #tpu.memory_space<vmem>>, vector<1x32x4xbf16>
    %66 = vector.shape_cast %65 : vector<1x32x4xbf16> to vector<32x4xbf16>
    %cst_61 = arith.constant dense<0.000000e+00> : vector<64x4xf32>
    %67 = tpu.matmul %2, %66, %cst_61 {dimension_numbers = #tpu.dot_dimension_numbers<[1], [0], [0], [1], [0, 0, 1, 1], [], []>} : vector<64x32xbf16>, vector<32x4xbf16>, vector<64x4xf32> -> vector<64x4xf32>
    %68 = arith.truncf %67 : vector<64x4xf32> to vector<64x4xbf16>
    %c2_62 = arith.constant 2 : index
    %c0_63 = arith.constant 0 : index
    %c0_64 = arith.constant 0 : index
    %69 = vector.load %arg10[%c2_62, %c0_63, %c0_64] : memref<8x64x4xbf16, #tpu.memory_space<vmem>>, vector<1x64x4xbf16>
    %70 = vector.shape_cast %69 : vector<1x64x4xbf16> to vector<64x4xbf16>
    %71 = vector.shape_cast %68 : vector<64x4xbf16> to vector<1x64x4xbf16>
    tpu.vector_store %arg10[%c2_62, %c0_63, %c0_64], %71 {strides = array<i32>} : memref<8x64x4xbf16, #tpu.memory_space<vmem>>, vector<1x64x4xbf16>,
    %c3 = arith.constant 3 : index
    %c0_65 = arith.constant 0 : index
    %c0_66 = arith.constant 0 : index
    %72 = vector.load %arg2[%c3, %c0_65, %c0_66] : memref<8x32x4xbf16, #tpu.memory_space<vmem>>, vector<1x32x4xbf16>
    %73 = vector.shape_cast %72 : vector<1x32x4xbf16> to vector<32x4xbf16>
    %cst_67 = arith.constant dense<0.000000e+00> : vector<64x4xf32>
    %74 = tpu.matmul %2, %73, %cst_67 {dimension_numbers = #tpu.dot_dimension_numbers<[1], [0], [0], [1], [0, 0, 1, 1], [], []>} : vector<64x32xbf16>, vector<32x4xbf16>, vector<64x4xf32> -> vector<64x4xf32>
    %cst_68 = arith.constant 5.000000e-01 : f32
    %75 = vector.broadcast %cst_68 : f32 to vector<64x4xf32>
    %76 = arith.mulf %74, %75 : vector<64x4xf32>
    %77 = arith.truncf %76 : vector<64x4xf32> to vector<64x4xbf16>
    %c3_69 = arith.constant 3 : index
    %c0_70 = arith.constant 0 : index
    %c0_71 = arith.constant 0 : index
    %78 = vector.load %arg8[%c3_69, %c0_70, %c0_71] : memref<8x64x4xbf16, #tpu.memory_space<vmem>>, vector<1x64x4xbf16>
    %79 = vector.shape_cast %78 : vector<1x64x4xbf16> to vector<64x4xbf16>
    %80 = vector.shape_cast %77 : vector<64x4xbf16> to vector<1x64x4xbf16>
    tpu.vector_store %arg8[%c3_69, %c0_70, %c0_71], %80 {strides = array<i32>} : memref<8x64x4xbf16, #tpu.memory_space<vmem>>, vector<1x64x4xbf16>,
    %c3_72 = arith.constant 3 : index
    %c0_73 = arith.constant 0 : index
    %c0_74 = arith.constant 0 : index
    %81 = vector.load %arg3[%c3_72, %c0_73, %c0_74] : memref<8x32x4xbf16, #tpu.memory_space<vmem>>, vector<1x32x4xbf16>
    %82 = vector.shape_cast %81 : vector<1x32x4xbf16> to vector<32x4xbf16>
    %cst_75 = arith.constant dense<0.000000e+00> : vector<64x4xf32>
    %83 = tpu.matmul %2, %82, %cst_75 {dimension_numbers = #tpu.dot_dimension_numbers<[1], [0], [0], [1], [0, 0, 1, 1], [], []>} : vector<64x32xbf16>, vector<32x4xbf16>, vector<64x4xf32> -> vector<64x4xf32>
    %84 = arith.truncf %83 : vector<64x4xf32> to vector<64x4xbf16>
    %c3_76 = arith.constant 3 : index
    %c0_77 = arith.constant 0 : index
    %c0_78 = arith.constant 0 : index
    %85 = vector.load %arg9[%c3_76, %c0_77, %c0_78] : memref<8x64x4xbf16, #tpu.memory_space<vmem>>, vector<1x64x4xbf16>
    %86 = vector.shape_cast %85 : vector<1x64x4xbf16> to vector<64x4xbf16>
    %87 = vector.shape_cast %84 : vector<64x4xbf16> to vector<1x64x4xbf16>
    tpu.vector_store %arg9[%c3_76, %c0_77, %c0_78], %87 {strides = array<i32>} : memref<8x64x4xbf16, #tpu.memory_space<vmem>>, vector<1x64x4xbf16>,
    %c3_79 = arith.constant 3 : index
    %c0_80 = arith.constant 0 : index
    %c0_81 = arith.constant 0 : index
    %88 = vector.load %arg4[%c3_79, %c0_80, %c0_81] : memref<8x32x4xbf16, #tpu.memory_space<vmem>>, vector<1x32x4xbf16>
    %89 = vector.shape_cast %88 : vector<1x32x4xbf16> to vector<32x4xbf16>
    %cst_82 = arith.constant dense<0.000000e+00> : vector<64x4xf32>
    %90 = tpu.matmul %2, %89, %cst_82 {dimension_numbers = #tpu.dot_dimension_numbers<[1], [0], [0], [1], [0, 0, 1, 1], [], []>} : vector<64x32xbf16>, vector<32x4xbf16>, vector<64x4xf32> -> vector<64x4xf32>
    %91 = arith.truncf %90 : vector<64x4xf32> to vector<64x4xbf16>
    %c3_83 = arith.constant 3 : index
    %c0_84 = arith.constant 0 : index
    %c0_85 = arith.constant 0 : index
    %92 = vector.load %arg10[%c3_83, %c0_84, %c0_85] : memref<8x64x4xbf16, #tpu.memory_space<vmem>>, vector<1x64x4xbf16>
    %93 = vector.shape_cast %92 : vector<1x64x4xbf16> to vector<64x4xbf16>
    %94 = vector.shape_cast %91 : vector<64x4xbf16> to vector<1x64x4xbf16>
    tpu.vector_store %arg10[%c3_83, %c0_84, %c0_85], %94 {strides = array<i32>} : memref<8x64x4xbf16, #tpu.memory_space<vmem>>, vector<1x64x4xbf16>,
    %c4 = arith.constant 4 : index
    %c0_86 = arith.constant 0 : index
    %c0_87 = arith.constant 0 : index
    %95 = vector.load %arg2[%c4, %c0_86, %c0_87] : memref<8x32x4xbf16, #tpu.memory_space<vmem>>, vector<1x32x4xbf16>
    %96 = vector.shape_cast %95 : vector<1x32x4xbf16> to vector<32x4xbf16>
    %cst_88 = arith.constant dense<0.000000e+00> : vector<64x4xf32>
    %97 = tpu.matmul %2, %96, %cst_88 {dimension_numbers = #tpu.dot_dimension_numbers<[1], [0], [0], [1], [0, 0, 1, 1], [], []>} : vector<64x32xbf16>, vector<32x4xbf16>, vector<64x4xf32> -> vector<64x4xf32>
    %cst_89 = arith.constant 5.000000e-01 : f32
    %98 = vector.broadcast %cst_89 : f32 to vector<64x4xf32>
    %99 = arith.mulf %97, %98 : vector<64x4xf32>
    %100 = arith.truncf %99 : vector<64x4xf32> to vector<64x4xbf16>
    %c4_90 = arith.constant 4 : index
    %c0_91 = arith.constant 0 : index
    %c0_92 = arith.constant 0 : index
    %101 = vector.load %arg8[%c4_90, %c0_91, %c0_92] : memref<8x64x4xbf16, #tpu.memory_space<vmem>>, vector<1x64x4xbf16>
    %102 = vector.shape_cast %101 : vector<1x64x4xbf16> to vector<64x4xbf16>
    %103 = vector.shape_cast %100 : vector<64x4xbf16> to vector<1x64x4xbf16>
    tpu.vector_store %arg8[%c4_90, %c0_91, %c0_92], %103 {strides = array<i32>} : memref<8x64x4xbf16, #tpu.memory_space<vmem>>, vector<1x64x4xbf16>,
    %c4_93 = arith.constant 4 : index
    %c0_94 = arith.constant 0 : index
    %c0_95 = arith.constant 0 : index
    %104 = vector.load %arg3[%c4_93, %c0_94, %c0_95] : memref<8x32x4xbf16, #tpu.memory_space<vmem>>, vector<1x32x4xbf16>
    %105 = vector.shape_cast %104 : vector<1x32x4xbf16> to vector<32x4xbf16>
    %cst_96 = arith.constant dense<0.000000e+00> : vector<64x4xf32>
    %106 = tpu.matmul %2, %105, %cst_96 {dimension_numbers = #tpu.dot_dimension_numbers<[1], [0], [0], [1], [0, 0, 1, 1], [], []>} : vector<64x32xbf16>, vector<32x4xbf16>, vector<64x4xf32> -> vector<64x4xf32>
    %107 = arith.truncf %106 : vector<64x4xf32> to vector<64x4xbf16>
    %c4_97 = arith.constant 4 : index
    %c0_98 = arith.constant 0 : index
    %c0_99 = arith.constant 0 : index
    %108 = vector.load %arg9[%c4_97, %c0_98, %c0_99] : memref<8x64x4xbf16, #tpu.memory_space<vmem>>, vector<1x64x4xbf16>
    %109 = vector.shape_cast %108 : vector<1x64x4xbf16> to vector<64x4xbf16>
    %110 = vector.shape_cast %107 : vector<64x4xbf16> to vector<1x64x4xbf16>
    tpu.vector_store %arg9[%c4_97, %c0_98, %c0_99], %110 {strides = array<i32>} : memref<8x64x4xbf16, #tpu.memory_space<vmem>>, vector<1x64x4xbf16>,
    %c4_100 = arith.constant 4 : index
    %c0_101 = arith.constant 0 : index
    %c0_102 = arith.constant 0 : index
    %111 = vector.load %arg4[%c4_100, %c0_101, %c0_102] : memref<8x32x4xbf16, #tpu.memory_space<vmem>>, vector<1x32x4xbf16>
    %112 = vector.shape_cast %111 : vector<1x32x4xbf16> to vector<32x4xbf16>
    %cst_103 = arith.constant dense<0.000000e+00> : vector<64x4xf32>
    %113 = tpu.matmul %2, %112, %cst_103 {dimension_numbers = #tpu.dot_dimension_numbers<[1], [0], [0], [1], [0, 0, 1, 1], [], []>} : vector<64x32xbf16>, vector<32x4xbf16>, vector<64x4xf32> -> vector<64x4xf32>
    %114 = arith.truncf %113 : vector<64x4xf32> to vector<64x4xbf16>
    %c4_104 = arith.constant 4 : index
    %c0_105 = arith.constant 0 : index
    %c0_106 = arith.constant 0 : index
    %115 = vector.load %arg10[%c4_104, %c0_105, %c0_106] : memref<8x64x4xbf16, #tpu.memory_space<vmem>>, vector<1x64x4xbf16>
    %116 = vector.shape_cast %115 : vector<1x64x4xbf16> to vector<64x4xbf16>
    %117 = vector.shape_cast %114 : vector<64x4xbf16> to vector<1x64x4xbf16>
    tpu.vector_store %arg10[%c4_104, %c0_105, %c0_106], %117 {strides = array<i32>} : memref<8x64x4xbf16, #tpu.memory_space<vmem>>, vector<1x64x4xbf16>,
    %c5 = arith.constant 5 : index
    %c0_107 = arith.constant 0 : index
    %c0_108 = arith.constant 0 : index
    %118 = vector.load %arg2[%c5, %c0_107, %c0_108] : memref<8x32x4xbf16, #tpu.memory_space<vmem>>, vector<1x32x4xbf16>
    %119 = vector.shape_cast %118 : vector<1x32x4xbf16> to vector<32x4xbf16>
    %cst_109 = arith.constant dense<0.000000e+00> : vector<64x4xf32>
    %120 = tpu.matmul %2, %119, %cst_109 {dimension_numbers = #tpu.dot_dimension_numbers<[1], [0], [0], [1], [0, 0, 1, 1], [], []>} : vector<64x32xbf16>, vector<32x4xbf16>, vector<64x4xf32> -> vector<64x4xf32>
    %cst_110 = arith.constant 5.000000e-01 : f32
    %121 = vector.broadcast %cst_110 : f32 to vector<64x4xf32>
    %122 = arith.mulf %120, %121 : vector<64x4xf32>
    %123 = arith.truncf %122 : vector<64x4xf32> to vector<64x4xbf16>
    %c5_111 = arith.constant 5 : index
    %c0_112 = arith.constant 0 : index
    %c0_113 = arith.constant 0 : index
    %124 = vector.load %arg8[%c5_111, %c0_112, %c0_113] : memref<8x64x4xbf16, #tpu.memory_space<vmem>>, vector<1x64x4xbf16>
    %125 = vector.shape_cast %124 : vector<1x64x4xbf16> to vector<64x4xbf16>
    %126 = vector.shape_cast %123 : vector<64x4xbf16> to vector<1x64x4xbf16>
    tpu.vector_store %arg8[%c5_111, %c0_112, %c0_113], %126 {strides = array<i32>} : memref<8x64x4xbf16, #tpu.memory_space<vmem>>, vector<1x64x4xbf16>,
    %c5_114 = arith.constant 5 : index
    %c0_115 = arith.constant 0 : index
    %c0_116 = arith.constant 0 : index
    %127 = vector.load %arg3[%c5_114, %c0_115, %c0_116] : memref<8x32x4xbf16, #tpu.memory_space<vmem>>, vector<1x32x4xbf16>
    %128 = vector.shape_cast %127 : vector<1x32x4xbf16> to vector<32x4xbf16>
    %cst_117 = arith.constant dense<0.000000e+00> : vector<64x4xf32>
    %129 = tpu.matmul %2, %128, %cst_117 {dimension_numbers = #tpu.dot_dimension_numbers<[1], [0], [0], [1], [0, 0, 1, 1], [], []>} : vector<64x32xbf16>, vector<32x4xbf16>, vector<64x4xf32> -> vector<64x4xf32>
    %130 = arith.truncf %129 : vector<64x4xf32> to vector<64x4xbf16>
    %c5_118 = arith.constant 5 : index
    %c0_119 = arith.constant 0 : index
    %c0_120 = arith.constant 0 : index
    %131 = vector.load %arg9[%c5_118, %c0_119, %c0_120] : memref<8x64x4xbf16, #tpu.memory_space<vmem>>, vector<1x64x4xbf16>
    %132 = vector.shape_cast %131 : vector<1x64x4xbf16> to vector<64x4xbf16>
    %133 = vector.shape_cast %130 : vector<64x4xbf16> to vector<1x64x4xbf16>
    tpu.vector_store %arg9[%c5_118, %c0_119, %c0_120], %133 {strides = array<i32>} : memref<8x64x4xbf16, #tpu.memory_space<vmem>>, vector<1x64x4xbf16>,
    %c5_121 = arith.constant 5 : index
    %c0_122 = arith.constant 0 : index
    %c0_123 = arith.constant 0 : index
    %134 = vector.load %arg4[%c5_121, %c0_122, %c0_123] : memref<8x32x4xbf16, #tpu.memory_space<vmem>>, vector<1x32x4xbf16>
    %135 = vector.shape_cast %134 : vector<1x32x4xbf16> to vector<32x4xbf16>
    %cst_124 = arith.constant dense<0.000000e+00> : vector<64x4xf32>
    %136 = tpu.matmul %2, %135, %cst_124 {dimension_numbers = #tpu.dot_dimension_numbers<[1], [0], [0], [1], [0, 0, 1, 1], [], []>} : vector<64x32xbf16>, vector<32x4xbf16>, vector<64x4xf32> -> vector<64x4xf32>
    %137 = arith.truncf %136 : vector<64x4xf32> to vector<64x4xbf16>
    %c5_125 = arith.constant 5 : index
    %c0_126 = arith.constant 0 : index
    %c0_127 = arith.constant 0 : index
    %138 = vector.load %arg10[%c5_125, %c0_126, %c0_127] : memref<8x64x4xbf16, #tpu.memory_space<vmem>>, vector<1x64x4xbf16>
    %139 = vector.shape_cast %138 : vector<1x64x4xbf16> to vector<64x4xbf16>
    %140 = vector.shape_cast %137 : vector<64x4xbf16> to vector<1x64x4xbf16>
    tpu.vector_store %arg10[%c5_125, %c0_126, %c0_127], %140 {strides = array<i32>} : memref<8x64x4xbf16, #tpu.memory_space<vmem>>, vector<1x64x4xbf16>,
    %c6 = arith.constant 6 : index
    %c0_128 = arith.constant 0 : index
    %c0_129 = arith.constant 0 : index
    %141 = vector.load %arg2[%c6, %c0_128, %c0_129] : memref<8x32x4xbf16, #tpu.memory_space<vmem>>, vector<1x32x4xbf16>
    %142 = vector.shape_cast %141 : vector<1x32x4xbf16> to vector<32x4xbf16>
    %cst_130 = arith.constant dense<0.000000e+00> : vector<64x4xf32>
    %143 = tpu.matmul %2, %142, %cst_130 {dimension_numbers = #tpu.dot_dimension_numbers<[1], [0], [0], [1], [0, 0, 1, 1], [], []>} : vector<64x32xbf16>, vector<32x4xbf16>, vector<64x4xf32> -> vector<64x4xf32>
    %cst_131 = arith.constant 5.000000e-01 : f32
    %144 = vector.broadcast %cst_131 : f32 to vector<64x4xf32>
    %145 = arith.mulf %143, %144 : vector<64x4xf32>
    %146 = arith.truncf %145 : vector<64x4xf32> to vector<64x4xbf16>
    %c6_132 = arith.constant 6 : index
    %c0_133 = arith.constant 0 : index
    %c0_134 = arith.constant 0 : index
    %147 = vector.load %arg8[%c6_132, %c0_133, %c0_134] : memref<8x64x4xbf16, #tpu.memory_space<vmem>>, vector<1x64x4xbf16>
    %148 = vector.shape_cast %147 : vector<1x64x4xbf16> to vector<64x4xbf16>
    %149 = vector.shape_cast %146 : vector<64x4xbf16> to vector<1x64x4xbf16>
    tpu.vector_store %arg8[%c6_132, %c0_133, %c0_134], %149 {strides = array<i32>} : memref<8x64x4xbf16, #tpu.memory_space<vmem>>, vector<1x64x4xbf16>,
    %c6_135 = arith.constant 6 : index
    %c0_136 = arith.constant 0 : index
    %c0_137 = arith.constant 0 : index
    %150 = vector.load %arg3[%c6_135, %c0_136, %c0_137] : memref<8x32x4xbf16, #tpu.memory_space<vmem>>, vector<1x32x4xbf16>
    %151 = vector.shape_cast %150 : vector<1x32x4xbf16> to vector<32x4xbf16>
    %cst_138 = arith.constant dense<0.000000e+00> : vector<64x4xf32>
    %152 = tpu.matmul %2, %151, %cst_138 {dimension_numbers = #tpu.dot_dimension_numbers<[1], [0], [0], [1], [0, 0, 1, 1], [], []>} : vector<64x32xbf16>, vector<32x4xbf16>, vector<64x4xf32> -> vector<64x4xf32>
    %153 = arith.truncf %152 : vector<64x4xf32> to vector<64x4xbf16>
    %c6_139 = arith.constant 6 : index
    %c0_140 = arith.constant 0 : index
    %c0_141 = arith.constant 0 : index
    %154 = vector.load %arg9[%c6_139, %c0_140, %c0_141] : memref<8x64x4xbf16, #tpu.memory_space<vmem>>, vector<1x64x4xbf16>
    %155 = vector.shape_cast %154 : vector<1x64x4xbf16> to vector<64x4xbf16>
    %156 = vector.shape_cast %153 : vector<64x4xbf16> to vector<1x64x4xbf16>
    tpu.vector_store %arg9[%c6_139, %c0_140, %c0_141], %156 {strides = array<i32>} : memref<8x64x4xbf16, #tpu.memory_space<vmem>>, vector<1x64x4xbf16>,
    %c6_142 = arith.constant 6 : index
    %c0_143 = arith.constant 0 : index
    %c0_144 = arith.constant 0 : index
    %157 = vector.load %arg4[%c6_142, %c0_143, %c0_144] : memref<8x32x4xbf16, #tpu.memory_space<vmem>>, vector<1x32x4xbf16>
    %158 = vector.shape_cast %157 : vector<1x32x4xbf16> to vector<32x4xbf16>
    %cst_145 = arith.constant dense<0.000000e+00> : vector<64x4xf32>
    %159 = tpu.matmul %2, %158, %cst_145 {dimension_numbers = #tpu.dot_dimension_numbers<[1], [0], [0], [1], [0, 0, 1, 1], [], []>} : vector<64x32xbf16>, vector<32x4xbf16>, vector<64x4xf32> -> vector<64x4xf32>
    %160 = arith.truncf %159 : vector<64x4xf32> to vector<64x4xbf16>
    %c6_146 = arith.constant 6 : index
    %c0_147 = arith.constant 0 : index
    %c0_148 = arith.constant 0 : index
    %161 = vector.load %arg10[%c6_146, %c0_147, %c0_148] : memref<8x64x4xbf16, #tpu.memory_space<vmem>>, vector<1x64x4xbf16>
    %162 = vector.shape_cast %161 : vector<1x64x4xbf16> to vector<64x4xbf16>
    %163 = vector.shape_cast %160 : vector<64x4xbf16> to vector<1x64x4xbf16>
    tpu.vector_store %arg10[%c6_146, %c0_147, %c0_148], %163 {strides = array<i32>} : memref<8x64x4xbf16, #tpu.memory_space<vmem>>, vector<1x64x4xbf16>,
    %c7 = arith.constant 7 : index
    %c0_149 = arith.constant 0 : index
    %c0_150 = arith.constant 0 : index
    %164 = vector.load %arg2[%c7, %c0_149, %c0_150] : memref<8x32x4xbf16, #tpu.memory_space<vmem>>, vector<1x32x4xbf16>
    %165 = vector.shape_cast %164 : vector<1x32x4xbf16> to vector<32x4xbf16>
    %cst_151 = arith.constant dense<0.000000e+00> : vector<64x4xf32>
    %166 = tpu.matmul %2, %165, %cst_151 {dimension_numbers = #tpu.dot_dimension_numbers<[1], [0], [0], [1], [0, 0, 1, 1], [], []>} : vector<64x32xbf16>, vector<32x4xbf16>, vector<64x4xf32> -> vector<64x4xf32>
    %cst_152 = arith.constant 5.000000e-01 : f32
    %167 = vector.broadcast %cst_152 : f32 to vector<64x4xf32>
    %168 = arith.mulf %166, %167 : vector<64x4xf32>
    %169 = arith.truncf %168 : vector<64x4xf32> to vector<64x4xbf16>
    %c7_153 = arith.constant 7 : index
    %c0_154 = arith.constant 0 : index
    %c0_155 = arith.constant 0 : index
    %170 = vector.load %arg8[%c7_153, %c0_154, %c0_155] : memref<8x64x4xbf16, #tpu.memory_space<vmem>>, vector<1x64x4xbf16>
    %171 = vector.shape_cast %170 : vector<1x64x4xbf16> to vector<64x4xbf16>
    %172 = vector.shape_cast %169 : vector<64x4xbf16> to vector<1x64x4xbf16>
    tpu.vector_store %arg8[%c7_153, %c0_154, %c0_155], %172 {strides = array<i32>} : memref<8x64x4xbf16, #tpu.memory_space<vmem>>, vector<1x64x4xbf16>,
    %c7_156 = arith.constant 7 : index
    %c0_157 = arith.constant 0 : index
    %c0_158 = arith.constant 0 : index
    %173 = vector.load %arg3[%c7_156, %c0_157, %c0_158] : memref<8x32x4xbf16, #tpu.memory_space<vmem>>, vector<1x32x4xbf16>
    %174 = vector.shape_cast %173 : vector<1x32x4xbf16> to vector<32x4xbf16>
    %cst_159 = arith.constant dense<0.000000e+00> : vector<64x4xf32>
    %175 = tpu.matmul %2, %174, %cst_159 {dimension_numbers = #tpu.dot_dimension_numbers<[1], [0], [0], [1], [0, 0, 1, 1], [], []>} : vector<64x32xbf16>, vector<32x4xbf16>, vector<64x4xf32> -> vector<64x4xf32>
    %176 = arith.truncf %175 : vector<64x4xf32> to vector<64x4xbf16>
    %c7_160 = arith.constant 7 : index
    %c0_161 = arith.constant 0 : index
    %c0_162 = arith.constant 0 : index
    %177 = vector.load %arg9[%c7_160, %c0_161, %c0_162] : memref<8x64x4xbf16, #tpu.memory_space<vmem>>, vector<1x64x4xbf16>
    %178 = vector.shape_cast %177 : vector<1x64x4xbf16> to vector<64x4xbf16>
    %179 = vector.shape_cast %176 : vector<64x4xbf16> to vector<1x64x4xbf16>
    tpu.vector_store %arg9[%c7_160, %c0_161, %c0_162], %179 {strides = array<i32>} : memref<8x64x4xbf16, #tpu.memory_space<vmem>>, vector<1x64x4xbf16>,
    %c7_163 = arith.constant 7 : index
    %c0_164 = arith.constant 0 : index
    %c0_165 = arith.constant 0 : index
    %180 = vector.load %arg4[%c7_163, %c0_164, %c0_165] : memref<8x32x4xbf16, #tpu.memory_space<vmem>>, vector<1x32x4xbf16>
    %181 = vector.shape_cast %180 : vector<1x32x4xbf16> to vector<32x4xbf16>
    %cst_166 = arith.constant dense<0.000000e+00> : vector<64x4xf32>
    %182 = tpu.matmul %2, %181, %cst_166 {dimension_numbers = #tpu.dot_dimension_numbers<[1], [0], [0], [1], [0, 0, 1, 1], [], []>} : vector<64x32xbf16>, vector<32x4xbf16>, vector<64x4xf32> -> vector<64x4xf32>
    %183 = arith.truncf %182 : vector<64x4xf32> to vector<64x4xbf16>
    %c7_167 = arith.constant 7 : index
    %c0_168 = arith.constant 0 : index
    %c0_169 = arith.constant 0 : index
    %184 = vector.load %arg10[%c7_167, %c0_168, %c0_169] : memref<8x64x4xbf16, #tpu.memory_space<vmem>>, vector<1x64x4xbf16>
    %185 = vector.shape_cast %184 : vector<1x64x4xbf16> to vector<64x4xbf16>
    %186 = vector.shape_cast %183 : vector<64x4xbf16> to vector<1x64x4xbf16>
    tpu.vector_store %arg10[%c7_167, %c0_168, %c0_169], %186 {strides = array<i32>} : memref<8x64x4xbf16, #tpu.memory_space<vmem>>, vector<1x64x4xbf16>,
    %c0_170 = arith.constant 0 : index
    %c0_171 = arith.constant 0 : index
    %c0_172 = arith.constant 0 : index
    %187 = vector.load %arg8[%c0_170, %c0_171, %c0_172] : memref<8x64x4xbf16, #tpu.memory_space<vmem>>, vector<8x64x4xbf16>
    %c0_173 = arith.constant 0 : index
    %c0_174 = arith.constant 0 : index
    %c0_175 = arith.constant 0 : index
    %188 = vector.load %arg9[%c0_173, %c0_174, %c0_175] : memref<8x64x4xbf16, #tpu.memory_space<vmem>>, vector<8x64x4xbf16>
    %c0_176 = arith.constant 0 : index
    %c0_177 = arith.constant 0 : index
    %c0_178 = arith.constant 0 : index
    %189 = vector.load %arg10[%c0_176, %c0_177, %c0_178] : memref<8x64x4xbf16, #tpu.memory_space<vmem>>, vector<8x64x4xbf16>
    "tpu.trace_start"() <{level = 10 : i32, message = "hqd,hkd->hqk"}> : () -> ()
    %cst_179 = arith.constant dense<0.000000e+00> : vector<8x64x64xf32>
    %190 = tpu.matmul %187, %188, %cst_179 {dimension_numbers = #tpu.dot_dimension_numbers<[2], [2], [1], [1], [0, 0, 0, 1, 1, 1], [0], [0]>} : vector<8x64x4xbf16>, vector<8x64x4xbf16>, vector<8x64x64xf32> -> vector<8x64x64xf32>
    "tpu.trace_stop"() : () -> ()
    %cst_180 = arith.constant dense<0xFF800000> : vector<8x64xf32>
    %191 = vector.multi_reduction <maximumf>, %190, %cst_180 [2] : vector<8x64x64xf32> to vector<8x64xf32>
    %192 = vector.shape_cast %191 : vector<8x64xf32> to vector<8x64x1xf32>
    %193 = vector.broadcast %192 : vector<8x64x1xf32> to vector<8x64x64xf32>
    %194 = arith.subf %190, %193 : vector<8x64x64xf32>
    %195 = math.exp %194 : vector<8x64x64xf32>
    %cst_181 = arith.constant dense<0.000000e+00> : vector<8x64xf32>
    %196 = vector.multi_reduction <add>, %195, %cst_181 [2] : vector<8x64x64xf32> to vector<8x64xf32>
    %197 = vector.shape_cast %196 : vector<8x64xf32> to vector<8x64x1xf32>
    %198 = tpu.reciprocal %197 {approx = true} : vector<8x64x1xf32> -> vector<8x64x1xf32>
    %199 = vector.broadcast %198 : vector<8x64x1xf32> to vector<8x64x64xf32>
    %200 = arith.mulf %195, %199 : vector<8x64x64xf32>
    %201 = arith.truncf %200 : vector<8x64x64xf32> to vector<8x64x64xbf16>
    "tpu.trace_start"() <{level = 10 : i32, message = "hqk,hkd->hqd"}> : () -> ()
    %cst_182 = arith.constant dense<0.000000e+00> : vector<8x64x4xf32>
    %202 = tpu.matmul %201, %189, %cst_182 {dimension_numbers = #tpu.dot_dimension_numbers<[2], [1], [1], [2], [0, 0, 0, 1, 1, 2], [0], [0]>} : vector<8x64x64xbf16>, vector<8x64x4xbf16>, vector<8x64x4xf32> -> vector<8x64x4xf32>
    "tpu.trace_stop"() : () -> ()
    %203 = vector.extract_strided_slice %202 {offsets = [0, 0, 0], sizes = [1, 64, 4], strides = [1, 1, 1]} : vector<8x64x4xf32> to vector<1x64x4xf32>
    %204 = vector.shape_cast %203 : vector<1x64x4xf32> to vector<64x4xf32>
    %205 = arith.truncf %204 : vector<64x4xf32> to vector<64x4xbf16>
    %c0_183 = arith.constant 0 : index
    %c0_184 = arith.constant 0 : index
    %c0_185 = arith.constant 0 : index
    %206 = vector.load %arg5[%c0_183, %c0_184, %c0_185] : memref<8x4x32xbf16, #tpu.memory_space<vmem>>, vector<1x4x32xbf16>
    %207 = vector.shape_cast %206 : vector<1x4x32xbf16> to vector<4x32xbf16>
    %cst_186 = arith.constant dense<0.000000e+00> : vector<64x32xf32>
    %208 = tpu.matmul %205, %207, %cst_186 {dimension_numbers = #tpu.dot_dimension_numbers<[1], [0], [0], [1], [0, 0, 1, 1], [], []>} : vector<64x4xbf16>, vector<4x32xbf16>, vector<64x32xf32> -> vector<64x32xf32>
    %209 = vector.extract_strided_slice %202 {offsets = [1, 0, 0], sizes = [1, 64, 4], strides = [1, 1, 1]} : vector<8x64x4xf32> to vector<1x64x4xf32>
    %210 = vector.shape_cast %209 : vector<1x64x4xf32> to vector<64x4xf32>
    %211 = arith.truncf %210 : vector<64x4xf32> to vector<64x4xbf16>
    %c1_187 = arith.constant 1 : index
    %c0_188 = arith.constant 0 : index
    %c0_189 = arith.constant 0 : index
    %212 = vector.load %arg5[%c1_187, %c0_188, %c0_189] : memref<8x4x32xbf16, #tpu.memory_space<vmem>>, vector<1x4x32xbf16>
    %213 = vector.shape_cast %212 : vector<1x4x32xbf16> to vector<4x32xbf16>
    %cst_190 = arith.constant dense<0.000000e+00> : vector<64x32xf32>
    %214 = tpu.matmul %211, %213, %cst_190 {dimension_numbers = #tpu.dot_dimension_numbers<[1], [0], [0], [1], [0, 0, 1, 1], [], []>} : vector<64x4xbf16>, vector<4x32xbf16>, vector<64x32xf32> -> vector<64x32xf32>
    %215 = arith.addf %208, %214 : vector<64x32xf32>
    %216 = vector.extract_strided_slice %202 {offsets = [2, 0, 0], sizes = [1, 64, 4], strides = [1, 1, 1]} : vector<8x64x4xf32> to vector<1x64x4xf32>
    %217 = vector.shape_cast %216 : vector<1x64x4xf32> to vector<64x4xf32>
    %218 = arith.truncf %217 : vector<64x4xf32> to vector<64x4xbf16>
    %c2_191 = arith.constant 2 : index
    %c0_192 = arith.constant 0 : index
    %c0_193 = arith.constant 0 : index
    %219 = vector.load %arg5[%c2_191, %c0_192, %c0_193] : memref<8x4x32xbf16, #tpu.memory_space<vmem>>, vector<1x4x32xbf16>
    %220 = vector.shape_cast %219 : vector<1x4x32xbf16> to vector<4x32xbf16>
    %cst_194 = arith.constant dense<0.000000e+00> : vector<64x32xf32>
    %221 = tpu.matmul %218, %220, %cst_194 {dimension_numbers = #tpu.dot_dimension_numbers<[1], [0], [0], [1], [0, 0, 1, 1], [], []>} : vector<64x4xbf16>, vector<4x32xbf16>, vector<64x32xf32> -> vector<64x32xf32>
    %222 = arith.addf %215, %221 : vector<64x32xf32>
    %223 = vector.extract_strided_slice %202 {offsets = [3, 0, 0], sizes = [1, 64, 4], strides = [1, 1, 1]} : vector<8x64x4xf32> to vector<1x64x4xf32>
    %224 = vector.shape_cast %223 : vector<1x64x4xf32> to vector<64x4xf32>
    %225 = arith.truncf %224 : vector<64x4xf32> to vector<64x4xbf16>
    %c3_195 = arith.constant 3 : index
    %c0_196 = arith.constant 0 : index
    %c0_197 = arith.constant 0 : index
    %226 = vector.load %arg5[%c3_195, %c0_196, %c0_197] : memref<8x4x32xbf16, #tpu.memory_space<vmem>>, vector<1x4x32xbf16>
    %227 = vector.shape_cast %226 : vector<1x4x32xbf16> to vector<4x32xbf16>
    %cst_198 = arith.constant dense<0.000000e+00> : vector<64x32xf32>
    %228 = tpu.matmul %225, %227, %cst_198 {dimension_numbers = #tpu.dot_dimension_numbers<[1], [0], [0], [1], [0, 0, 1, 1], [], []>} : vector<64x4xbf16>, vector<4x32xbf16>, vector<64x32xf32> -> vector<64x32xf32>
    %229 = arith.addf %222, %228 : vector<64x32xf32>
    %230 = vector.extract_strided_slice %202 {offsets = [4, 0, 0], sizes = [1, 64, 4], strides = [1, 1, 1]} : vector<8x64x4xf32> to vector<1x64x4xf32>
    %231 = vector.shape_cast %230 : vector<1x64x4xf32> to vector<64x4xf32>
    %232 = arith.truncf %231 : vector<64x4xf32> to vector<64x4xbf16>
    %c4_199 = arith.constant 4 : index
    %c0_200 = arith.constant 0 : index
    %c0_201 = arith.constant 0 : index
    %233 = vector.load %arg5[%c4_199, %c0_200, %c0_201] : memref<8x4x32xbf16, #tpu.memory_space<vmem>>, vector<1x4x32xbf16>
    %234 = vector.shape_cast %233 : vector<1x4x32xbf16> to vector<4x32xbf16>
    %cst_202 = arith.constant dense<0.000000e+00> : vector<64x32xf32>
    %235 = tpu.matmul %232, %234, %cst_202 {dimension_numbers = #tpu.dot_dimension_numbers<[1], [0], [0], [1], [0, 0, 1, 1], [], []>} : vector<64x4xbf16>, vector<4x32xbf16>, vector<64x32xf32> -> vector<64x32xf32>
    %236 = arith.addf %229, %235 : vector<64x32xf32>
    %237 = vector.extract_strided_slice %202 {offsets = [5, 0, 0], sizes = [1, 64, 4], strides = [1, 1, 1]} : vector<8x64x4xf32> to vector<1x64x4xf32>
    %238 = vector.shape_cast %237 : vector<1x64x4xf32> to vector<64x4xf32>
    %239 = arith.truncf %238 : vector<64x4xf32> to vector<64x4xbf16>
    %c5_203 = arith.constant 5 : index
    %c0_204 = arith.constant 0 : index
    %c0_205 = arith.constant 0 : index
    %240 = vector.load %arg5[%c5_203, %c0_204, %c0_205] : memref<8x4x32xbf16, #tpu.memory_space<vmem>>, vector<1x4x32xbf16>
    %241 = vector.shape_cast %240 : vector<1x4x32xbf16> to vector<4x32xbf16>
    %cst_206 = arith.constant dense<0.000000e+00> : vector<64x32xf32>
    %242 = tpu.matmul %239, %241, %cst_206 {dimension_numbers = #tpu.dot_dimension_numbers<[1], [0], [0], [1], [0, 0, 1, 1], [], []>} : vector<64x4xbf16>, vector<4x32xbf16>, vector<64x32xf32> -> vector<64x32xf32>
    %243 = arith.addf %236, %242 : vector<64x32xf32>
    %244 = vector.extract_strided_slice %202 {offsets = [6, 0, 0], sizes = [1, 64, 4], strides = [1, 1, 1]} : vector<8x64x4xf32> to vector<1x64x4xf32>
    %245 = vector.shape_cast %244 : vector<1x64x4xf32> to vector<64x4xf32>
    %246 = arith.truncf %245 : vector<64x4xf32> to vector<64x4xbf16>
    %c6_207 = arith.constant 6 : index
    %c0_208 = arith.constant 0 : index
    %c0_209 = arith.constant 0 : index
    %247 = vector.load %arg5[%c6_207, %c0_208, %c0_209] : memref<8x4x32xbf16, #tpu.memory_space<vmem>>, vector<1x4x32xbf16>
    %248 = vector.shape_cast %247 : vector<1x4x32xbf16> to vector<4x32xbf16>
    %cst_210 = arith.constant dense<0.000000e+00> : vector<64x32xf32>
    %249 = tpu.matmul %246, %248, %cst_210 {dimension_numbers = #tpu.dot_dimension_numbers<[1], [0], [0], [1], [0, 0, 1, 1], [], []>} : vector<64x4xbf16>, vector<4x32xbf16>, vector<64x32xf32> -> vector<64x32xf32>
    %250 = arith.addf %243, %249 : vector<64x32xf32>
    %251 = vector.extract_strided_slice %202 {offsets = [7, 0, 0], sizes = [1, 64, 4], strides = [1, 1, 1]} : vector<8x64x4xf32> to vector<1x64x4xf32>
    %252 = vector.shape_cast %251 : vector<1x64x4xf32> to vector<64x4xf32>
    %253 = arith.truncf %252 : vector<64x4xf32> to vector<64x4xbf16>
    %c7_211 = arith.constant 7 : index
    %c0_212 = arith.constant 0 : index
    %c0_213 = arith.constant 0 : index
    %254 = vector.load %arg5[%c7_211, %c0_212, %c0_213] : memref<8x4x32xbf16, #tpu.memory_space<vmem>>, vector<1x4x32xbf16>
    %255 = vector.shape_cast %254 : vector<1x4x32xbf16> to vector<4x32xbf16>
    %cst_214 = arith.constant dense<0.000000e+00> : vector<64x32xf32>
    %256 = tpu.matmul %253, %255, %cst_214 {dimension_numbers = #tpu.dot_dimension_numbers<[1], [0], [0], [1], [0, 0, 1, 1], [], []>} : vector<64x4xbf16>, vector<4x32xbf16>, vector<64x32xf32> -> vector<64x32xf32>
    %257 = arith.addf %250, %256 : vector<64x32xf32>
    %c0_215 = arith.constant 0 : index
    %c0_216 = arith.constant 0 : index
    %258 = vector.load %arg6[%c0_215, %c0_216] : memref<1x32xf32, #tpu.memory_space<vmem>>, vector<1x32xf32>
    %259 = vector.broadcast %258 : vector<1x32xf32> to vector<64x32xf32>
    %260 = arith.addf %257, %259 : vector<64x32xf32>
    %c0_217 = arith.constant 0 : index
    %c0_218 = arith.constant 0 : index
    %c0_219 = arith.constant 0 : index
    %261 = vector.load %arg7[%c0_217, %c0_218, %c0_219] : memref<1x64x32xf32, #tpu.memory_space<vmem>>, vector<1x64x32xf32>
    %262 = vector.shape_cast %261 : vector<1x64x32xf32> to vector<64x32xf32>
    %263 = vector.shape_cast %260 : vector<64x32xf32> to vector<1x64x32xf32>
    tpu.vector_store %arg7[%c0_217, %c0_218, %c0_219], %263 {strides = array<i32>} : memref<1x64x32xf32, #tpu.memory_space<vmem>>, vector<1x64x32xf32>,
    return
  }
  func.func @transform_0(%arg0: i32) -> (i32, i32, i32) {
    %c0_i32 = arith.constant 0 : i32
    %c0_i32_0 = arith.constant 0 : i32
    %c0_i32_1 = arith.constant 0 : i32
    return %arg0, %c0_i32, %c0_i32_0 : i32, i32, i32
  }
  func.func @transform_1(%arg0: i32) -> (i32, i32, i32) {
    %c0_i32 = arith.constant 0 : i32
    %c0_i32_0 = arith.constant 0 : i32
    %c0_i32_1 = arith.constant 0 : i32
    %c0_i32_2 = arith.constant 0 : i32
    return %c0_i32, %c0_i32_0, %c0_i32_1 : i32, i32, i32
  }
  func.func @transform_2(%arg0: i32) -> (i32, i32, i32) {
    %c0_i32 = arith.constant 0 : i32
    %c0_i32_0 = arith.constant 0 : i32
    %c0_i32_1 = arith.constant 0 : i32
    %c0_i32_2 = arith.constant 0 : i32
    return %c0_i32, %c0_i32_0, %c0_i32_1 : i32, i32, i32
  }
  func.func @transform_3(%arg0: i32) -> (i32, i32, i32) {
    %c0_i32 = arith.constant 0 : i32
    %c0_i32_0 = arith.constant 0 : i32
    %c0_i32_1 = arith.constant 0 : i32
    %c0_i32_2 = arith.constant 0 : i32
    return %c0_i32, %c0_i32_0, %c0_i32_1 : i32, i32, i32
  }
  func.func @transform_4(%arg0: i32) -> (i32, i32, i32) {
    %c0_i32 = arith.constant 0 : i32
    %c0_i32_0 = arith.constant 0 : i32
    %c0_i32_1 = arith.constant 0 : i32
    %c0_i32_2 = arith.constant 0 : i32
    return %c0_i32, %c0_i32_0, %c0_i32_1 : i32, i32, i32
  }
  func.func @transform_5(%arg0: i32) -> (i32, i32) {
    %c0_i32 = arith.constant 0 : i32
    %c0_i32_0 = arith.constant 0 : i32
    %c0_i32_1 = arith.constant 0 : i32
    return %c0_i32, %c0_i32_0 : i32, i32
  }
  func.func @transform_6(%arg0: i32) -> (i32, i32, i32) {
    %c0_i32 = arith.constant 0 : i32
    %c0_i32_0 = arith.constant 0 : i32
    %c0_i32_1 = arith.constant 0 : i32
    return %arg0, %c0_i32, %c0_i32_0 : i32, i32, i32
  }
}

</mosaic_0001>

<llo_original>
// kernel: tpu_custom_call.1
$region0: #{tpu_custom_call.1}
  #allocation0 [shape = 'u32[]', space=smem, size = 0x4, offset = 0x4, fixed_abs, tag = 'smem constant byte address 0x4 - core index']
  #allocation1 [shape = 'u32[144,128]{1,0:T(1,128)}', space=vmem, size = 0x12000, scoped, tag = 'internal scratch']
  #allocation2 [shape = 'bf16[8,64,4]{2,1,0:T(16,128)(2,1)}', space=vmem, size = 0x20000, scoped, tag = 'scratch operand']
  #allocation3 [shape = 'bf16[8,64,4]{2,1,0:T(16,128)(2,1)}', space=vmem, size = 0x20000, scoped, tag = 'scratch operand']
  #allocation4 [shape = 'bf16[8,64,4]{2,1,0:T(16,128)(2,1)}', space=vmem, size = 0x20000, scoped, tag = 'scratch operand']
  %s0 = inlined_call_operand.hbm [shape: f32[2,64,32], index: 0, kind: input, shape index: {}]
  %s1 = inlined_call_operand.hbm [shape: bf16[8,32,4], index: 1, kind: input, shape index: {}]
  %s2 = inlined_call_operand.hbm [shape: bf16[8,32,4], index: 2, kind: input, shape index: {}]
  %s3 = inlined_call_operand.hbm [shape: bf16[8,32,4], index: 3, kind: input, shape index: {}]
  %s4 = inlined_call_operand.hbm [shape: bf16[8,4,32], index: 4, kind: input, shape index: {}]
  %s5 = inlined_call_operand.hbm [shape: f32[1,32], index: 5, kind: input, shape index: {}]
  %s6 = inlined_call_operand.hbm [shape: f32[2,64,32], index: 6, kind: output, shape index: {}]
  %s7 = sld [smem:[#allocation0]]
  $region81: #{tpu_custom_call.1} parent=0
    _
  %s9 = ssub.s32 1, %s7
  %s10 = scalar_select 0, %s9, %s7
  $region1: #{tpu_custom_call.1} parent=0
    #allocation5 [shape = 'u8[65536]{0}', space=vmem, size = 0x10000, scoped, tag = 'input window, operand 0']
    #allocation6 [shape = 's32[2]{0}', space=sflag, size = 0x8, scoped, tag = 'scoped memory for tpu_custom_call.1']
    #allocation7 [shape = 's32[2]{0}', space=sflag, size = 0x8, scoped, tag = 'scoped memory for tpu_custom_call.1']
    #allocation8 [shape = 'u8[65536]{0}', space=vmem, size = 0x10000, scoped, tag = 'input window, operand 1, single buffered']
    #allocation9 [shape = 's32[1]{0}', space=sflag, size = 0x4, scoped, tag = 'scoped memory for tpu_custom_call.1']
    #allocation10 [shape = 'u8[65536]{0}', space=vmem, size = 0x10000, scoped, tag = 'input window, operand 2, single buffered']
    #allocation11 [shape = 'u8[65536]{0}', space=vmem, size = 0x10000, scoped, tag = 'input window, operand 3, single buffered']
    #allocation12 [shape = 's32[1]{0}', space=sflag, size = 0x4, scoped, tag = 'scoped memory for tpu_custom_call.1']
    #allocation13 [shape = 'u8[8192]{0}', space=vmem, size = 0x2000, scoped, tag = 'input window, operand 4, single buffered']
    #allocation14 [shape = 'u8[512]{0}', space=vmem, size = 0x400, scoped, tag = 'input window, operand 5, single buffered']
    #allocation15 [shape = 's32[1]{0}', space=sflag, size = 0x4, scoped, tag = 'scoped memory for tpu_custom_call.1']
    #allocation16 [shape = 'u8[65536]{0}', space=vmem, size = 0x10000, scoped, tag = 'output window, operand 0']
    %11 = vsyncpa [#allocation6], 0
    %s12 = scalar_lea.sflag [#allocation6], 1
    %13 = vsyncpa %s12, 0
    %14 = vsyncpa [#allocation9], 0
    %15 = vsyncpa [#allocation12], 0
    %16 = vsyncpa [#allocation15], 0
    %17 = vsyncpa [#allocation7], 0
    %s18 = scalar_lea.sflag [#allocation7], 1
    %19 = vsyncpa %s18, 0
    loop: start=0, step=1, limit=4
    $region2: #{tpu_custom_call.1} parent=1 // loop_pre_header
      _
    $region3: #{tpu_custom_call.1} parent=1 // loop_header
      %s21 = sphi 0, %s25
      %p22 = scmp.ge.s32.totalorder %s21, 4
      %s31 = sphi 0, %s33
      %s34 = sphi 0, %s31
      %s35 = sphi 0, %s34
      %s51 = sphi 0, %s35
      %s55 = sphi 0, %s55
      %s57 = sphi 0, %s55
      %s58 = sphi 0, %s57
      %s72 = sphi 0, %s58
      %s76 = sphi 0, %s76
      %s78 = sphi 0, %s76
      %s79 = sphi 0, %s78
      %s93 = sphi 0, %s79
      %s97 = sphi 0, %s97
      %s99 = sphi 0, %s97
      %s100 = sphi 0, %s99
      %s114 = sphi 0, %s100
      %s118 = sphi 0, %s118
      %s120 = sphi 0, %s118
      %s121 = sphi 0, %s120
      %s135 = sphi 0, %s121
      %s139 = sphi 0, %s139
      %s141 = sphi 0, %s139
      %s142 = sphi 0, %s141
      %s156 = sphi 0, %s142
      %s162 = sphi 0, %s164
      %s165 = sphi 0, %s162
      %s166 = sphi 0, %s165
      %s182 = sphi 0, %s166
    $region4: #{tpu_custom_call.1} parent=1 // loop_header_branch
      %24 = sbr.rel (%p22) target = $region8
    $region5: #{tpu_custom_call.1} parent=1 // loop_body
      %s26 = ssub.s32 %s21, 1
      %s27 = ssub.s32 %s21, 2
      %s28 = sadd.s32 %s21, 1
      %s29 = ssub.s32 %s21, %s28
      %p30 = scmp.eq.s32.totalorder %s29, 0
      %s32 = sadd.s32 %s31, 1
      %s33 = scalar_select %p30, %s31, %s32
      %p36 = pneg %p30
      %p37 = scmp.eq.s32.totalorder %s21, 1
      %p38 = por %p36, %p37
      %p39 = scmp.ne.s32.totalorder %s31, %s34
      %p40 = scmp.eq.s32.totalorder %s21, 0
      %p41 = por %p39, %p40
      %p42 = scmp.ne.s32.totalorder %s31, %s34
      %p43 = scmp.eq.s32.totalorder %s26, 1
      %p44 = por %p42, %p43
      %p45 = scmp.ne.s32.totalorder %s34, %s35
      %p46 = scmp.eq.s32.totalorder %s26, 0
      %p47 = por %p45, %p46
      %p48 = scmp.ne.s32.totalorder %s34, %s35
      %p49 = scmp.eq.s32.totalorder %s27, 1
      %p50 = por %p48, %p49
      %p52 = scmp.ne.s32.totalorder %s35, %s51
      %p53 = scmp.eq.s32.totalorder %s27, 0
      %p54 = por %p52, %p53
      %s56 = sadd.s32 %s55, 1
      %p59 = scmp.eq.s32.totalorder %s21, 1
      %p60 = scmp.ne.s32.totalorder %s55, %s57
      %p61 = scmp.eq.s32.totalorder %s21, 0
      %p62 = por %p60, %p61
      %p63 = scmp.ne.s32.totalorder %s55, %s57
      %p64 = scmp.eq.s32.totalorder %s26, 1
      %p65 = por %p63, %p64
      %p66 = scmp.ne.s32.totalorder %s57, %s58
      %p67 = scmp.eq.s32.totalorder %s26, 0
      %p68 = por %p66, %p67
      %p69 = scmp.ne.s32.totalorder %s57, %s58
      %p70 = scmp.eq.s32.totalorder %s27, 1
      %p71 = por %p69, %p70
      %p73 = scmp.ne.s32.totalorder %s58, %s72
      %p74 = scmp.eq.s32.totalorder %s27, 0
      %p75 = por %p73, %p74
      %s77 = sadd.s32 %s76, 1
      %p80 = scmp.eq.s32.totalorder %s21, 1
      %p81 = scmp.ne.s32.totalorder %s76, %s78
      %p82 = scmp.eq.s32.totalorder %s21, 0
      %p83 = por %p81, %p82
      %p84 = scmp.ne.s32.totalorder %s76, %s78
      %p85 = scmp.eq.s32.totalorder %s26, 1
      %p86 = por %p84, %p85
      %p87 = scmp.ne.s32.totalorder %s78, %s79
      %p88 = scmp.eq.s32.totalorder %s26, 0
      %p89 = por %p87, %p88
      %p90 = scmp.ne.s32.totalorder %s78, %s79
      %p91 = scmp.eq.s32.totalorder %s27, 1
      %p92 = por %p90, %p91
      %p94 = scmp.ne.s32.totalorder %s79, %s93
      %p95 = scmp.eq.s32.totalorder %s27, 0
      %p96 = por %p94, %p95
      %s98 = sadd.s32 %s97, 1
      %p101 = scmp.eq.s32.totalorder %s21, 1
      %p102 = scmp.ne.s32.totalorder %s97, %s99
      %p103 = scmp.eq.s32.totalorder %s21, 0
      %p104 = por %p102, %p103
      %p105 = scmp.ne.s32.totalorder %s97, %s99
      %p106 = scmp.eq.s32.totalorder %s26, 1
      %p107 = por %p105, %p106
      %p108 = scmp.ne.s32.totalorder %s99, %s100
      %p109 = scmp.eq.s32.totalorder %s26, 0
      %p110 = por %p108, %p109
      %p111 = scmp.ne.s32.totalorder %s99, %s100
      %p112 = scmp.eq.s32.totalorder %s27, 1
      %p113 = por %p111, %p112
      %p115 = scmp.ne.s32.totalorder %s100, %s114
      %p116 = scmp.eq.s32.totalorder %s27, 0
      %p117 = por %p115, %p116
      %s119 = sadd.s32 %s118, 1
      %p122 = scmp.eq.s32.totalorder %s21, 1
      %p123 = scmp.ne.s32.totalorder %s118, %s120
      %p124 = scmp.eq.s32.totalorder %s21, 0
      %p125 = por %p123, %p124
      %p126 = scmp.ne.s32.totalorder %s118, %s120
      %p127 = scmp.eq.s32.totalorder %s26, 1
      %p128 = por %p126, %p127
      %p129 = scmp.ne.s32.totalorder %s120, %s121
      %p130 = scmp.eq.s32.totalorder %s26, 0
      %p131 = por %p129, %p130
      %p132 = scmp.ne.s32.totalorder %s120, %s121
      %p133 = scmp.eq.s32.totalorder %s27, 1
      %p134 = por %p132, %p133
      %p136 = scmp.ne.s32.totalorder %s121, %s135
      %p137 = scmp.eq.s32.totalorder %s27, 0
      %p138 = por %p136, %p137
      %s140 = sadd.s32 %s139, 1
      %p143 = scmp.eq.s32.totalorder %s21, 1
      %p144 = scmp.ne.s32.totalorder %s139, %s141
      %p145 = scmp.eq.s32.totalorder %s21, 0
      %p146 = por %p144, %p145
      %p147 = scmp.ne.s32.totalorder %s139, %s141
      %p148 = scmp.eq.s32.totalorder %s26, 1
      %p149 = por %p147, %p148
      %p150 = scmp.ne.s32.totalorder %s141, %s142
      %p151 = scmp.eq.s32.totalorder %s26, 0
      %p152 = por %p150, %p151
      %p153 = scmp.ne.s32.totalorder %s141, %s142
      %p154 = scmp.eq.s32.totalorder %s27, 1
      %p155 = por %p153, %p154
      %p157 = scmp.ne.s32.totalorder %s142, %s156
      %p158 = scmp.eq.s32.totalorder %s27, 0
      %p159 = por %p157, %p158
      %s160 = ssub.s32 %s21, %s28
      %p161 = scmp.eq.s32.totalorder %s160, 0
      %s163 = sadd.s32 %s162, 1
      %s164 = scalar_select %p161, %s162, %s163
      %p167 = pneg %p161
      %p168 = scmp.eq.s32.totalorder %s21, 1
      %p169 = por %p167, %p168
      %p170 = scmp.ne.s32.totalorder %s162, %s165
      %p171 = scmp.eq.s32.totalorder %s21, 0
      %p172 = por %p170, %p171
      %p173 = scmp.ne.s32.totalorder %s162, %s165
      %p174 = scmp.eq.s32.totalorder %s26, 1
      %p175 = por %p173, %p174
      %p176 = scmp.ne.s32.totalorder %s165, %s166
      %p177 = scmp.eq.s32.totalorder %s26, 0
      %p178 = por %p176, %p177
      %p179 = scmp.ne.s32.totalorder %s165, %s166
      %p180 = scmp.eq.s32.totalorder %s27, 1
      %p181 = por %p179, %p180
      %p183 = scmp.ne.s32.totalorder %s166, %s182
      %p184 = scmp.eq.s32.totalorder %s27, 0
      %p185 = por %p183, %p184
      %p186 = scmp.le.s32.totalorder 1, %s21
      %p187 = scmp.lt.s32.totalorder %s21, 3
      %p188 = pnand %p186, %p187
      %p189 = pneg %p188
      // Predicated region
      $region9: #{tpu_custom_call.1} parent=5 // pred_check
        _
      $region10: #{tpu_custom_call.1} parent=5 // pred_check_branch
        %191 = sbr.rel (%p188) target = $region12
      $region11: #{tpu_custom_call.1} parent=5 // pred_region
        %s192 = ssub.s32 %s21, 1
        // Predicated region
        $region13: #{tpu_custom_call.1} parent=11 // pred_check
          %p193 = pneg %p68
        $region14: #{tpu_custom_call.1} parent=11 // pred_check_branch
          %195 = sbr.rel (%p193) target = $region16
        $region15: #{tpu_custom_call.1} parent=11 // pred_region
          %s197 = ssub.s32 2048, 2048
          %198 = vsyncadd [#allocation9], %s197
          %s199 = sshll.u32 [#allocation8], 4
          %s200 = int_to_ptr.vmem [resolvable:$true] %s199
          %205 = dma.hbm_to_vmem [thread:$0]  %s1, 2048, %s200, [#allocation9], 64, 64, 4
        $region16: #{tpu_custom_call.1} parent=11 // pred_fallthru
          _
        // Predicated region
        $region17: #{tpu_custom_call.1} parent=11 // pred_check
          %p206 = pneg %p89
        $region18: #{tpu_custom_call.1} parent=11 // pred_check_branch
          %208 = sbr.rel (%p206) target = $region20
        $region19: #{tpu_custom_call.1} parent=11 // pred_region
          %s210 = ssub.s32 2048, 2048
          %211 = vsyncadd [#allocation9], %s210
          %s212 = sshll.u32 [#allocation10], 4
          %s213 = int_to_ptr.vmem [resolvable:$true] %s212
          %218 = dma.hbm_to_vmem [thread:$0]  %s2, 2048, %s213, [#allocation9], 64, 64, 4
        $region20: #{tpu_custom_call.1} parent=11 // pred_fallthru
          _
        // Predicated region
        $region21: #{tpu_custom_call.1} parent=11 // pred_check
          %p219 = pneg %p110
        $region22: #{tpu_custom_call.1} parent=11 // pred_check_branch
          %221 = sbr.rel (%p219) target = $region24
        $region23: #{tpu_custom_call.1} parent=11 // pred_region
          %s223 = ssub.s32 2048, 2048
          %224 = vsyncadd [#allocation12], %s223
          %s225 = sshll.u32 [#allocation11], 4
          %s226 = int_to_ptr.vmem [resolvable:$true] %s225
          %231 = dma.hbm_to_vmem [thread:$0]  %s3, 2048, %s226, [#allocation12], 64, 64, 4
        $region24: #{tpu_custom_call.1} parent=11 // pred_fallthru
          _
        // Predicated region
        $region25: #{tpu_custom_call.1} parent=11 // pred_check
          %p232 = pneg %p131
        $region26: #{tpu_custom_call.1} parent=11 // pred_check_branch
          %234 = sbr.rel (%p232) target = $region28
        $region27: #{tpu_custom_call.1} parent=11 // pred_region
          %s236 = ssub.s32 256, 256
          %237 = vsyncadd [#allocation12], %s236
          %s238 = sshll.u32 [#allocation13], 4
          %s239 = int_to_ptr.vmem [resolvable:$true] %s238
          %244 = dma.hbm_to_vmem [thread:$0]  %s4, 256, %s239, [#allocation12], 32, 32, 2
        $region28: #{tpu_custom_call.1} parent=11 // pred_fallthru
          _
        // Predicated region
        $region29: #{tpu_custom_call.1} parent=11 // pred_check
          %p245 = pneg %p152
        $region30: #{tpu_custom_call.1} parent=11 // pred_check_branch
          %247 = sbr.rel (%p245) target = $region32
        $region31: #{tpu_custom_call.1} parent=11 // pred_region
          %s249 = ssub.s32 16, 16
          %250 = vsyncadd [#allocation15], %s249
          %s252 = sshll.u32 [#allocation14], 4
          %s253 = int_to_ptr.vmem [resolvable:$true] %s252
          %255 = dma.hbm_to_vmem [thread:$0]  %s5, 16, %s253, [#allocation15]
        $region32: #{tpu_custom_call.1} parent=11 // pred_fallthru
          _
      $region12: #{tpu_custom_call.1} parent=5 // pred_fallthru
        _
      %p256 = scmp.lt.s32.totalorder %s21, 2
      // Predicated region
      $region33: #{tpu_custom_call.1} parent=5 // pred_check
        %p257 = pneg %p256
      $region34: #{tpu_custom_call.1} parent=5 // pred_check_branch
        %259 = sbr.rel (%p257) target = $region36
      $region35: #{tpu_custom_call.1} parent=5 // pred_region
        // Predicated region
        $region37: #{tpu_custom_call.1} parent=35 // pred_check
          %p260 = pneg %p41
        $region38: #{tpu_custom_call.1} parent=35 // pred_check_branch
          %262 = sbr.rel (%p260) target = $region40
        $region39: #{tpu_custom_call.1} parent=35 // pred_region
          %s263 = sand.u32 %s31, 1
          %s264 = scalar_lea.sflag [#allocation6], %s263
          %s265 = sand.u32 %s31, 1
          %s266 = smul.addr %s265, 64
          %s267 = scalar_lea.vmem [#allocation5], %s266
          %s269 = ssub.s32 1024, 1024
          %270 = vsyncadd %s264, %s269
          %s271 = smul.addr %s21, 8
          %s272 = smul.addr %s271, 128
          %s273 = scalar_lea.hbm %s0, %s272
          %s274 = sshll.u32 %s267, 4
          %s275 = int_to_ptr.vmem [resolvable:$true] %s274
          %280 = dma.hbm_to_vmem [thread:$0]  %s273, 1024, %s275, %s264, 128, 128, 8
        $region40: #{tpu_custom_call.1} parent=35 // pred_fallthru
          _
      $region36: #{tpu_custom_call.1} parent=5 // pred_fallthru
        _
      %p281 = scmp.le.s32.totalorder 1, %s21
      %p282 = scmp.lt.s32.totalorder %s21, 3
      %p283 = pnand %p281, %p282
      %p284 = pneg %p283
      // Predicated region
      $region41: #{tpu_custom_call.1} parent=5 // pred_check
        _
      $region42: #{tpu_custom_call.1} parent=5 // pred_check_branch
        %286 = sbr.rel (%p283) target = $region44
      $region43: #{tpu_custom_call.1} parent=5 // pred_region
        %s287 = ssub.s32 %s21, 1
        %s288 = sand.u32 %s34, 1
        %s289 = scalar_lea.sflag [#allocation6], %s288
        %s290 = sand.u32 %s34, 1
        %s291 = smul.addr %s290, 64
        %s292 = scalar_lea.vmem [#allocation5], %s291
        // Predicated region
        $region45: #{tpu_custom_call.1} parent=43 // pred_check
          %p293 = pneg %p47
        $region46: #{tpu_custom_call.1} parent=43 // pred_check_branch
          %295 = sbr.rel (%p293) target = $region48
        $region47: #{tpu_custom_call.1} parent=43 // pred_region
          %296 = dma.done %s289, 1024
        $region48: #{tpu_custom_call.1} parent=43 // pred_fallthru
          _
        // Predicated region
        $region49: #{tpu_custom_call.1} parent=43 // pred_check
          %p297 = pneg %p68
        $region50: #{tpu_custom_call.1} parent=43 // pred_check_branch
          %299 = sbr.rel (%p297) target = $region52
        $region51: #{tpu_custom_call.1} parent=43 // pred_region
          %300 = dma.done [#allocation9], 2048
        $region52: #{tpu_custom_call.1} parent=43 // pred_fallthru
          _
        // Predicated region
        $region53: #{tpu_custom_call.1} parent=43 // pred_check
          %p301 = pneg %p89
        $region54: #{tpu_custom_call.1} parent=43 // pred_check_branch
          %303 = sbr.rel (%p301) target = $region56
        $region55: #{tpu_custom_call.1} parent=43 // pred_region
          %304 = dma.done [#allocation9], 2048
        $region56: #{tpu_custom_call.1} parent=43 // pred_fallthru
          _
        // Predicated region
        $region57: #{tpu_custom_call.1} parent=43 // pred_check
          %p305 = pneg %p110
        $region58: #{tpu_custom_call.1} parent=43 // pred_check_branch
          %307 = sbr.rel (%p305) target = $region60
        $region59: #{tpu_custom_call.1} parent=43 // pred_region
          %308 = dma.done [#allocation12], 2048
        $region60: #{tpu_custom_call.1} parent=43 // pred_fallthru
          _
        // Predicated region
        $region61: #{tpu_custom_call.1} parent=43 // pred_check
          %p309 = pneg %p131
        $region62: #{tpu_custom_call.1} parent=43 // pred_check_branch
          %311 = sbr.rel (%p309) target = $region64
        $region63: #{tpu_custom_call.1} parent=43 // pred_region
          %312 = dma.done [#allocation12], 256
        $region64: #{tpu_custom_call.1} parent=43 // pred_fallthru
          _
        // Predicated region
        $region65: #{tpu_custom_call.1} parent=43 // pred_check
          %p313 = pneg %p152
        $region66: #{tpu_custom_call.1} parent=43 // pred_check_branch
          %315 = sbr.rel (%p313) target = $region68
        $region67: #{tpu_custom_call.1} parent=43 // pred_region
          %316 = dma.done [#allocation15], 16
        $region68: #{tpu_custom_call.1} parent=43 // pred_fallthru
          _
        %s317 = sand.u32 %s34, 1
        %s318 = scalar_lea.sflag [#allocation6], %s317
        %s319 = sand.u32 %s34, 1
        %s320 = smul.addr %s319, 64
        %s321 = scalar_lea.vmem [#allocation5], %s320
        %p322 = pneg %p47
        %p323 = pneg %p44
        %p324 = pneg %p68
        %p325 = pneg %p65
        %p326 = pneg %p89
        %p327 = pneg %p86
        %p328 = pneg %p110
        %p329 = pneg %p107
        %p330 = pneg %p131
        %p331 = pneg %p128
        %p332 = pneg %p152
        %p333 = pneg %p149
        %p334 = pneg %p178
        %p335 = pneg %p175
        %s336 = sand.u32 %s165, 1
        %s337 = scalar_lea.sflag [#allocation7], %s336
        %s338 = sand.u32 %s165, 1
        %s339 = smul.addr %s338, 64
        %s340 = scalar_lea.vmem [#allocation16], %s339
        %v342 = vld [vmem:[%s292] sm:$0xff]
        %v343 = vld [vmem:[%s292 + $0x8] sm:$0xff]
        %v344 = vld [vmem:[%s292 + $0x10] sm:$0xff]
        %v345 = vld [vmem:[%s292 + $0x18] sm:$0xff]
        %v346 = vld [vmem:[%s292 + $0x20] sm:$0xff]
        %v347 = vld [vmem:[%s292 + $0x28] sm:$0xff]
        %v348 = vld [vmem:[%s292 + $0x30] sm:$0xff]
        %v349 = vld [vmem:[%s292 + $0x38] sm:$0xff]
        %v350 = vpack.c.bf16 %v343, %v342
        %v351 = vpack.c.bf16 %v345, %v344
        %v352 = vpack.c.bf16 %v347, %v346
        %v353 = vpack.c.bf16 %v349, %v348
        %v354 = vld [vmem:[#allocation8] sm:$0xf]
        %v355 = vld [vmem:[#allocation8 + $0x4] sm:$0xf]
        %v356 = vld [vmem:[#allocation8 + $0x8] sm:$0xf]
        %v357 = vld [vmem:[#allocation8 + $0xc] sm:$0xf]
        %v362 = vunpack.c.l.b16 %v354
        %v363 = vunpack.c.l.b16 %v355
        %v364 = vunpack.c.l.b16 %v356
        %v365 = vunpack.c.l.b16 %v357
        %v366 = vpack.c.b16 %v363, %v362
        %v367 = vpack.c.b16 %v365, %v364
        %vm370 = vcmask 261120
        %v372 = vsel %vm370, %v350, 0
        %v375 = vsel %vm370, %v351, 0
        %v378 = vsel %vm370, %v352, 0
        %v381 = vsel %vm370, %v353, 0
        %383 = vmatprep.subr.bf16.mxu0 0
        %384 = vmatpush1.bf16.msra.mxu0 %v366
        %385 = vmatprep.subr.bf16.mxu0 0
        %386 = vmatpush1.bf16.msra.mxu0 %v367
        %387 = vmatprep.subr.bf16.mxu0 0
        %388 = vmatpush1.bf16.msra.mxu0 0
        %389 = vmatprep.subr.bf16.mxu0 0
        %390 = vmatpush1.bf16.msra.mxu0 0
        %391 = vmatprep.subr.bf16.mxu0 0
        %392 = vmatpush1.bf16.msra.mxu0 0
        %393 = vmatprep.subr.bf16.mxu0 0
        %394 = vmatpush1.bf16.msra.mxu0 0
        %395 = vmatprep.subr.bf16.mxu0 0
        %396 = vmatpush1.bf16.msra.mxu0 0
        %397 = vmatprep.subr.bf16.mxu0 0
        %398 = vmatpush1.bf16.msra.mxu0 0
        %399 = vmatprep.subr.bf16.mxu0 0
        %400 = vmatpush1.bf16.msra.mxu0 0
        %401 = vmatprep.subr.bf16.mxu0 0
        %402 = vmatpush1.bf16.msra.mxu0 0
        %403 = vmatprep.subr.bf16.mxu0 0
        %404 = vmatpush1.bf16.msra.mxu0 0
        %405 = vmatprep.subr.bf16.mxu0 0
        %406 = vmatpush1.bf16.msra.mxu0 0
        %407 = vmatprep.subr.bf16.mxu0 0
        %408 = vmatpush1.bf16.msra.mxu0 0
        %409 = vmatprep.subr.bf16.mxu0 0
        %410 = vmatpush1.bf16.msra.mxu0 0
        %411 = vmatprep.subr.bf16.mxu0 0
        %412 = vmatpush1.bf16.msra.mxu0 0
        %413 = vmatprep.subr.bf16.mxu0 0
        %414 = vmatpush1.bf16.msra.mxu0 0
        %415 = vmatprep.mubr.bf16.mxu0 0
        %416 = vmatmul.mubr.bf16.gmra.mrb[0].mxu0 %v372
        %v417 = vpop.f32.mrb[0].mxu0
        %v418 = vadd.f32 0.0, %v417
        %v419 = vpop.f32.mrb[0].mxu0
        %v420 = vpop.f32.mrb[0].mxu0
        %v421 = vadd.f32 0.0, %v420
        %v422 = vpop.f32.mrb[0].mxu0
        %423 = vmatprep.mubr.bf16.mxu0 0
        %424 = vmatmul.mubr.bf16.gmra.mrb[0].mxu0 %v375
        %v425 = vpop.f32.mrb[0].mxu0
        %v426 = vadd.f32 0.0, %v425
        %v427 = vpop.f32.mrb[0].mxu0
        %v428 = vpop.f32.mrb[0].mxu0
        %v429 = vadd.f32 0.0, %v428
        %v430 = vpop.f32.mrb[0].mxu0
        %431 = vmatprep.mubr.bf16.mxu0 0
        %432 = vmatmul.mubr.bf16.gmra.mrb[0].mxu0 %v378
        %v433 = vpop.f32.mrb[0].mxu0
        %v434 = vadd.f32 0.0, %v433
        %v435 = vpop.f32.mrb[0].mxu0
        %v436 = vpop.f32.mrb[0].mxu0
        %v437 = vadd.f32 0.0, %v436
        %v438 = vpop.f32.mrb[0].mxu0
        %439 = vmatprep.mubr.bf16.mxu0 0
        %440 = vmatmul.mubr.bf16.gmra.mrb[0].mxu0 %v381
        %v441 = vpop.f32.mrb[0].mxu0
        %v442 = vadd.f32 0.0, %v441
        %v443 = vpop.f32.mrb[0].mxu0
        %v444 = vpop.f32.mrb[0].mxu0
        %v445 = vadd.f32 0.0, %v444
        %v446 = vpop.f32.mrb[0].mxu0
        %447 = vdwg.mxu0
        %v448 = vmul.f32 %v418, 0.5
        %v449 = vmul.f32 %v421, 0.5
        %v450 = vmul.f32 %v426, 0.5
        %v451 = vmul.f32 %v429, 0.5
        %v452 = vmul.f32 %v434, 0.5
        %v453 = vmul.f32 %v437, 0.5
        %v454 = vmul.f32 %v442, 0.5
        %v455 = vmul.f32 %v445, 0.5
        %v456 = vpack.c.bf16 %v449, %v448
        %v457 = vpack.c.bf16 %v451, %v450
        %v458 = vpack.c.bf16 %v453, %v452
        %v459 = vpack.c.bf16 %v455, %v454
        %vm460 = vcmask 31744
        %461 = vst.msk [vmem:[#allocation2] sm:$0xff] %vm460, %v456
        %462 = vst.msk [vmem:[#allocation2 + $0x8] sm:$0xff] %vm460, %v457
        %463 = vst.msk [vmem:[#allocation2 + $0x10] sm:$0xff] %vm460, %v458
        %464 = vst.msk [vmem:[#allocation2 + $0x18] sm:$0xff] %vm460, %v459
        %v465 = vld [vmem:[#allocation10] sm:$0xf]
        %v466 = vld [vmem:[#allocation10 + $0x4] sm:$0xf]
        %v467 = vld [vmem:[#allocation10 + $0x8] sm:$0xf]
        %v468 = vld [vmem:[#allocation10 + $0xc] sm:$0xf]
        %v473 = vunpack.c.l.b16 %v465
        %v474 = vunpack.c.l.b16 %v466
        %v475 = vunpack.c.l.b16 %v467
        %v476 = vunpack.c.l.b16 %v468
        %v477 = vpack.c.b16 %v474, %v473
        %v478 = vpack.c.b16 %v476, %v475
        %481 = vmatprep.subr.bf16.mxu0 0
        %482 = vmatpush1.bf16.msra.mxu0 %v477
        %483 = vmatprep.subr.bf16.mxu0 0
        %484 = vmatpush1.bf16.msra.mxu0 %v478
        %485 = vmatprep.subr.bf16.mxu0 0
        %486 = vmatpush1.bf16.msra.mxu0 0
        %487 = vmatprep.subr.bf16.mxu0 0
        %488 = vmatpush1.bf16.msra.mxu0 0
        %489 = vmatprep.subr.bf16.mxu0 0
        %490 = vmatpush1.bf16.msra.mxu0 0
        %491 = vmatprep.subr.bf16.mxu0 0
        %492 = vmatpush1.bf16.msra.mxu0 0
        %493 = vmatprep.subr.bf16.mxu0 0
        %494 = vmatpush1.bf16.msra.mxu0 0
        %495 = vmatprep.subr.bf16.mxu0 0
        %496 = vmatpush1.bf16.msra.mxu0 0
        %497 = vmatprep.subr.bf16.mxu0 0
        %498 = vmatpush1.bf16.msra.mxu0 0
        %499 = vmatprep.subr.bf16.mxu0 0
        %500 = vmatpush1.bf16.msra.mxu0 0
        %501 = vmatprep.subr.bf16.mxu0 0
        %502 = vmatpush1.bf16.msra.mxu0 0
        %503 = vmatprep.subr.bf16.mxu0 0
        %504 = vmatpush1.bf16.msra.mxu0 0
        %505 = vmatprep.subr.bf16.mxu0 0
        %506 = vmatpush1.bf16.msra.mxu0 0
        %507 = vmatprep.subr.bf16.mxu0 0
        %508 = vmatpush1.bf16.msra.mxu0 0
        %509 = vmatprep.subr.bf16.mxu0 0
        %510 = vmatpush1.bf16.msra.mxu0 0
        %511 = vmatprep.subr.bf16.mxu0 0
        %512 = vmatpush1.bf16.msra.mxu0 0
        %513 = vmatprep.mubr.bf16.mxu0 0
        %514 = vmatmul.mubr.bf16.gmra.mrb[0].mxu0 %v372
        %v515 = vpop.f32.mrb[0].mxu0
        %v516 = vadd.f32 0.0, %v515
        %v517 = vpop.f32.mrb[0].mxu0
        %v518 = vpop.f32.mrb[0].mxu0
        %v519 = vadd.f32 0.0, %v518
        %v520 = vpop.f32.mrb[0].mxu0
        %521 = vmatprep.mubr.bf16.mxu0 0
        %522 = vmatmul.mubr.bf16.gmra.mrb[0].mxu0 %v375
        %v523 = vpop.f32.mrb[0].mxu0
        %v524 = vadd.f32 0.0, %v523
        %v525 = vpop.f32.mrb[0].mxu0
        %v526 = vpop.f32.mrb[0].mxu0
        %v527 = vadd.f32 0.0, %v526
        %v528 = vpop.f32.mrb[0].mxu0
        %529 = vmatprep.mubr.bf16.mxu0 0
        %530 = vmatmul.mubr.bf16.gmra.mrb[0].mxu0 %v378
        %v531 = vpop.f32.mrb[0].mxu0
        %v532 = vadd.f32 0.0, %v531
        %v533 = vpop.f32.mrb[0].mxu0
        %v534 = vpop.f32.mrb[0].mxu0
        %v535 = vadd.f32 0.0, %v534
        %v536 = vpop.f32.mrb[0].mxu0
        %537 = vmatprep.mubr.bf16.mxu0 0
        %538 = vmatmul.mubr.bf16.gmra.mrb[0].mxu0 %v381
        %v539 = vpop.f32.mrb[0].mxu0
        %v540 = vadd.f32 0.0, %v539
        %v541 = vpop.f32.mrb[0].mxu0
        %v542 = vpop.f32.mrb[0].mxu0
        %v543 = vadd.f32 0.0, %v542
        %v544 = vpop.f32.mrb[0].mxu0
        %545 = vdwg.mxu0
        %v546 = vpack.c.bf16 %v519, %v516
        %v547 = vpack.c.bf16 %v527, %v524
        %v548 = vpack.c.bf16 %v535, %v532
        %v549 = vpack.c.bf16 %v543, %v540
        %550 = vst.msk [vmem:[#allocation3] sm:$0xff] %vm460, %v546
        %551 = vst.msk [vmem:[#allocation3 + $0x8] sm:$0xff] %vm460, %v547
        %552 = vst.msk [vmem:[#allocation3 + $0x10] sm:$0xff] %vm460, %v548
        %553 = vst.msk [vmem:[#allocation3 + $0x18] sm:$0xff] %vm460, %v549
        %v554 = vld [vmem:[#allocation11] sm:$0xf]
        %v555 = vld [vmem:[#allocation11 + $0x4] sm:$0xf]
        %v556 = vld [vmem:[#allocation11 + $0x8] sm:$0xf]
        %v557 = vld [vmem:[#allocation11 + $0xc] sm:$0xf]
        %v562 = vunpack.c.l.b16 %v554
        %v563 = vunpack.c.l.b16 %v555
        %v564 = vunpack.c.l.b16 %v556
        %v565 = vunpack.c.l.b16 %v557
        %v566 = vpack.c.b16 %v563, %v562
        %v567 = vpack.c.b16 %v565, %v564
        %570 = vmatprep.subr.bf16.mxu0 0
        %571 = vmatpush1.bf16.msra.mxu0 %v566
        %572 = vmatprep.subr.bf16.mxu0 0
        %573 = vmatpush1.bf16.msra.mxu0 %v567
        %574 = vmatprep.subr.bf16.mxu0 0
        %575 = vmatpush1.bf16.msra.mxu0 0
        %576 = vmatprep.subr.bf16.mxu0 0
        %577 = vmatpush1.bf16.msra.mxu0 0
        %578 = vmatprep.subr.bf16.mxu0 0
        %579 = vmatpush1.bf16.msra.mxu0 0
        %580 = vmatprep.subr.bf16.mxu0 0
        %581 = vmatpush1.bf16.msra.mxu0 0
        %582 = vmatprep.subr.bf16.mxu0 0
        %583 = vmatpush1.bf16.msra.mxu0 0
        %584 = vmatprep.subr.bf16.mxu0 0
        %585 = vmatpush1.bf16.msra.mxu0 0
        %586 = vmatprep.subr.bf16.mxu0 0
        %587 = vmatpush1.bf16.msra.mxu0 0
        %588 = vmatprep.subr.bf16.mxu0 0
        %589 = vmatpush1.bf16.msra.mxu0 0
        %590 = vmatprep.subr.bf16.mxu0 0
        %591 = vmatpush1.bf16.msra.mxu0 0
        %592 = vmatprep.subr.bf16.mxu0 0
        %593 = vmatpush1.bf16.msra.mxu0 0
        %594 = vmatprep.subr.bf16.mxu0 0
        %595 = vmatpush1.bf16.msra.mxu0 0
        %596 = vmatprep.subr.bf16.mxu0 0
        %597 = vmatpush1.bf16.msra.mxu0 0
        %598 = vmatprep.subr.bf16.mxu0 0
        %599 = vmatpush1.bf16.msra.mxu0 0
        %600 = vmatprep.subr.bf16.mxu0 0
        %601 = vmatpush1.bf16.msra.mxu0 0
        %602 = vmatprep.mubr.bf16.mxu0 0
        %603 = vmatmul.mubr.bf16.gmra.mrb[0].mxu0 %v372
        %v604 = vpop.f32.mrb[0].mxu0
        %v605 = vadd.f32 0.0, %v604
        %v606 = vpop.f32.mrb[0].mxu0
        %v607 = vpop.f32.mrb[0].mxu0
        %v608 = vadd.f32 0.0, %v607
        %v609 = vpop.f32.mrb[0].mxu0
        %610 = vmatprep.mubr.bf16.mxu0 0
        %611 = vmatmul.mubr.bf16.gmra.mrb[0].mxu0 %v375
        %v612 = vpop.f32.mrb[0].mxu0
        %v613 = vadd.f32 0.0, %v612
        %v614 = vpop.f32.mrb[0].mxu0
        %v615 = vpop.f32.mrb[0].mxu0
        %v616 = vadd.f32 0.0, %v615
        %v617 = vpop.f32.mrb[0].mxu0
        %618 = vmatprep.mubr.bf16.mxu0 0
        %619 = vmatmul.mubr.bf16.gmra.mrb[0].mxu0 %v378
        %v620 = vpop.f32.mrb[0].mxu0
        %v621 = vadd.f32 0.0, %v620
        %v622 = vpop.f32.mrb[0].mxu0
        %v623 = vpop.f32.mrb[0].mxu0
        %v624 = vadd.f32 0.0, %v623
        %v625 = vpop.f32.mrb[0].mxu0
        %626 = vmatprep.mubr.bf16.mxu0 0
        %627 = vmatmul.mubr.bf16.gmra.mrb[0].mxu0 %v381
        %v628 = vpop.f32.mrb[0].mxu0
        %v629 = vadd.f32 0.0, %v628
        %v630 = vpop.f32.mrb[0].mxu0
        %v631 = vpop.f32.mrb[0].mxu0
        %v632 = vadd.f32 0.0, %v631
        %v633 = vpop.f32.mrb[0].mxu0
        %634 = vdwg.mxu0
        %v635 = vpack.c.bf16 %v608, %v605
        %v636 = vpack.c.bf16 %v616, %v613
        %v637 = vpack.c.bf16 %v624, %v621
        %v638 = vpack.c.bf16 %v632, %v629
        %639 = vst.msk [vmem:[#allocation4] sm:$0xff] %vm460, %v635
        %640 = vst.msk [vmem:[#allocation4 + $0x8] sm:$0xff] %vm460, %v636
        %641 = vst.msk [vmem:[#allocation4 + $0x10] sm:$0xff] %vm460, %v637
        %642 = vst.msk [vmem:[#allocation4 + $0x18] sm:$0xff] %vm460, %v638
        %s643 = scalar_lea.vmem [#allocation8], 16
        %v644 = vld [vmem:[%s643] sm:$0xf]
        %v645 = vld [vmem:[%s643 + $0x4] sm:$0xf]
        %v646 = vld [vmem:[%s643 + $0x8] sm:$0xf]
        %v647 = vld [vmem:[%s643 + $0xc] sm:$0xf]
        %v652 = vunpack.c.l.b16 %v644
        %v653 = vunpack.c.l.b16 %v645
        %v654 = vunpack.c.l.b16 %v646
        %v655 = vunpack.c.l.b16 %v647
        %v656 = vpack.c.b16 %v653, %v652
        %v657 = vpack.c.b16 %v655, %v654
        %660 = vmatprep.subr.bf16.mxu0 0
        %661 = vmatpush1.bf16.msra.mxu0 %v656
        %662 = vmatprep.subr.bf16.mxu0 0
        %663 = vmatpush1.bf16.msra.mxu0 %v657
        %664 = vmatprep.subr.bf16.mxu0 0
        %665 = vmatpush1.bf16.msra.mxu0 0
        %666 = vmatprep.subr.bf16.mxu0 0
        %667 = vmatpush1.bf16.msra.mxu0 0
        %668 = vmatprep.subr.bf16.mxu0 0
        %669 = vmatpush1.bf16.msra.mxu0 0
        %670 = vmatprep.subr.bf16.mxu0 0
        %671 = vmatpush1.bf16.msra.mxu0 0
        %672 = vmatprep.subr.bf16.mxu0 0
        %673 = vmatpush1.bf16.msra.mxu0 0
        %674 = vmatprep.subr.bf16.mxu0 0
        %675 = vmatpush1.bf16.msra.mxu0 0
        %676 = vmatprep.subr.bf16.mxu0 0
        %677 = vmatpush1.bf16.msra.mxu0 0
        %678 = vmatprep.subr.bf16.mxu0 0
        %679 = vmatpush1.bf16.msra.mxu0 0
        %680 = vmatprep.subr.bf16.mxu0 0
        %681 = vmatpush1.bf16.msra.mxu0 0
        %682 = vmatprep.subr.bf16.mxu0 0
        %683 = vmatpush1.bf16.msra.mxu0 0
        %684 = vmatprep.subr.bf16.mxu0 0
        %685 = vmatpush1.bf16.msra.mxu0 0
        %686 = vmatprep.subr.bf16.mxu0 0
        %687 = vmatpush1.bf16.msra.mxu0 0
        %688 = vmatprep.subr.bf16.mxu0 0
        %689 = vmatpush1.bf16.msra.mxu0 0
        %690 = vmatprep.subr.bf16.mxu0 0
        %691 = vmatpush1.bf16.msra.mxu0 0
        %692 = vmatprep.mubr.bf16.mxu0 0
        %693 = vmatmul.mubr.bf16.gmra.mrb[0].mxu0 %v372
        %v694 = vpop.f32.mrb[0].mxu0
        %v695 = vadd.f32 0.0, %v694
        %v696 = vpop.f32.mrb[0].mxu0
        %v697 = vpop.f32.mrb[0].mxu0
        %v698 = vadd.f32 0.0, %v697
        %v699 = vpop.f32.mrb[0].mxu0
        %700 = vmatprep.mubr.bf16.mxu0 0
        %701 = vmatmul.mubr.bf16.gmra.mrb[0].mxu0 %v375
        %v702 = vpop.f32.mrb[0].mxu0
        %v703 = vadd.f32 0.0, %v702
        %v704 = vpop.f32.mrb[0].mxu0
        %v705 = vpop.f32.mrb[0].mxu0
        %v706 = vadd.f32 0.0, %v705
        %v707 = vpop.f32.mrb[0].mxu0
        %708 = vmatprep.mubr.bf16.mxu0 0
        %709 = vmatmul.mubr.bf16.gmra.mrb[0].mxu0 %v378
        %v710 = vpop.f32.mrb[0].mxu0
        %v711 = vadd.f32 0.0, %v710
        %v712 = vpop.f32.mrb[0].mxu0
        %v713 = vpop.f32.mrb[0].mxu0
        %v714 = vadd.f32 0.0, %v713
        %v715 = vpop.f32.mrb[0].mxu0
        %716 = vmatprep.mubr.bf16.mxu0 0
        %717 = vmatmul.mubr.bf16.gmra.mrb[0].mxu0 %v381
        %v718 = vpop.f32.mrb[0].mxu0
        %v719 = vadd.f32 0.0, %v718
        %v720 = vpop.f32.mrb[0].mxu0
        %v721 = vpop.f32.mrb[0].mxu0
        %v722 = vadd.f32 0.0, %v721
        %v723 = vpop.f32.mrb[0].mxu0
        %724 = vdwg.mxu0
        %v725 = vmul.f32 %v695, 0.5
        %v726 = vmul.f32 %v698, 0.5
        %v727 = vmul.f32 %v703, 0.5
        %v728 = vmul.f32 %v706, 0.5
        %v729 = vmul.f32 %v711, 0.5
        %v730 = vmul.f32 %v714, 0.5
        %v731 = vmul.f32 %v719, 0.5
        %v732 = vmul.f32 %v722, 0.5
        %v733 = vpack.c.bf16 %v726, %v725
        %v734 = vpack.c.bf16 %v728, %v727
        %v735 = vpack.c.bf16 %v730, %v729
        %v736 = vpack.c.bf16 %v732, %v731
        %s737 = scalar_lea.vmem [#allocation2], 32
        %738 = vst.msk [vmem:[%s737] sm:$0xff] %vm460, %v733
        %739 = vst.msk [vmem:[%s737 + $0x8] sm:$0xff] %vm460, %v734
        %740 = vst.msk [vmem:[%s737 + $0x10] sm:$0xff] %vm460, %v735
        %741 = vst.msk [vmem:[%s737 + $0x18] sm:$0xff] %vm460, %v736
        %s742 = scalar_lea.vmem [#allocation10], 16
        %v743 = vld [vmem:[%s742] sm:$0xf]
        %v744 = vld [vmem:[%s742 + $0x4] sm:$0xf]
        %v745 = vld [vmem:[%s742 + $0x8] sm:$0xf]
        %v746 = vld [vmem:[%s742 + $0xc] sm:$0xf]
        %v751 = vunpack.c.l.b16 %v743
        %v752 = vunpack.c.l.b16 %v744
        %v753 = vunpack.c.l.b16 %v745
        %v754 = vunpack.c.l.b16 %v746
        %v755 = vpack.c.b16 %v752, %v751
        %v756 = vpack.c.b16 %v754, %v753
        %759 = vmatprep.subr.bf16.mxu0 0
        %760 = vmatpush1.bf16.msra.mxu0 %v755
        %761 = vmatprep.subr.bf16.mxu0 0
        %762 = vmatpush1.bf16.msra.mxu0 %v756
        %763 = vmatprep.subr.bf16.mxu0 0
        %764 = vmatpush1.bf16.msra.mxu0 0
        %765 = vmatprep.subr.bf16.mxu0 0
        %766 = vmatpush1.bf16.msra.mxu0 0
        %767 = vmatprep.subr.bf16.mxu0 0
        %768 = vmatpush1.bf16.msra.mxu0 0
        %769 = vmatprep.subr.bf16.mxu0 0
        %770 = vmatpush1.bf16.msra.mxu0 0
        %771 = vmatprep.subr.bf16.mxu0 0
        %772 = vmatpush1.bf16.msra.mxu0 0
        %773 = vmatprep.subr.bf16.mxu0 0
        %774 = vmatpush1.bf16.msra.mxu0 0
        %775 = vmatprep.subr.bf16.mxu0 0
        %776 = vmatpush1.bf16.msra.mxu0 0
        %777 = vmatprep.subr.bf16.mxu0 0
        %778 = vmatpush1.bf16.msra.mxu0 0
        %779 = vmatprep.subr.bf16.mxu0 0
        %780 = vmatpush1.bf16.msra.mxu0 0
        %781 = vmatprep.subr.bf16.mxu0 0
        %782 = vmatpush1.bf16.msra.mxu0 0
        %783 = vmatprep.subr.bf16.mxu0 0
        %784 = vmatpush1.bf16.msra.mxu0 0
        %785 = vmatprep.subr.bf16.mxu0 0
        %786 = vmatpush1.bf16.msra.mxu0 0
        %787 = vmatprep.subr.bf16.mxu0 0
        %788 = vmatpush1.bf16.msra.mxu0 0
        %789 = vmatprep.subr.bf16.mxu0 0
        %790 = vmatpush1.bf16.msra.mxu0 0
        %791 = vmatprep.mubr.bf16.mxu0 0
        %792 = vmatmul.mubr.bf16.gmra.mrb[0].mxu0 %v372
        %v793 = vpop.f32.mrb[0].mxu0
        %v794 = vadd.f32 0.0, %v793
        %v795 = vpop.f32.mrb[0].mxu0
        %v796 = vpop.f32.mrb[0].mxu0
        %v797 = vadd.f32 0.0, %v796
        %v798 = vpop.f32.mrb[0].mxu0
        %799 = vmatprep.mubr.bf16.mxu0 0
        %800 = vmatmul.mubr.bf16.gmra.mrb[0].mxu0 %v375
        %v801 = vpop.f32.mrb[0].mxu0
        %v802 = vadd.f32 0.0, %v801
        %v803 = vpop.f32.mrb[0].mxu0
        %v804 = vpop.f32.mrb[0].mxu0
        %v805 = vadd.f32 0.0, %v804
        %v806 = vpop.f32.mrb[0].mxu0
        %807 = vmatprep.mubr.bf16.mxu0 0
        %808 = vmatmul.mubr.bf16.gmra.mrb[0].mxu0 %v378
        %v809 = vpop.f32.mrb[0].mxu0
        %v810 = vadd.f32 0.0, %v809
        %v811 = vpop.f32.mrb[0].mxu0
        %v812 = vpop.f32.mrb[0].mxu0
        %v813 = vadd.f32 0.0, %v812
        %v814 = vpop.f32.mrb[0].mxu0
        %815 = vmatprep.mubr.bf16.mxu0 0
        %816 = vmatmul.mubr.bf16.gmra.mrb[0].mxu0 %v381
        %v817 = vpop.f32.mrb[0].mxu0
        %v818 = vadd.f32 0.0, %v817
        %v819 = vpop.f32.mrb[0].mxu0
        %v820 = vpop.f32.mrb[0].mxu0
        %v821 = vadd.f32 0.0, %v820
        %v822 = vpop.f32.mrb[0].mxu0
        %823 = vdwg.mxu0
        %v824 = vpack.c.bf16 %v797, %v794
        %v825 = vpack.c.bf16 %v805, %v802
        %v826 = vpack.c.bf16 %v813, %v810
        %v827 = vpack.c.bf16 %v821, %v818
        %s828 = scalar_lea.vmem [#allocation3], 32
        %829 = vst.msk [vmem:[%s828] sm:$0xff] %vm460, %v824
        %830 = vst.msk [vmem:[%s828 + $0x8] sm:$0xff] %vm460, %v825
        %831 = vst.msk [vmem:[%s828 + $0x10] sm:$0xff] %vm460, %v826
        %832 = vst.msk [vmem:[%s828 + $0x18] sm:$0xff] %vm460, %v827
        %s833 = scalar_lea.vmem [#allocation11], 16
        %v834 = vld [vmem:[%s833] sm:$0xf]
        %v835 = vld [vmem:[%s833 + $0x4] sm:$0xf]
        %v836 = vld [vmem:[%s833 + $0x8] sm:$0xf]
        %v837 = vld [vmem:[%s833 + $0xc] sm:$0xf]
        %v842 = vunpack.c.l.b16 %v834
        %v843 = vunpack.c.l.b16 %v835
        %v844 = vunpack.c.l.b16 %v836
        %v845 = vunpack.c.l.b16 %v837
        %v846 = vpack.c.b16 %v843, %v842
        %v847 = vpack.c.b16 %v845, %v844
        %850 = vmatprep.subr.bf16.mxu0 0
        %851 = vmatpush1.bf16.msra.mxu0 %v846
        %852 = vmatprep.subr.bf16.mxu0 0
        %853 = vmatpush1.bf16.msra.mxu0 %v847
        %854 = vmatprep.subr.bf16.mxu0 0
        %855 = vmatpush1.bf16.msra.mxu0 0
        %856 = vmatprep.subr.bf16.mxu0 0
        %857 = vmatpush1.bf16.msra.mxu0 0
        %858 = vmatprep.subr.bf16.mxu0 0
        %859 = vmatpush1.bf16.msra.mxu0 0
        %860 = vmatprep.subr.bf16.mxu0 0
        %861 = vmatpush1.bf16.msra.mxu0 0
        %862 = vmatprep.subr.bf16.mxu0 0
        %863 = vmatpush1.bf16.msra.mxu0 0
        %864 = vmatprep.subr.bf16.mxu0 0
        %865 = vmatpush1.bf16.msra.mxu0 0
        %866 = vmatprep.subr.bf16.mxu0 0
        %867 = vmatpush1.bf16.msra.mxu0 0
        %868 = vmatprep.subr.bf16.mxu0 0
        %869 = vmatpush1.bf16.msra.mxu0 0
        %870 = vmatprep.subr.bf16.mxu0 0
        %871 = vmatpush1.bf16.msra.mxu0 0
        %872 = vmatprep.subr.bf16.mxu0 0
        %873 = vmatpush1.bf16.msra.mxu0 0
        %874 = vmatprep.subr.bf16.mxu0 0
        %875 = vmatpush1.bf16.msra.mxu0 0
        %876 = vmatprep.subr.bf16.mxu0 0
        %877 = vmatpush1.bf16.msra.mxu0 0
        %878 = vmatprep.subr.bf16.mxu0 0
        %879 = vmatpush1.bf16.msra.mxu0 0
        %880 = vmatprep.subr.bf16.mxu0 0
        %881 = vmatpush1.bf16.msra.mxu0 0
        %882 = vmatprep.mubr.bf16.mxu0 0
        %883 = vmatmul.mubr.bf16.gmra.mrb[0].mxu0 %v372
        %v884 = vpop.f32.mrb[0].mxu0
        %v885 = vadd.f32 0.0, %v884
        %v886 = vpop.f32.mrb[0].mxu0
        %v887 = vpop.f32.mrb[0].mxu0
        %v888 = vadd.f32 0.0, %v887
        %v889 = vpop.f32.mrb[0].mxu0
        %890 = vmatprep.mubr.bf16.mxu0 0
        %891 = vmatmul.mubr.bf16.gmra.mrb[0].mxu0 %v375
        %v892 = vpop.f32.mrb[0].mxu0
        %v893 = vadd.f32 0.0, %v892
        %v894 = vpop.f32.mrb[0].mxu0
        %v895 = vpop.f32.mrb[0].mxu0
        %v896 = vadd.f32 0.0, %v895
        %v897 = vpop.f32.mrb[0].mxu0
        %898 = vmatprep.mubr.bf16.mxu0 0
        %899 = vmatmul.mubr.bf16.gmra.mrb[0].mxu0 %v378
        %v900 = vpop.f32.mrb[0].mxu0
        %v901 = vadd.f32 0.0, %v900
        %v902 = vpop.f32.mrb[0].mxu0
        %v903 = vpop.f32.mrb[0].mxu0
        %v904 = vadd.f32 0.0, %v903
        %v905 = vpop.f32.mrb[0].mxu0
        %906 = vmatprep.mubr.bf16.mxu0 0
        %907 = vmatmul.mubr.bf16.gmra.mrb[0].mxu0 %v381
        %v908 = vpop.f32.mrb[0].mxu0
        %v909 = vadd.f32 0.0, %v908
        %v910 = vpop.f32.mrb[0].mxu0
        %v911 = vpop.f32.mrb[0].mxu0
        %v912 = vadd.f32 0.0, %v911
        %v913 = vpop.f32.mrb[0].mxu0
        %914 = vdwg.mxu0
        %v915 = vpack.c.bf16 %v888, %v885
        %v916 = vpack.c.bf16 %v896, %v893
        %v917 = vpack.c.bf16 %v904, %v901
        %v918 = vpack.c.bf16 %v912, %v909
        %s919 = scalar_lea.vmem [#allocation4], 32
        %920 = vst.msk [vmem:[%s919] sm:$0xff] %vm460, %v915
        %921 = vst.msk [vmem:[%s919 + $0x8] sm:$0xff] %vm460, %v916
        %922 = vst.msk [vmem:[%s919 + $0x10] sm:$0xff] %vm460, %v917
        %923 = vst.msk [vmem:[%s919 + $0x18] sm:$0xff] %vm460, %v918
        %s924 = scalar_lea.vmem [#allocation8], 32
        %v925 = vld [vmem:[%s924] sm:$0xf]
        %v926 = vld [vmem:[%s924 + $0x4] sm:$0xf]
        %v927 = vld [vmem:[%s924 + $0x8] sm:$0xf]
        %v928 = vld [vmem:[%s924 + $0xc] sm:$0xf]
        %v933 = vunpack.c.l.b16 %v925
        %v934 = vunpack.c.l.b16 %v926
        %v935 = vunpack.c.l.b16 %v927
        %v936 = vunpack.c.l.b16 %v928
        %v937 = vpack.c.b16 %v934, %v933
        %v938 = vpack.c.b16 %v936, %v935
        %941 = vmatprep.subr.bf16.mxu0 0
        %942 = vmatpush1.bf16.msra.mxu0 %v937
        %943 = vmatprep.subr.bf16.mxu0 0
        %944 = vmatpush1.bf16.msra.mxu0 %v938
        %945 = vmatprep.subr.bf16.mxu0 0
        %946 = vmatpush1.bf16.msra.mxu0 0
        %947 = vmatprep.subr.bf16.mxu0 0
        %948 = vmatpush1.bf16.msra.mxu0 0
        %949 = vmatprep.subr.bf16.mxu0 0
        %950 = vmatpush1.bf16.msra.mxu0 0
        %951 = vmatprep.subr.bf16.mxu0 0
        %952 = vmatpush1.bf16.msra.mxu0 0
        %953 = vmatprep.subr.bf16.mxu0 0
        %954 = vmatpush1.bf16.msra.mxu0 0
        %955 = vmatprep.subr.bf16.mxu0 0
        %956 = vmatpush1.bf16.msra.mxu0 0
        %957 = vmatprep.subr.bf16.mxu0 0
        %958 = vmatpush1.bf16.msra.mxu0 0
        %959 = vmatprep.subr.bf16.mxu0 0
        %960 = vmatpush1.bf16.msra.mxu0 0
        %961 = vmatprep.subr.bf16.mxu0 0
        %962 = vmatpush1.bf16.msra.mxu0 0
        %963 = vmatprep.subr.bf16.mxu0 0
        %964 = vmatpush1.bf16.msra.mxu0 0
        %965 = vmatprep.subr.bf16.mxu0 0
        %966 = vmatpush1.bf16.msra.mxu0 0
        %967 = vmatprep.subr.bf16.mxu0 0
        %968 = vmatpush1.bf16.msra.mxu0 0
        %969 = vmatprep.subr.bf16.mxu0 0
        %970 = vmatpush1.bf16.msra.mxu0 0
        %971 = vmatprep.subr.bf16.mxu0 0
        %972 = vmatpush1.bf16.msra.mxu0 0
        %973 = vmatprep.mubr.bf16.mxu0 0
        %974 = vmatmul.mubr.bf16.gmra.mrb[0].mxu0 %v372
        %v975 = vpop.f32.mrb[0].mxu0
        %v976 = vadd.f32 0.0, %v975
        %v977 = vpop.f32.mrb[0].mxu0
        %v978 = vpop.f32.mrb[0].mxu0
        %v979 = vadd.f32 0.0, %v978
        %v980 = vpop.f32.mrb[0].mxu0
        %981 = vmatprep.mubr.bf16.mxu0 0
        %982 = vmatmul.mubr.bf16.gmra.mrb[0].mxu0 %v375
        %v983 = vpop.f32.mrb[0].mxu0
        %v984 = vadd.f32 0.0, %v983
        %v985 = vpop.f32.mrb[0].mxu0
        %v986 = vpop.f32.mrb[0].mxu0
        %v987 = vadd.f32 0.0, %v986
        %v988 = vpop.f32.mrb[0].mxu0
        %989 = vmatprep.mubr.bf16.mxu0 0
        %990 = vmatmul.mubr.bf16.gmra.mrb[0].mxu0 %v378
        %v991 = vpop.f32.mrb[0].mxu0
        %v992 = vadd.f32 0.0, %v991
        %v993 = vpop.f32.mrb[0].mxu0
        %v994 = vpop.f32.mrb[0].mxu0
        %v995 = vadd.f32 0.0, %v994
        %v996 = vpop.f32.mrb[0].mxu0
        %997 = vmatprep.mubr.bf16.mxu0 0
        %998 = vmatmul.mubr.bf16.gmra.mrb[0].mxu0 %v381
        %v999 = vpop.f32.mrb[0].mxu0
        %v1000 = vadd.f32 0.0, %v999
        %v1001 = vpop.f32.mrb[0].mxu0
        %v1002 = vpop.f32.mrb[0].mxu0
        %v1003 = vadd.f32 0.0, %v1002
        %v1004 = vpop.f32.mrb[0].mxu0
        %1005 = vdwg.mxu0
        %v1006 = vmul.f32 %v976, 0.5
        %v1007 = vmul.f32 %v979, 0.5
        %v1008 = vmul.f32 %v984, 0.5
        %v1009 = vmul.f32 %v987, 0.5
        %v1010 = vmul.f32 %v992, 0.5
        %v1011 = vmul.f32 %v995, 0.5
        %v1012 = vmul.f32 %v1000, 0.5
        %v1013 = vmul.f32 %v1003, 0.5
        %v1014 = vpack.c.bf16 %v1007, %v1006
        %v1015 = vpack.c.bf16 %v1009, %v1008
        %v1016 = vpack.c.bf16 %v1011, %v1010
        %v1017 = vpack.c.bf16 %v1013, %v1012
        %s1018 = scalar_lea.vmem [#allocation2], 64
        %1019 = vst.msk [vmem:[%s1018] sm:$0xff] %vm460, %v1014
        %1020 = vst.msk [vmem:[%s1018 + $0x8] sm:$0xff] %vm460, %v1015
        %1021 = vst.msk [vmem:[%s1018 + $0x10] sm:$0xff] %vm460, %v1016
        %1022 = vst.msk [vmem:[%s1018 + $0x18] sm:$0xff] %vm460, %v1017
        %s1023 = scalar_lea.vmem [#allocation10], 32
        %v1024 = vld [vmem:[%s1023] sm:$0xf]
        %v1025 = vld [vmem:[%s1023 + $0x4] sm:$0xf]
        %v1026 = vld [vmem:[%s1023 + $0x8] sm:$0xf]
        %v1027 = vld [vmem:[%s1023 + $0xc] sm:$0xf]
        %v1032 = vunpack.c.l.b16 %v1024
        %v1033 = vunpack.c.l.b16 %v1025
        %v1034 = vunpack.c.l.b16 %v1026
        %v1035 = vunpack.c.l.b16 %v1027
        %v1036 = vpack.c.b16 %v1033, %v1032
        %v1037 = vpack.c.b16 %v1035, %v1034
        %1040 = vmatprep.subr.bf16.mxu0 0
        %1041 = vmatpush1.bf16.msra.mxu0 %v1036
        %1042 = vmatprep.subr.bf16.mxu0 0
        %1043 = vmatpush1.bf16.msra.mxu0 %v1037
        %1044 = vmatprep.subr.bf16.mxu0 0
        %1045 = vmatpush1.bf16.msra.mxu0 0
        %1046 = vmatprep.subr.bf16.mxu0 0
        %1047 = vmatpush1.bf16.msra.mxu0 0
        %1048 = vmatprep.subr.bf16.mxu0 0
        %1049 = vmatpush1.bf16.msra.mxu0 0
        %1050 = vmatprep.subr.bf16.mxu0 0
        %1051 = vmatpush1.bf16.msra.mxu0 0
        %1052 = vmatprep.subr.bf16.mxu0 0
        %1053 = vmatpush1.bf16.msra.mxu0 0
        %1054 = vmatprep.subr.bf16.mxu0 0
        %1055 = vmatpush1.bf16.msra.mxu0 0
        %1056 = vmatprep.subr.bf16.mxu0 0
        %1057 = vmatpush1.bf16.msra.mxu0 0
        %1058 = vmatprep.subr.bf16.mxu0 0
        %1059 = vmatpush1.bf16.msra.mxu0 0
        %1060 = vmatprep.subr.bf16.mxu0 0
        %1061 = vmatpush1.bf16.msra.mxu0 0
        %1062 = vmatprep.subr.bf16.mxu0 0
        %1063 = vmatpush1.bf16.msra.mxu0 0
        %1064 = vmatprep.subr.bf16.mxu0 0
        %1065 = vmatpush1.bf16.msra.mxu0 0
        %1066 = vmatprep.subr.bf16.mxu0 0
        %1067 = vmatpush1.bf16.msra.mxu0 0
        %1068 = vmatprep.subr.bf16.mxu0 0
        %1069 = vmatpush1.bf16.msra.mxu0 0
        %1070 = vmatprep.subr.bf16.mxu0 0
        %1071 = vmatpush1.bf16.msra.mxu0 0
        %1072 = vmatprep.mubr.bf16.mxu0 0
        %1073 = vmatmul.mubr.bf16.gmra.mrb[0].mxu0 %v372
        %v1074 = vpop.f32.mrb[0].mxu0
        %v1075 = vadd.f32 0.0, %v1074
        %v1076 = vpop.f32.mrb[0].mxu0
        %v1077 = vpop.f32.mrb[0].mxu0
        %v1078 = vadd.f32 0.0, %v1077
        %v1079 = vpop.f32.mrb[0].mxu0
        %1080 = vmatprep.mubr.bf16.mxu0 0
        %1081 = vmatmul.mubr.bf16.gmra.mrb[0].mxu0 %v375
        %v1082 = vpop.f32.mrb[0].mxu0
        %v1083 = vadd.f32 0.0, %v1082
        %v1084 = vpop.f32.mrb[0].mxu0
        %v1085 = vpop.f32.mrb[0].mxu0
        %v1086 = vadd.f32 0.0, %v1085
        %v1087 = vpop.f32.mrb[0].mxu0
        %1088 = vmatprep.mubr.bf16.mxu0 0
        %1089 = vmatmul.mubr.bf16.gmra.mrb[0].mxu0 %v378
        %v1090 = vpop.f32.mrb[0].mxu0
        %v1091 = vadd.f32 0.0, %v1090
        %v1092 = vpop.f32.mrb[0].mxu0
        %v1093 = vpop.f32.mrb[0].mxu0
        %v1094 = vadd.f32 0.0, %v1093
        %v1095 = vpop.f32.mrb[0].mxu0
        %1096 = vmatprep.mubr.bf16.mxu0 0
        %1097 = vmatmul.mubr.bf16.gmra.mrb[0].mxu0 %v381
        %v1098 = vpop.f32.mrb[0].mxu0
        %v1099 = vadd.f32 0.0, %v1098
        %v1100 = vpop.f32.mrb[0].mxu0
        %v1101 = vpop.f32.mrb[0].mxu0
        %v1102 = vadd.f32 0.0, %v1101
        %v1103 = vpop.f32.mrb[0].mxu0
        %1104 = vdwg.mxu0
        %v1105 = vpack.c.bf16 %v1078, %v1075
        %v1106 = vpack.c.bf16 %v1086, %v1083
        %v1107 = vpack.c.bf16 %v1094, %v1091
        %v1108 = vpack.c.bf16 %v1102, %v1099
        %s1109 = scalar_lea.vmem [#allocation3], 64
        %1110 = vst.msk [vmem:[%s1109] sm:$0xff] %vm460, %v1105
        %1111 = vst.msk [vmem:[%s1109 + $0x8] sm:$0xff] %vm460, %v1106
        %1112 = vst.msk [vmem:[%s1109 + $0x10] sm:$0xff] %vm460, %v1107
        %1113 = vst.msk [vmem:[%s1109 + $0x18] sm:$0xff] %vm460, %v1108
        %s1114 = scalar_lea.vmem [#allocation11], 32
        %v1115 = vld [vmem:[%s1114] sm:$0xf]
        %v1116 = vld [vmem:[%s1114 + $0x4] sm:$0xf]
        %v1117 = vld [vmem:[%s1114 + $0x8] sm:$0xf]
        %v1118 = vld [vmem:[%s1114 + $0xc] sm:$0xf]
        %v1123 = vunpack.c.l.b16 %v1115
        %v1124 = vunpack.c.l.b16 %v1116
        %v1125 = vunpack.c.l.b16 %v1117
        %v1126 = vunpack.c.l.b16 %v1118
        %v1127 = vpack.c.b16 %v1124, %v1123
        %v1128 = vpack.c.b16 %v1126, %v1125
        %1131 = vmatprep.subr.bf16.mxu0 0
        %1132 = vmatpush1.bf16.msra.mxu0 %v1127
        %1133 = vmatprep.subr.bf16.mxu0 0
        %1134 = vmatpush1.bf16.msra.mxu0 %v1128
        %1135 = vmatprep.subr.bf16.mxu0 0
        %1136 = vmatpush1.bf16.msra.mxu0 0
        %1137 = vmatprep.subr.bf16.mxu0 0
        %1138 = vmatpush1.bf16.msra.mxu0 0
        %1139 = vmatprep.subr.bf16.mxu0 0
        %1140 = vmatpush1.bf16.msra.mxu0 0
        %1141 = vmatprep.subr.bf16.mxu0 0
        %1142 = vmatpush1.bf16.msra.mxu0 0
        %1143 = vmatprep.subr.bf16.mxu0 0
        %1144 = vmatpush1.bf16.msra.mxu0 0
        %1145 = vmatprep.subr.bf16.mxu0 0
        %1146 = vmatpush1.bf16.msra.mxu0 0
        %1147 = vmatprep.subr.bf16.mxu0 0
        %1148 = vmatpush1.bf16.msra.mxu0 0
        %1149 = vmatprep.subr.bf16.mxu0 0
        %1150 = vmatpush1.bf16.msra.mxu0 0
        %1151 = vmatprep.subr.bf16.mxu0 0
        %1152 = vmatpush1.bf16.msra.mxu0 0
        %1153 = vmatprep.subr.bf16.mxu0 0
        %1154 = vmatpush1.bf16.msra.mxu0 0
        %1155 = vmatprep.subr.bf16.mxu0 0
        %1156 = vmatpush1.bf16.msra.mxu0 0
        %1157 = vmatprep.subr.bf16.mxu0 0
        %1158 = vmatpush1.bf16.msra.mxu0 0
        %1159 = vmatprep.subr.bf16.mxu0 0
        %1160 = vmatpush1.bf16.msra.mxu0 0
        %1161 = vmatprep.subr.bf16.mxu0 0
        %1162 = vmatpush1.bf16.msra.mxu0 0
        %1163 = vmatprep.mubr.bf16.mxu0 0
        %1164 = vmatmul.mubr.bf16.gmra.mrb[0].mxu0 %v372
        %v1165 = vpop.f32.mrb[0].mxu0
        %v1166 = vadd.f32 0.0, %v1165
        %v1167 = vpop.f32.mrb[0].mxu0
        %v1168 = vpop.f32.mrb[0].mxu0
        %v1169 = vadd.f32 0.0, %v1168
        %v1170 = vpop.f32.mrb[0].mxu0
        %1171 = vmatprep.mubr.bf16.mxu0 0
        %1172 = vmatmul.mubr.bf16.gmra.mrb[0].mxu0 %v375
        %v1173 = vpop.f32.mrb[0].mxu0
        %v1174 = vadd.f32 0.0, %v1173
        %v1175 = vpop.f32.mrb[0].mxu0
        %v1176 = vpop.f32.mrb[0].mxu0
        %v1177 = vadd.f32 0.0, %v1176
        %v1178 = vpop.f32.mrb[0].mxu0
        %1179 = vmatprep.mubr.bf16.mxu0 0
        %1180 = vmatmul.mubr.bf16.gmra.mrb[0].mxu0 %v378
        %v1181 = vpop.f32.mrb[0].mxu0
        %v1182 = vadd.f32 0.0, %v1181
        %v1183 = vpop.f32.mrb[0].mxu0
        %v1184 = vpop.f32.mrb[0].mxu0
        %v1185 = vadd.f32 0.0, %v1184
        %v1186 = vpop.f32.mrb[0].mxu0
        %1187 = vmatprep.mubr.bf16.mxu0 0
        %1188 = vmatmul.mubr.bf16.gmra.mrb[0].mxu0 %v381
        %v1189 = vpop.f32.mrb[0].mxu0
        %v1190 = vadd.f32 0.0, %v1189
        %v1191 = vpop.f32.mrb[0].mxu0
        %v1192 = vpop.f32.mrb[0].mxu0
        %v1193 = vadd.f32 0.0, %v1192
        %v1194 = vpop.f32.mrb[0].mxu0
        %1195 = vdwg.mxu0
        %v1196 = vpack.c.bf16 %v1169, %v1166
        %v1197 = vpack.c.bf16 %v1177, %v1174
        %v1198 = vpack.c.bf16 %v1185, %v1182
        %v1199 = vpack.c.bf16 %v1193, %v1190
        %s1200 = scalar_lea.vmem [#allocation4], 64
        %1201 = vst.msk [vmem:[%s1200] sm:$0xff] %vm460, %v1196
        %1202 = vst.msk [vmem:[%s1200 + $0x8] sm:$0xff] %vm460, %v1197
        %1203 = vst.msk [vmem:[%s1200 + $0x10] sm:$0xff] %vm460, %v1198
        %1204 = vst.msk [vmem:[%s1200 + $0x18] sm:$0xff] %vm460, %v1199
        %s1205 = scalar_lea.vmem [#allocation8], 48
        %v1206 = vld [vmem:[%s1205] sm:$0xf]
        %v1207 = vld [vmem:[%s1205 + $0x4] sm:$0xf]
        %v1208 = vld [vmem:[%s1205 + $0x8] sm:$0xf]
        %v1209 = vld [vmem:[%s1205 + $0xc] sm:$0xf]
        %v1214 = vunpack.c.l.b16 %v1206
        %v1215 = vunpack.c.l.b16 %v1207
        %v1216 = vunpack.c.l.b16 %v1208
        %v1217 = vunpack.c.l.b16 %v1209
        %v1218 = vpack.c.b16 %v1215, %v1214
        %v1219 = vpack.c.b16 %v1217, %v1216
        %1222 = vmatprep.subr.bf16.mxu0 0
        %1223 = vmatpush1.bf16.msra.mxu0 %v1218
        %1224 = vmatprep.subr.bf16.mxu0 0
        %1225 = vmatpush1.bf16.msra.mxu0 %v1219
        %1226 = vmatprep.subr.bf16.mxu0 0
        %1227 = vmatpush1.bf16.msra.mxu0 0
        %1228 = vmatprep.subr.bf16.mxu0 0
        %1229 = vmatpush1.bf16.msra.mxu0 0
        %1230 = vmatprep.subr.bf16.mxu0 0
        %1231 = vmatpush1.bf16.msra.mxu0 0
        %1232 = vmatprep.subr.bf16.mxu0 0
        %1233 = vmatpush1.bf16.msra.mxu0 0
        %1234 = vmatprep.subr.bf16.mxu0 0
        %1235 = vmatpush1.bf16.msra.mxu0 0
        %1236 = vmatprep.subr.bf16.mxu0 0
        %1237 = vmatpush1.bf16.msra.mxu0 0
        %1238 = vmatprep.subr.bf16.mxu0 0
        %1239 = vmatpush1.bf16.msra.mxu0 0
        %1240 = vmatprep.subr.bf16.mxu0 0
        %1241 = vmatpush1.bf16.msra.mxu0 0
        %1242 = vmatprep.subr.bf16.mxu0 0
        %1243 = vmatpush1.bf16.msra.mxu0 0
        %1244 = vmatprep.subr.bf16.mxu0 0
        %1245 = vmatpush1.bf16.msra.mxu0 0
        %1246 = vmatprep.subr.bf16.mxu0 0
        %1247 = vmatpush1.bf16.msra.mxu0 0
        %1248 = vmatprep.subr.bf16.mxu0 0
        %1249 = vmatpush1.bf16.msra.mxu0 0
        %1250 = vmatprep.subr.bf16.mxu0 0
        %1251 = vmatpush1.bf16.msra.mxu0 0
        %1252 = vmatprep.subr.bf16.mxu0 0
        %1253 = vmatpush1.bf16.msra.mxu0 0
        %1254 = vmatprep.mubr.bf16.mxu0 0
        %1255 = vmatmul.mubr.bf16.gmra.mrb[0].mxu0 %v372
        %v1256 = vpop.f32.mrb[0].mxu0
        %v1257 = vadd.f32 0.0, %v1256
        %v1258 = vpop.f32.mrb[0].mxu0
        %v1259 = vpop.f32.mrb[0].mxu0
        %v1260 = vadd.f32 0.0, %v1259
        %v1261 = vpop.f32.mrb[0].mxu0
        %1262 = vmatprep.mubr.bf16.mxu0 0
        %1263 = vmatmul.mubr.bf16.gmra.mrb[0].mxu0 %v375
        %v1264 = vpop.f32.mrb[0].mxu0
        %v1265 = vadd.f32 0.0, %v1264
        %v1266 = vpop.f32.mrb[0].mxu0
        %v1267 = vpop.f32.mrb[0].mxu0
        %v1268 = vadd.f32 0.0, %v1267
        %v1269 = vpop.f32.mrb[0].mxu0
        %1270 = vmatprep.mubr.bf16.mxu0 0
        %1271 = vmatmul.mubr.bf16.gmra.mrb[0].mxu0 %v378
        %v1272 = vpop.f32.mrb[0].mxu0
        %v1273 = vadd.f32 0.0, %v1272
        %v1274 = vpop.f32.mrb[0].mxu0
        %v1275 = vpop.f32.mrb[0].mxu0
        %v1276 = vadd.f32 0.0, %v1275
        %v1277 = vpop.f32.mrb[0].mxu0
        %1278 = vmatprep.mubr.bf16.mxu0 0
        %1279 = vmatmul.mubr.bf16.gmra.mrb[0].mxu0 %v381
        %v1280 = vpop.f32.mrb[0].mxu0
        %v1281 = vadd.f32 0.0, %v1280
        %v1282 = vpop.f32.mrb[0].mxu0
        %v1283 = vpop.f32.mrb[0].mxu0
        %v1284 = vadd.f32 0.0, %v1283
        %v1285 = vpop.f32.mrb[0].mxu0
        %1286 = vdwg.mxu0
        %v1287 = vmul.f32 %v1257, 0.5
        %v1288 = vmul.f32 %v1260, 0.5
        %v1289 = vmul.f32 %v1265, 0.5
        %v1290 = vmul.f32 %v1268, 0.5
        %v1291 = vmul.f32 %v1273, 0.5
        %v1292 = vmul.f32 %v1276, 0.5
        %v1293 = vmul.f32 %v1281, 0.5
        %v1294 = vmul.f32 %v1284, 0.5
        %v1295 = vpack.c.bf16 %v1288, %v1287
        %v1296 = vpack.c.bf16 %v1290, %v1289
        %v1297 = vpack.c.bf16 %v1292, %v1291
        %v1298 = vpack.c.bf16 %v1294, %v1293
        %s1299 = scalar_lea.vmem [#allocation2], 96
        %1300 = vst.msk [vmem:[%s1299] sm:$0xff] %vm460, %v1295
        %1301 = vst.msk [vmem:[%s1299 + $0x8] sm:$0xff] %vm460, %v1296
        %1302 = vst.msk [vmem:[%s1299 + $0x10] sm:$0xff] %vm460, %v1297
        %1303 = vst.msk [vmem:[%s1299 + $0x18] sm:$0xff] %vm460, %v1298
        %s1304 = scalar_lea.vmem [#allocation10], 48
        %v1305 = vld [vmem:[%s1304] sm:$0xf]
        %v1306 = vld [vmem:[%s1304 + $0x4] sm:$0xf]
        %v1307 = vld [vmem:[%s1304 + $0x8] sm:$0xf]
        %v1308 = vld [vmem:[%s1304 + $0xc] sm:$0xf]
        %v1313 = vunpack.c.l.b16 %v1305
        %v1314 = vunpack.c.l.b16 %v1306
        %v1315 = vunpack.c.l.b16 %v1307
        %v1316 = vunpack.c.l.b16 %v1308
        %v1317 = vpack.c.b16 %v1314, %v1313
        %v1318 = vpack.c.b16 %v1316, %v1315
        %1321 = vmatprep.subr.bf16.mxu0 0
        %1322 = vmatpush1.bf16.msra.mxu0 %v1317
        %1323 = vmatprep.subr.bf16.mxu0 0
        %1324 = vmatpush1.bf16.msra.mxu0 %v1318
        %1325 = vmatprep.subr.bf16.mxu0 0
        %1326 = vmatpush1.bf16.msra.mxu0 0
        %1327 = vmatprep.subr.bf16.mxu0 0
        %1328 = vmatpush1.bf16.msra.mxu0 0
        %1329 = vmatprep.subr.bf16.mxu0 0
        %1330 = vmatpush1.bf16.msra.mxu0 0
        %1331 = vmatprep.subr.bf16.mxu0 0
        %1332 = vmatpush1.bf16.msra.mxu0 0
        %1333 = vmatprep.subr.bf16.mxu0 0
        %1334 = vmatpush1.bf16.msra.mxu0 0
        %1335 = vmatprep.subr.bf16.mxu0 0
        %1336 = vmatpush1.bf16.msra.mxu0 0
        %1337 = vmatprep.subr.bf16.mxu0 0
        %1338 = vmatpush1.bf16.msra.mxu0 0
        %1339 = vmatprep.subr.bf16.mxu0 0
        %1340 = vmatpush1.bf16.msra.mxu0 0
        %1341 = vmatprep.subr.bf16.mxu0 0
        %1342 = vmatpush1.bf16.msra.mxu0 0
        %1343 = vmatprep.subr.bf16.mxu0 0
        %1344 = vmatpush1.bf16.msra.mxu0 0
        %1345 = vmatprep.subr.bf16.mxu0 0
        %1346 = vmatpush1.bf16.msra.mxu0 0
        %1347 = vmatprep.subr.bf16.mxu0 0
        %1348 = vmatpush1.bf16.msra.mxu0 0
        %1349 = vmatprep.subr.bf16.mxu0 0
        %1350 = vmatpush1.bf16.msra.mxu0 0
        %1351 = vmatprep.subr.bf16.mxu0 0
        %1352 = vmatpush1.bf16.msra.mxu0 0
        %1353 = vmatprep.mubr.bf16.mxu0 0
        %1354 = vmatmul.mubr.bf16.gmra.mrb[0].mxu0 %v372
        %v1355 = vpop.f32.mrb[0].mxu0
        %v1356 = vadd.f32 0.0, %v1355
        %v1357 = vpop.f32.mrb[0].mxu0
        %v1358 = vpop.f32.mrb[0].mxu0
        %v1359 = vadd.f32 0.0, %v1358
        %v1360 = vpop.f32.mrb[0].mxu0
        %1361 = vmatprep.mubr.bf16.mxu0 0
        %1362 = vmatmul.mubr.bf16.gmra.mrb[0].mxu0 %v375
        %v1363 = vpop.f32.mrb[0].mxu0
        %v1364 = vadd.f32 0.0, %v1363
        %v1365 = vpop.f32.mrb[0].mxu0
        %v1366 = vpop.f32.mrb[0].mxu0
        %v1367 = vadd.f32 0.0, %v1366
        %v1368 = vpop.f32.mrb[0].mxu0
        %1369 = vmatprep.mubr.bf16.mxu0 0
        %1370 = vmatmul.mubr.bf16.gmra.mrb[0].mxu0 %v378
        %v1371 = vpop.f32.mrb[0].mxu0
        %v1372 = vadd.f32 0.0, %v1371
        %v1373 = vpop.f32.mrb[0].mxu0
        %v1374 = vpop.f32.mrb[0].mxu0
        %v1375 = vadd.f32 0.0, %v1374
        %v1376 = vpop.f32.mrb[0].mxu0
        %1377 = vmatprep.mubr.bf16.mxu0 0
        %1378 = vmatmul.mubr.bf16.gmra.mrb[0].mxu0 %v381
        %v1379 = vpop.f32.mrb[0].mxu0
        %v1380 = vadd.f32 0.0, %v1379
        %v1381 = vpop.f32.mrb[0].mxu0
        %v1382 = vpop.f32.mrb[0].mxu0
        %v1383 = vadd.f32 0.0, %v1382
        %v1384 = vpop.f32.mrb[0].mxu0
        %1385 = vdwg.mxu0
        %v1386 = vpack.c.bf16 %v1359, %v1356
        %v1387 = vpack.c.bf16 %v1367, %v1364
        %v1388 = vpack.c.bf16 %v1375, %v1372
        %v1389 = vpack.c.bf16 %v1383, %v1380
        %s1390 = scalar_lea.vmem [#allocation3], 96
        %1391 = vst.msk [vmem:[%s1390] sm:$0xff] %vm460, %v1386
        %1392 = vst.msk [vmem:[%s1390 + $0x8] sm:$0xff] %vm460, %v1387
        %1393 = vst.msk [vmem:[%s1390 + $0x10] sm:$0xff] %vm460, %v1388
        %1394 = vst.msk [vmem:[%s1390 + $0x18] sm:$0xff] %vm460, %v1389
        %s1395 = scalar_lea.vmem [#allocation11], 48
        %v1396 = vld [vmem:[%s1395] sm:$0xf]
        %v1397 = vld [vmem:[%s1395 + $0x4] sm:$0xf]
        %v1398 = vld [vmem:[%s1395 + $0x8] sm:$0xf]
        %v1399 = vld [vmem:[%s1395 + $0xc] sm:$0xf]
        %v1404 = vunpack.c.l.b16 %v1396
        %v1405 = vunpack.c.l.b16 %v1397
        %v1406 = vunpack.c.l.b16 %v1398
        %v1407 = vunpack.c.l.b16 %v1399
        %v1408 = vpack.c.b16 %v1405, %v1404
        %v1409 = vpack.c.b16 %v1407, %v1406
        %1412 = vmatprep.subr.bf16.mxu0 0
        %1413 = vmatpush1.bf16.msra.mxu0 %v1408
        %1414 = vmatprep.subr.bf16.mxu0 0
        %1415 = vmatpush1.bf16.msra.mxu0 %v1409
        %1416 = vmatprep.subr.bf16.mxu0 0
        %1417 = vmatpush1.bf16.msra.mxu0 0
        %1418 = vmatprep.subr.bf16.mxu0 0
        %1419 = vmatpush1.bf16.msra.mxu0 0
        %1420 = vmatprep.subr.bf16.mxu0 0
        %1421 = vmatpush1.bf16.msra.mxu0 0
        %1422 = vmatprep.subr.bf16.mxu0 0
        %1423 = vmatpush1.bf16.msra.mxu0 0
        %1424 = vmatprep.subr.bf16.mxu0 0
        %1425 = vmatpush1.bf16.msra.mxu0 0
        %1426 = vmatprep.subr.bf16.mxu0 0
        %1427 = vmatpush1.bf16.msra.mxu0 0
        %1428 = vmatprep.subr.bf16.mxu0 0
        %1429 = vmatpush1.bf16.msra.mxu0 0
        %1430 = vmatprep.subr.bf16.mxu0 0
        %1431 = vmatpush1.bf16.msra.mxu0 0
        %1432 = vmatprep.subr.bf16.mxu0 0
        %1433 = vmatpush1.bf16.msra.mxu0 0
        %1434 = vmatprep.subr.bf16.mxu0 0
        %1435 = vmatpush1.bf16.msra.mxu0 0
        %1436 = vmatprep.subr.bf16.mxu0 0
        %1437 = vmatpush1.bf16.msra.mxu0 0
        %1438 = vmatprep.subr.bf16.mxu0 0
        %1439 = vmatpush1.bf16.msra.mxu0 0
        %1440 = vmatprep.subr.bf16.mxu0 0
        %1441 = vmatpush1.bf16.msra.mxu0 0
        %1442 = vmatprep.subr.bf16.mxu0 0
        %1443 = vmatpush1.bf16.msra.mxu0 0
        %1444 = vmatprep.mubr.bf16.mxu0 0
        %1445 = vmatmul.mubr.bf16.gmra.mrb[0].mxu0 %v372
        %v1446 = vpop.f32.mrb[0].mxu0
        %v1447 = vadd.f32 0.0, %v1446
        %v1448 = vpop.f32.mrb[0].mxu0
        %v1449 = vpop.f32.mrb[0].mxu0
        %v1450 = vadd.f32 0.0, %v1449
        %v1451 = vpop.f32.mrb[0].mxu0
        %1452 = vmatprep.mubr.bf16.mxu0 0
        %1453 = vmatmul.mubr.bf16.gmra.mrb[0].mxu0 %v375
        %v1454 = vpop.f32.mrb[0].mxu0
        %v1455 = vadd.f32 0.0, %v1454
        %v1456 = vpop.f32.mrb[0].mxu0
        %v1457 = vpop.f32.mrb[0].mxu0
        %v1458 = vadd.f32 0.0, %v1457
        %v1459 = vpop.f32.mrb[0].mxu0
        %1460 = vmatprep.mubr.bf16.mxu0 0
        %1461 = vmatmul.mubr.bf16.gmra.mrb[0].mxu0 %v378
        %v1462 = vpop.f32.mrb[0].mxu0
        %v1463 = vadd.f32 0.0, %v1462
        %v1464 = vpop.f32.mrb[0].mxu0
        %v1465 = vpop.f32.mrb[0].mxu0
        %v1466 = vadd.f32 0.0, %v1465
        %v1467 = vpop.f32.mrb[0].mxu0
        %1468 = vmatprep.mubr.bf16.mxu0 0
        %1469 = vmatmul.mubr.bf16.gmra.mrb[0].mxu0 %v381
        %v1470 = vpop.f32.mrb[0].mxu0
        %v1471 = vadd.f32 0.0, %v1470
        %v1472 = vpop.f32.mrb[0].mxu0
        %v1473 = vpop.f32.mrb[0].mxu0
        %v1474 = vadd.f32 0.0, %v1473
        %v1475 = vpop.f32.mrb[0].mxu0
        %1476 = vdwg.mxu0
        %v1477 = vpack.c.bf16 %v1450, %v1447
        %v1478 = vpack.c.bf16 %v1458, %v1455
        %v1479 = vpack.c.bf16 %v1466, %v1463
        %v1480 = vpack.c.bf16 %v1474, %v1471
        %s1481 = scalar_lea.vmem [#allocation4], 96
        %1482 = vst.msk [vmem:[%s1481] sm:$0xff] %vm460, %v1477
        %1483 = vst.msk [vmem:[%s1481 + $0x8] sm:$0xff] %vm460, %v1478
        %1484 = vst.msk [vmem:[%s1481 + $0x10] sm:$0xff] %vm460, %v1479
        %1485 = vst.msk [vmem:[%s1481 + $0x18] sm:$0xff] %vm460, %v1480
        %s1486 = scalar_lea.vmem [#allocation8], 64
        %v1487 = vld [vmem:[%s1486] sm:$0xf]
        %v1488 = vld [vmem:[%s1486 + $0x4] sm:$0xf]
        %v1489 = vld [vmem:[%s1486 + $0x8] sm:$0xf]
        %v1490 = vld [vmem:[%s1486 + $0xc] sm:$0xf]
        %v1495 = vunpack.c.l.b16 %v1487
        %v1496 = vunpack.c.l.b16 %v1488
        %v1497 = vunpack.c.l.b16 %v1489
        %v1498 = vunpack.c.l.b16 %v1490
        %v1499 = vpack.c.b16 %v1496, %v1495
        %v1500 = vpack.c.b16 %v1498, %v1497
        %1503 = vmatprep.subr.bf16.mxu0 0
        %1504 = vmatpush1.bf16.msra.mxu0 %v1499
        %1505 = vmatprep.subr.bf16.mxu0 0
        %1506 = vmatpush1.bf16.msra.mxu0 %v1500
        %1507 = vmatprep.subr.bf16.mxu0 0
        %1508 = vmatpush1.bf16.msra.mxu0 0
        %1509 = vmatprep.subr.bf16.mxu0 0
        %1510 = vmatpush1.bf16.msra.mxu0 0
        %1511 = vmatprep.subr.bf16.mxu0 0
        %1512 = vmatpush1.bf16.msra.mxu0 0
        %1513 = vmatprep.subr.bf16.mxu0 0
        %1514 = vmatpush1.bf16.msra.mxu0 0
        %1515 = vmatprep.subr.bf16.mxu0 0
        %1516 = vmatpush1.bf16.msra.mxu0 0
        %1517 = vmatprep.subr.bf16.mxu0 0
        %1518 = vmatpush1.bf16.msra.mxu0 0
        %1519 = vmatprep.subr.bf16.mxu0 0
        %1520 = vmatpush1.bf16.msra.mxu0 0
        %1521 = vmatprep.subr.bf16.mxu0 0
        %1522 = vmatpush1.bf16.msra.mxu0 0
        %1523 = vmatprep.subr.bf16.mxu0 0
        %1524 = vmatpush1.bf16.msra.mxu0 0
        %1525 = vmatprep.subr.bf16.mxu0 0
        %1526 = vmatpush1.bf16.msra.mxu0 0
        %1527 = vmatprep.subr.bf16.mxu0 0
        %1528 = vmatpush1.bf16.msra.mxu0 0
        %1529 = vmatprep.subr.bf16.mxu0 0
        %1530 = vmatpush1.bf16.msra.mxu0 0
        %1531 = vmatprep.subr.bf16.mxu0 0
        %1532 = vmatpush1.bf16.msra.mxu0 0
        %1533 = vmatprep.subr.bf16.mxu0 0
        %1534 = vmatpush1.bf16.msra.mxu0 0
        %1535 = vmatprep.mubr.bf16.mxu0 0
        %1536 = vmatmul.mubr.bf16.gmra.mrb[0].mxu0 %v372
        %v1537 = vpop.f32.mrb[0].mxu0
        %v1538 = vadd.f32 0.0, %v1537
        %v1539 = vpop.f32.mrb[0].mxu0
        %v1540 = vpop.f32.mrb[0].mxu0
        %v1541 = vadd.f32 0.0, %v1540
        %v1542 = vpop.f32.mrb[0].mxu0
        %1543 = vmatprep.mubr.bf16.mxu0 0
        %1544 = vmatmul.mubr.bf16.gmra.mrb[0].mxu0 %v375
        %v1545 = vpop.f32.mrb[0].mxu0
        %v1546 = vadd.f32 0.0, %v1545
        %v1547 = vpop.f32.mrb[0].mxu0
        %v1548 = vpop.f32.mrb[0].mxu0
        %v1549 = vadd.f32 0.0, %v1548
        %v1550 = vpop.f32.mrb[0].mxu0
        %1551 = vmatprep.mubr.bf16.mxu0 0
        %1552 = vmatmul.mubr.bf16.gmra.mrb[0].mxu0 %v378
        %v1553 = vpop.f32.mrb[0].mxu0
        %v1554 = vadd.f32 0.0, %v1553
        %v1555 = vpop.f32.mrb[0].mxu0
        %v1556 = vpop.f32.mrb[0].mxu0
        %v1557 = vadd.f32 0.0, %v1556
        %v1558 = vpop.f32.mrb[0].mxu0
        %1559 = vmatprep.mubr.bf16.mxu0 0
        %1560 = vmatmul.mubr.bf16.gmra.mrb[0].mxu0 %v381
        %v1561 = vpop.f32.mrb[0].mxu0
        %v1562 = vadd.f32 0.0, %v1561
        %v1563 = vpop.f32.mrb[0].mxu0
        %v1564 = vpop.f32.mrb[0].mxu0
        %v1565 = vadd.f32 0.0, %v1564
        %v1566 = vpop.f32.mrb[0].mxu0
        %1567 = vdwg.mxu0
        %v1568 = vmul.f32 %v1538, 0.5
        %v1569 = vmul.f32 %v1541, 0.5
        %v1570 = vmul.f32 %v1546, 0.5
        %v1571 = vmul.f32 %v1549, 0.5
        %v1572 = vmul.f32 %v1554, 0.5
        %v1573 = vmul.f32 %v1557, 0.5
        %v1574 = vmul.f32 %v1562, 0.5
        %v1575 = vmul.f32 %v1565, 0.5
        %v1576 = vpack.c.bf16 %v1569, %v1568
        %v1577 = vpack.c.bf16 %v1571, %v1570
        %v1578 = vpack.c.bf16 %v1573, %v1572
        %v1579 = vpack.c.bf16 %v1575, %v1574
        %s1580 = scalar_lea.vmem [#allocation2], 128
        %1581 = vst.msk [vmem:[%s1580] sm:$0xff] %vm460, %v1576
        %1582 = vst.msk [vmem:[%s1580 + $0x8] sm:$0xff] %vm460, %v1577
        %1583 = vst.msk [vmem:[%s1580 + $0x10] sm:$0xff] %vm460, %v1578
        %1584 = vst.msk [vmem:[%s1580 + $0x18] sm:$0xff] %vm460, %v1579
        %s1585 = scalar_lea.vmem [#allocation10], 64
        %v1586 = vld [vmem:[%s1585] sm:$0xf]
        %v1587 = vld [vmem:[%s1585 + $0x4] sm:$0xf]
        %v1588 = vld [vmem:[%s1585 + $0x8] sm:$0xf]
        %v1589 = vld [vmem:[%s1585 + $0xc] sm:$0xf]
        %v1594 = vunpack.c.l.b16 %v1586
        %v1595 = vunpack.c.l.b16 %v1587
        %v1596 = vunpack.c.l.b16 %v1588
        %v1597 = vunpack.c.l.b16 %v1589
        %v1598 = vpack.c.b16 %v1595, %v1594
        %v1599 = vpack.c.b16 %v1597, %v1596
        %1602 = vmatprep.subr.bf16.mxu0 0
        %1603 = vmatpush1.bf16.msra.mxu0 %v1598
        %1604 = vmatprep.subr.bf16.mxu0 0
        %1605 = vmatpush1.bf16.msra.mxu0 %v1599
        %1606 = vmatprep.subr.bf16.mxu0 0
        %1607 = vmatpush1.bf16.msra.mxu0 0
        %1608 = vmatprep.subr.bf16.mxu0 0
        %1609 = vmatpush1.bf16.msra.mxu0 0
        %1610 = vmatprep.subr.bf16.mxu0 0
        %1611 = vmatpush1.bf16.msra.mxu0 0
        %1612 = vmatprep.subr.bf16.mxu0 0
        %1613 = vmatpush1.bf16.msra.mxu0 0
        %1614 = vmatprep.subr.bf16.mxu0 0
        %1615 = vmatpush1.bf16.msra.mxu0 0
        %1616 = vmatprep.subr.bf16.mxu0 0
        %1617 = vmatpush1.bf16.msra.mxu0 0
        %1618 = vmatprep.subr.bf16.mxu0 0
        %1619 = vmatpush1.bf16.msra.mxu0 0
        %1620 = vmatprep.subr.bf16.mxu0 0
        %1621 = vmatpush1.bf16.msra.mxu0 0
        %1622 = vmatprep.subr.bf16.mxu0 0
        %1623 = vmatpush1.bf16.msra.mxu0 0
        %1624 = vmatprep.subr.bf16.mxu0 0
        %1625 = vmatpush1.bf16.msra.mxu0 0
        %1626 = vmatprep.subr.bf16.mxu0 0
        %1627 = vmatpush1.bf16.msra.mxu0 0
        %1628 = vmatprep.subr.bf16.mxu0 0
        %1629 = vmatpush1.bf16.msra.mxu0 0
        %1630 = vmatprep.subr.bf16.mxu0 0
        %1631 = vmatpush1.bf16.msra.mxu0 0
        %1632 = vmatprep.subr.bf16.mxu0 0
        %1633 = vmatpush1.bf16.msra.mxu0 0
        %1634 = vmatprep.mubr.bf16.mxu0 0
        %1635 = vmatmul.mubr.bf16.gmra.mrb[0].mxu0 %v372
        %v1636 = vpop.f32.mrb[0].mxu0
        %v1637 = vadd.f32 0.0, %v1636
        %v1638 = vpop.f32.mrb[0].mxu0
        %v1639 = vpop.f32.mrb[0].mxu0
        %v1640 = vadd.f32 0.0, %v1639
        %v1641 = vpop.f32.mrb[0].mxu0
        %1642 = vmatprep.mubr.bf16.mxu0 0
        %1643 = vmatmul.mubr.bf16.gmra.mrb[0].mxu0 %v375
        %v1644 = vpop.f32.mrb[0].mxu0
        %v1645 = vadd.f32 0.0, %v1644
        %v1646 = vpop.f32.mrb[0].mxu0
        %v1647 = vpop.f32.mrb[0].mxu0
        %v1648 = vadd.f32 0.0, %v1647
        %v1649 = vpop.f32.mrb[0].mxu0
        %1650 = vmatprep.mubr.bf16.mxu0 0
        %1651 = vmatmul.mubr.bf16.gmra.mrb[0].mxu0 %v378
        %v1652 = vpop.f32.mrb[0].mxu0
        %v1653 = vadd.f32 0.0, %v1652
        %v1654 = vpop.f32.mrb[0].mxu0
        %v1655 = vpop.f32.mrb[0].mxu0
        %v1656 = vadd.f32 0.0, %v1655
        %v1657 = vpop.f32.mrb[0].mxu0
        %1658 = vmatprep.mubr.bf16.mxu0 0
        %1659 = vmatmul.mubr.bf16.gmra.mrb[0].mxu0 %v381
        %v1660 = vpop.f32.mrb[0].mxu0
        %v1661 = vadd.f32 0.0, %v1660
        %v1662 = vpop.f32.mrb[0].mxu0
        %v1663 = vpop.f32.mrb[0].mxu0
        %v1664 = vadd.f32 0.0, %v1663
        %v1665 = vpop.f32.mrb[0].mxu0
        %1666 = vdwg.mxu0
        %v1667 = vpack.c.bf16 %v1640, %v1637
        %v1668 = vpack.c.bf16 %v1648, %v1645
        %v1669 = vpack.c.bf16 %v1656, %v1653
        %v1670 = vpack.c.bf16 %v1664, %v1661
        %s1671 = scalar_lea.vmem [#allocation3], 128
        %1672 = vst.msk [vmem:[%s1671] sm:$0xff] %vm460, %v1667
        %1673 = vst.msk [vmem:[%s1671 + $0x8] sm:$0xff] %vm460, %v1668
        %1674 = vst.msk [vmem:[%s1671 + $0x10] sm:$0xff] %vm460, %v1669
        %1675 = vst.msk [vmem:[%s1671 + $0x18] sm:$0xff] %vm460, %v1670
        %s1676 = scalar_lea.vmem [#allocation11], 64
        %v1677 = vld [vmem:[%s1676] sm:$0xf]
        %v1678 = vld [vmem:[%s1676 + $0x4] sm:$0xf]
        %v1679 = vld [vmem:[%s1676 + $0x8] sm:$0xf]
        %v1680 = vld [vmem:[%s1676 + $0xc] sm:$0xf]
        %v1685 = vunpack.c.l.b16 %v1677
        %v1686 = vunpack.c.l.b16 %v1678
        %v1687 = vunpack.c.l.b16 %v1679
        %v1688 = vunpack.c.l.b16 %v1680
        %v1689 = vpack.c.b16 %v1686, %v1685
        %v1690 = vpack.c.b16 %v1688, %v1687
        %1693 = vmatprep.subr.bf16.mxu0 0
        %1694 = vmatpush1.bf16.msra.mxu0 %v1689
        %1695 = vmatprep.subr.bf16.mxu0 0
        %1696 = vmatpush1.bf16.msra.mxu0 %v1690
        %1697 = vmatprep.subr.bf16.mxu0 0
        %1698 = vmatpush1.bf16.msra.mxu0 0
        %1699 = vmatprep.subr.bf16.mxu0 0
        %1700 = vmatpush1.bf16.msra.mxu0 0
        %1701 = vmatprep.subr.bf16.mxu0 0
        %1702 = vmatpush1.bf16.msra.mxu0 0
        %1703 = vmatprep.subr.bf16.mxu0 0
        %1704 = vmatpush1.bf16.msra.mxu0 0
        %1705 = vmatprep.subr.bf16.mxu0 0
        %1706 = vmatpush1.bf16.msra.mxu0 0
        %1707 = vmatprep.subr.bf16.mxu0 0
        %1708 = vmatpush1.bf16.msra.mxu0 0
        %1709 = vmatprep.subr.bf16.mxu0 0
        %1710 = vmatpush1.bf16.msra.mxu0 0
        %1711 = vmatprep.subr.bf16.mxu0 0
        %1712 = vmatpush1.bf16.msra.mxu0 0
        %1713 = vmatprep.subr.bf16.mxu0 0
        %1714 = vmatpush1.bf16.msra.mxu0 0
        %1715 = vmatprep.subr.bf16.mxu0 0
        %1716 = vmatpush1.bf16.msra.mxu0 0
        %1717 = vmatprep.subr.bf16.mxu0 0
        %1718 = vmatpush1.bf16.msra.mxu0 0
        %1719 = vmatprep.subr.bf16.mxu0 0
        %1720 = vmatpush1.bf16.msra.mxu0 0
        %1721 = vmatprep.subr.bf16.mxu0 0
        %1722 = vmatpush1.bf16.msra.mxu0 0
        %1723 = vmatprep.subr.bf16.mxu0 0
        %1724 = vmatpush1.bf16.msra.mxu0 0
        %1725 = vmatprep.mubr.bf16.mxu0 0
        %1726 = vmatmul.mubr.bf16.gmra.mrb[0].mxu0 %v372
        %v1727 = vpop.f32.mrb[0].mxu0
        %v1728 = vadd.f32 0.0, %v1727
        %v1729 = vpop.f32.mrb[0].mxu0
        %v1730 = vpop.f32.mrb[0].mxu0
        %v1731 = vadd.f32 0.0, %v1730
        %v1732 = vpop.f32.mrb[0].mxu0
        %1733 = vmatprep.mubr.bf16.mxu0 0
        %1734 = vmatmul.mubr.bf16.gmra.mrb[0].mxu0 %v375
        %v1735 = vpop.f32.mrb[0].mxu0
        %v1736 = vadd.f32 0.0, %v1735
        %v1737 = vpop.f32.mrb[0].mxu0
        %v1738 = vpop.f32.mrb[0].mxu0
        %v1739 = vadd.f32 0.0, %v1738
        %v1740 = vpop.f32.mrb[0].mxu0
        %1741 = vmatprep.mubr.bf16.mxu0 0
        %1742 = vmatmul.mubr.bf16.gmra.mrb[0].mxu0 %v378
        %v1743 = vpop.f32.mrb[0].mxu0
        %v1744 = vadd.f32 0.0, %v1743
        %v1745 = vpop.f32.mrb[0].mxu0
        %v1746 = vpop.f32.mrb[0].mxu0
        %v1747 = vadd.f32 0.0, %v1746
        %v1748 = vpop.f32.mrb[0].mxu0
        %1749 = vmatprep.mubr.bf16.mxu0 0
        %1750 = vmatmul.mubr.bf16.gmra.mrb[0].mxu0 %v381
        %v1751 = vpop.f32.mrb[0].mxu0
        %v1752 = vadd.f32 0.0, %v1751
        %v1753 = vpop.f32.mrb[0].mxu0
        %v1754 = vpop.f32.mrb[0].mxu0
        %v1755 = vadd.f32 0.0, %v1754
        %v1756 = vpop.f32.mrb[0].mxu0
        %1757 = vdwg.mxu0
        %v1758 = vpack.c.bf16 %v1731, %v1728
        %v1759 = vpack.c.bf16 %v1739, %v1736
        %v1760 = vpack.c.bf16 %v1747, %v1744
        %v1761 = vpack.c.bf16 %v1755, %v1752
        %s1762 = scalar_lea.vmem [#allocation4], 128
        %1763 = vst.msk [vmem:[%s1762] sm:$0xff] %vm460, %v1758
        %1764 = vst.msk [vmem:[%s1762 + $0x8] sm:$0xff] %vm460, %v1759
        %1765 = vst.msk [vmem:[%s1762 + $0x10] sm:$0xff] %vm460, %v1760
        %1766 = vst.msk [vmem:[%s1762 + $0x18] sm:$0xff] %vm460, %v1761
        %s1767 = scalar_lea.vmem [#allocation8], 80
        %v1768 = vld [vmem:[%s1767] sm:$0xf]
        %v1769 = vld [vmem:[%s1767 + $0x4] sm:$0xf]
        %v1770 = vld [vmem:[%s1767 + $0x8] sm:$0xf]
        %v1771 = vld [vmem:[%s1767 + $0xc] sm:$0xf]
        %v1776 = vunpack.c.l.b16 %v1768
        %v1777 = vunpack.c.l.b16 %v1769
        %v1778 = vunpack.c.l.b16 %v1770
        %v1779 = vunpack.c.l.b16 %v1771
        %v1780 = vpack.c.b16 %v1777, %v1776
        %v1781 = vpack.c.b16 %v1779, %v1778
        %1784 = vmatprep.subr.bf16.mxu0 0
        %1785 = vmatpush1.bf16.msra.mxu0 %v1780
        %1786 = vmatprep.subr.bf16.mxu0 0
        %1787 = vmatpush1.bf16.msra.mxu0 %v1781
        %1788 = vmatprep.subr.bf16.mxu0 0
        %1789 = vmatpush1.bf16.msra.mxu0 0
        %1790 = vmatprep.subr.bf16.mxu0 0
        %1791 = vmatpush1.bf16.msra.mxu0 0
        %1792 = vmatprep.subr.bf16.mxu0 0
        %1793 = vmatpush1.bf16.msra.mxu0 0
        %1794 = vmatprep.subr.bf16.mxu0 0
        %1795 = vmatpush1.bf16.msra.mxu0 0
        %1796 = vmatprep.subr.bf16.mxu0 0
        %1797 = vmatpush1.bf16.msra.mxu0 0
        %1798 = vmatprep.subr.bf16.mxu0 0
        %1799 = vmatpush1.bf16.msra.mxu0 0
        %1800 = vmatprep.subr.bf16.mxu0 0
        %1801 = vmatpush1.bf16.msra.mxu0 0
        %1802 = vmatprep.subr.bf16.mxu0 0
        %1803 = vmatpush1.bf16.msra.mxu0 0
        %1804 = vmatprep.subr.bf16.mxu0 0
        %1805 = vmatpush1.bf16.msra.mxu0 0
        %1806 = vmatprep.subr.bf16.mxu0 0
        %1807 = vmatpush1.bf16.msra.mxu0 0
        %1808 = vmatprep.subr.bf16.mxu0 0
        %1809 = vmatpush1.bf16.msra.mxu0 0
        %1810 = vmatprep.subr.bf16.mxu0 0
        %1811 = vmatpush1.bf16.msra.mxu0 0
        %1812 = vmatprep.subr.bf16.mxu0 0
        %1813 = vmatpush1.bf16.msra.mxu0 0
        %1814 = vmatprep.subr.bf16.mxu0 0
        %1815 = vmatpush1.bf16.msra.mxu0 0
        %1816 = vmatprep.mubr.bf16.mxu0 0
        %1817 = vmatmul.mubr.bf16.gmra.mrb[0].mxu0 %v372
        %v1818 = vpop.f32.mrb[0].mxu0
        %v1819 = vadd.f32 0.0, %v1818
        %v1820 = vpop.f32.mrb[0].mxu0
        %v1821 = vpop.f32.mrb[0].mxu0
        %v1822 = vadd.f32 0.0, %v1821
        %v1823 = vpop.f32.mrb[0].mxu0
        %1824 = vmatprep.mubr.bf16.mxu0 0
        %1825 = vmatmul.mubr.bf16.gmra.mrb[0].mxu0 %v375
        %v1826 = vpop.f32.mrb[0].mxu0
        %v1827 = vadd.f32 0.0, %v1826
        %v1828 = vpop.f32.mrb[0].mxu0
        %v1829 = vpop.f32.mrb[0].mxu0
        %v1830 = vadd.f32 0.0, %v1829
        %v1831 = vpop.f32.mrb[0].mxu0
        %1832 = vmatprep.mubr.bf16.mxu0 0
        %1833 = vmatmul.mubr.bf16.gmra.mrb[0].mxu0 %v378
        %v1834 = vpop.f32.mrb[0].mxu0
        %v1835 = vadd.f32 0.0, %v1834
        %v1836 = vpop.f32.mrb[0].mxu0
        %v1837 = vpop.f32.mrb[0].mxu0
        %v1838 = vadd.f32 0.0, %v1837
        %v1839 = vpop.f32.mrb[0].mxu0
        %1840 = vmatprep.mubr.bf16.mxu0 0
        %1841 = vmatmul.mubr.bf16.gmra.mrb[0].mxu0 %v381
        %v1842 = vpop.f32.mrb[0].mxu0
        %v1843 = vadd.f32 0.0, %v1842
        %v1844 = vpop.f32.mrb[0].mxu0
        %v1845 = vpop.f32.mrb[0].mxu0
        %v1846 = vadd.f32 0.0, %v1845
        %v1847 = vpop.f32.mrb[0].mxu0
        %1848 = vdwg.mxu0
        %v1849 = vmul.f32 %v1819, 0.5
        %v1850 = vmul.f32 %v1822, 0.5
        %v1851 = vmul.f32 %v1827, 0.5
        %v1852 = vmul.f32 %v1830, 0.5
        %v1853 = vmul.f32 %v1835, 0.5
        %v1854 = vmul.f32 %v1838, 0.5
        %v1855 = vmul.f32 %v1843, 0.5
        %v1856 = vmul.f32 %v1846, 0.5
        %v1857 = vpack.c.bf16 %v1850, %v1849
        %v1858 = vpack.c.bf16 %v1852, %v1851
        %v1859 = vpack.c.bf16 %v1854, %v1853
        %v1860 = vpack.c.bf16 %v1856, %v1855
        %s1861 = scalar_lea.vmem [#allocation2], 160
        %1862 = vst.msk [vmem:[%s1861] sm:$0xff] %vm460, %v1857
        %1863 = vst.msk [vmem:[%s1861 + $0x8] sm:$0xff] %vm460, %v1858
        %1864 = vst.msk [vmem:[%s1861 + $0x10] sm:$0xff] %vm460, %v1859
        %1865 = vst.msk [vmem:[%s1861 + $0x18] sm:$0xff] %vm460, %v1860
        %s1866 = scalar_lea.vmem [#allocation10], 80
        %v1867 = vld [vmem:[%s1866] sm:$0xf]
        %v1868 = vld [vmem:[%s1866 + $0x4] sm:$0xf]
        %v1869 = vld [vmem:[%s1866 + $0x8] sm:$0xf]
        %v1870 = vld [vmem:[%s1866 + $0xc] sm:$0xf]
        %v1875 = vunpack.c.l.b16 %v1867
        %v1876 = vunpack.c.l.b16 %v1868
        %v1877 = vunpack.c.l.b16 %v1869
        %v1878 = vunpack.c.l.b16 %v1870
        %v1879 = vpack.c.b16 %v1876, %v1875
        %v1880 = vpack.c.b16 %v1878, %v1877
        %1883 = vmatprep.subr.bf16.mxu0 0
        %1884 = vmatpush1.bf16.msra.mxu0 %v1879
        %1885 = vmatprep.subr.bf16.mxu0 0
        %1886 = vmatpush1.bf16.msra.mxu0 %v1880
        %1887 = vmatprep.subr.bf16.mxu0 0
        %1888 = vmatpush1.bf16.msra.mxu0 0
        %1889 = vmatprep.subr.bf16.mxu0 0
        %1890 = vmatpush1.bf16.msra.mxu0 0
        %1891 = vmatprep.subr.bf16.mxu0 0
        %1892 = vmatpush1.bf16.msra.mxu0 0
        %1893 = vmatprep.subr.bf16.mxu0 0
        %1894 = vmatpush1.bf16.msra.mxu0 0
        %1895 = vmatprep.subr.bf16.mxu0 0
        %1896 = vmatpush1.bf16.msra.mxu0 0
        %1897 = vmatprep.subr.bf16.mxu0 0
        %1898 = vmatpush1.bf16.msra.mxu0 0
        %1899 = vmatprep.subr.bf16.mxu0 0
        %1900 = vmatpush1.bf16.msra.mxu0 0
        %1901 = vmatprep.subr.bf16.mxu0 0
        %1902 = vmatpush1.bf16.msra.mxu0 0
        %1903 = vmatprep.subr.bf16.mxu0 0
        %1904 = vmatpush1.bf16.msra.mxu0 0
        %1905 = vmatprep.subr.bf16.mxu0 0
        %1906 = vmatpush1.bf16.msra.mxu0 0
        %1907 = vmatprep.subr.bf16.mxu0 0
        %1908 = vmatpush1.bf16.msra.mxu0 0
        %1909 = vmatprep.subr.bf16.mxu0 0
        %1910 = vmatpush1.bf16.msra.mxu0 0
        %1911 = vmatprep.subr.bf16.mxu0 0
        %1912 = vmatpush1.bf16.msra.mxu0 0
        %1913 = vmatprep.subr.bf16.mxu0 0
        %1914 = vmatpush1.bf16.msra.mxu0 0
        %1915 = vmatprep.mubr.bf16.mxu0 0
        %1916 = vmatmul.mubr.bf16.gmra.mrb[0].mxu0 %v372
        %v1917 = vpop.f32.mrb[0].mxu0
        %v1918 = vadd.f32 0.0, %v1917
        %v1919 = vpop.f32.mrb[0].mxu0
        %v1920 = vpop.f32.mrb[0].mxu0
        %v1921 = vadd.f32 0.0, %v1920
        %v1922 = vpop.f32.mrb[0].mxu0
        %1923 = vmatprep.mubr.bf16.mxu0 0
        %1924 = vmatmul.mubr.bf16.gmra.mrb[0].mxu0 %v375
        %v1925 = vpop.f32.mrb[0].mxu0
        %v1926 = vadd.f32 0.0, %v1925
        %v1927 = vpop.f32.mrb[0].mxu0
        %v1928 = vpop.f32.mrb[0].mxu0
        %v1929 = vadd.f32 0.0, %v1928
        %v1930 = vpop.f32.mrb[0].mxu0
        %1931 = vmatprep.mubr.bf16.mxu0 0
        %1932 = vmatmul.mubr.bf16.gmra.mrb[0].mxu0 %v378
        %v1933 = vpop.f32.mrb[0].mxu0
        %v1934 = vadd.f32 0.0, %v1933
        %v1935 = vpop.f32.mrb[0].mxu0
        %v1936 = vpop.f32.mrb[0].mxu0
        %v1937 = vadd.f32 0.0, %v1936
        %v1938 = vpop.f32.mrb[0].mxu0
        %1939 = vmatprep.mubr.bf16.mxu0 0
        %1940 = vmatmul.mubr.bf16.gmra.mrb[0].mxu0 %v381
        %v1941 = vpop.f32.mrb[0].mxu0
        %v1942 = vadd.f32 0.0, %v1941
        %v1943 = vpop.f32.mrb[0].mxu0
        %v1944 = vpop.f32.mrb[0].mxu0
        %v1945 = vadd.f32 0.0, %v1944
        %v1946 = vpop.f32.mrb[0].mxu0
        %1947 = vdwg.mxu0
        %v1948 = vpack.c.bf16 %v1921, %v1918
        %v1949 = vpack.c.bf16 %v1929, %v1926
        %v1950 = vpack.c.bf16 %v1937, %v1934
        %v1951 = vpack.c.bf16 %v1945, %v1942
        %s1952 = scalar_lea.vmem [#allocation3], 160
        %1953 = vst.msk [vmem:[%s1952] sm:$0xff] %vm460, %v1948
        %1954 = vst.msk [vmem:[%s1952 + $0x8] sm:$0xff] %vm460, %v1949
        %1955 = vst.msk [vmem:[%s1952 + $0x10] sm:$0xff] %vm460, %v1950
        %1956 = vst.msk [vmem:[%s1952 + $0x18] sm:$0xff] %vm460, %v1951
        %s1957 = scalar_lea.vmem [#allocation11], 80
        %v1958 = vld [vmem:[%s1957] sm:$0xf]
        %v1959 = vld [vmem:[%s1957 + $0x4] sm:$0xf]
        %v1960 = vld [vmem:[%s1957 + $0x8] sm:$0xf]
        %v1961 = vld [vmem:[%s1957 + $0xc] sm:$0xf]
        %v1966 = vunpack.c.l.b16 %v1958
        %v1967 = vunpack.c.l.b16 %v1959
        %v1968 = vunpack.c.l.b16 %v1960
        %v1969 = vunpack.c.l.b16 %v1961
        %v1970 = vpack.c.b16 %v1967, %v1966
        %v1971 = vpack.c.b16 %v1969, %v1968
        %1974 = vmatprep.subr.bf16.mxu0 0
        %1975 = vmatpush1.bf16.msra.mxu0 %v1970
        %1976 = vmatprep.subr.bf16.mxu0 0
        %1977 = vmatpush1.bf16.msra.mxu0 %v1971
        %1978 = vmatprep.subr.bf16.mxu0 0
        %1979 = vmatpush1.bf16.msra.mxu0 0
        %1980 = vmatprep.subr.bf16.mxu0 0
        %1981 = vmatpush1.bf16.msra.mxu0 0
        %1982 = vmatprep.subr.bf16.mxu0 0
        %1983 = vmatpush1.bf16.msra.mxu0 0
        %1984 = vmatprep.subr.bf16.mxu0 0
        %1985 = vmatpush1.bf16.msra.mxu0 0
        %1986 = vmatprep.subr.bf16.mxu0 0
        %1987 = vmatpush1.bf16.msra.mxu0 0
        %1988 = vmatprep.subr.bf16.mxu0 0
        %1989 = vmatpush1.bf16.msra.mxu0 0
        %1990 = vmatprep.subr.bf16.mxu0 0
        %1991 = vmatpush1.bf16.msra.mxu0 0
        %1992 = vmatprep.subr.bf16.mxu0 0
        %1993 = vmatpush1.bf16.msra.mxu0 0
        %1994 = vmatprep.subr.bf16.mxu0 0
        %1995 = vmatpush1.bf16.msra.mxu0 0
        %1996 = vmatprep.subr.bf16.mxu0 0
        %1997 = vmatpush1.bf16.msra.mxu0 0
        %1998 = vmatprep.subr.bf16.mxu0 0
        %1999 = vmatpush1.bf16.msra.mxu0 0
        %2000 = vmatprep.subr.bf16.mxu0 0
        %2001 = vmatpush1.bf16.msra.mxu0 0
        %2002 = vmatprep.subr.bf16.mxu0 0
        %2003 = vmatpush1.bf16.msra.mxu0 0
        %2004 = vmatprep.subr.bf16.mxu0 0
        %2005 = vmatpush1.bf16.msra.mxu0 0
        %2006 = vmatprep.mubr.bf16.mxu0 0
        %2007 = vmatmul.mubr.bf16.gmra.mrb[0].mxu0 %v372
        %v2008 = vpop.f32.mrb[0].mxu0
        %v2009 = vadd.f32 0.0, %v2008
        %v2010 = vpop.f32.mrb[0].mxu0
        %v2011 = vpop.f32.mrb[0].mxu0
        %v2012 = vadd.f32 0.0, %v2011
        %v2013 = vpop.f32.mrb[0].mxu0
        %2014 = vmatprep.mubr.bf16.mxu0 0
        %2015 = vmatmul.mubr.bf16.gmra.mrb[0].mxu0 %v375
        %v2016 = vpop.f32.mrb[0].mxu0
        %v2017 = vadd.f32 0.0, %v2016
        %v2018 = vpop.f32.mrb[0].mxu0
        %v2019 = vpop.f32.mrb[0].mxu0
        %v2020 = vadd.f32 0.0, %v2019
        %v2021 = vpop.f32.mrb[0].mxu0
        %2022 = vmatprep.mubr.bf16.mxu0 0
        %2023 = vmatmul.mubr.bf16.gmra.mrb[0].mxu0 %v378
        %v2024 = vpop.f32.mrb[0].mxu0
        %v2025 = vadd.f32 0.0, %v2024
        %v2026 = vpop.f32.mrb[0].mxu0
        %v2027 = vpop.f32.mrb[0].mxu0
        %v2028 = vadd.f32 0.0, %v2027
        %v2029 = vpop.f32.mrb[0].mxu0
        %2030 = vmatprep.mubr.bf16.mxu0 0
        %2031 = vmatmul.mubr.bf16.gmra.mrb[0].mxu0 %v381
        %v2032 = vpop.f32.mrb[0].mxu0
        %v2033 = vadd.f32 0.0, %v2032
        %v2034 = vpop.f32.mrb[0].mxu0
        %v2035 = vpop.f32.mrb[0].mxu0
        %v2036 = vadd.f32 0.0, %v2035
        %v2037 = vpop.f32.mrb[0].mxu0
        %2038 = vdwg.mxu0
        %v2039 = vpack.c.bf16 %v2012, %v2009
        %v2040 = vpack.c.bf16 %v2020, %v2017
        %v2041 = vpack.c.bf16 %v2028, %v2025
        %v2042 = vpack.c.bf16 %v2036, %v2033
        %s2043 = scalar_lea.vmem [#allocation4], 160
        %2044 = vst.msk [vmem:[%s2043] sm:$0xff] %vm460, %v2039
        %2045 = vst.msk [vmem:[%s2043 + $0x8] sm:$0xff] %vm460, %v2040
        %2046 = vst.msk [vmem:[%s2043 + $0x10] sm:$0xff] %vm460, %v2041
        %2047 = vst.msk [vmem:[%s2043 + $0x18] sm:$0xff] %vm460, %v2042
        %s2048 = scalar_lea.vmem [#allocation8], 96
        %v2049 = vld [vmem:[%s2048] sm:$0xf]
        %v2050 = vld [vmem:[%s2048 + $0x4] sm:$0xf]
        %v2051 = vld [vmem:[%s2048 + $0x8] sm:$0xf]
        %v2052 = vld [vmem:[%s2048 + $0xc] sm:$0xf]
        %v2057 = vunpack.c.l.b16 %v2049
        %v2058 = vunpack.c.l.b16 %v2050
        %v2059 = vunpack.c.l.b16 %v2051
        %v2060 = vunpack.c.l.b16 %v2052
        %v2061 = vpack.c.b16 %v2058, %v2057
        %v2062 = vpack.c.b16 %v2060, %v2059
        %2065 = vmatprep.subr.bf16.mxu0 0
        %2066 = vmatpush1.bf16.msra.mxu0 %v2061
        %2067 = vmatprep.subr.bf16.mxu0 0
        %2068 = vmatpush1.bf16.msra.mxu0 %v2062
        %2069 = vmatprep.subr.bf16.mxu0 0
        %2070 = vmatpush1.bf16.msra.mxu0 0
        %2071 = vmatprep.subr.bf16.mxu0 0
        %2072 = vmatpush1.bf16.msra.mxu0 0
        %2073 = vmatprep.subr.bf16.mxu0 0
        %2074 = vmatpush1.bf16.msra.mxu0 0
        %2075 = vmatprep.subr.bf16.mxu0 0
        %2076 = vmatpush1.bf16.msra.mxu0 0
        %2077 = vmatprep.subr.bf16.mxu0 0
        %2078 = vmatpush1.bf16.msra.mxu0 0
        %2079 = vmatprep.subr.bf16.mxu0 0
        %2080 = vmatpush1.bf16.msra.mxu0 0
        %2081 = vmatprep.subr.bf16.mxu0 0
        %2082 = vmatpush1.bf16.msra.mxu0 0
        %2083 = vmatprep.subr.bf16.mxu0 0
        %2084 = vmatpush1.bf16.msra.mxu0 0
        %2085 = vmatprep.subr.bf16.mxu0 0
        %2086 = vmatpush1.bf16.msra.mxu0 0
        %2087 = vmatprep.subr.bf16.mxu0 0
        %2088 = vmatpush1.bf16.msra.mxu0 0
        %2089 = vmatprep.subr.bf16.mxu0 0
        %2090 = vmatpush1.bf16.msra.mxu0 0
        %2091 = vmatprep.subr.bf16.mxu0 0
        %2092 = vmatpush1.bf16.msra.mxu0 0
        %2093 = vmatprep.subr.bf16.mxu0 0
        %2094 = vmatpush1.bf16.msra.mxu0 0
        %2095 = vmatprep.subr.bf16.mxu0 0
        %2096 = vmatpush1.bf16.msra.mxu0 0
        %2097 = vmatprep.mubr.bf16.mxu0 0
        %2098 = vmatmul.mubr.bf16.gmra.mrb[0].mxu0 %v372
        %v2099 = vpop.f32.mrb[0].mxu0
        %v2100 = vadd.f32 0.0, %v2099
        %v2101 = vpop.f32.mrb[0].mxu0
        %v2102 = vpop.f32.mrb[0].mxu0
        %v2103 = vadd.f32 0.0, %v2102
        %v2104 = vpop.f32.mrb[0].mxu0
        %2105 = vmatprep.mubr.bf16.mxu0 0
        %2106 = vmatmul.mubr.bf16.gmra.mrb[0].mxu0 %v375
        %v2107 = vpop.f32.mrb[0].mxu0
        %v2108 = vadd.f32 0.0, %v2107
        %v2109 = vpop.f32.mrb[0].mxu0
        %v2110 = vpop.f32.mrb[0].mxu0
        %v2111 = vadd.f32 0.0, %v2110
        %v2112 = vpop.f32.mrb[0].mxu0
        %2113 = vmatprep.mubr.bf16.mxu0 0
        %2114 = vmatmul.mubr.bf16.gmra.mrb[0].mxu0 %v378
        %v2115 = vpop.f32.mrb[0].mxu0
        %v2116 = vadd.f32 0.0, %v2115
        %v2117 = vpop.f32.mrb[0].mxu0
        %v2118 = vpop.f32.mrb[0].mxu0
        %v2119 = vadd.f32 0.0, %v2118
        %v2120 = vpop.f32.mrb[0].mxu0
        %2121 = vmatprep.mubr.bf16.mxu0 0
        %2122 = vmatmul.mubr.bf16.gmra.mrb[0].mxu0 %v381
        %v2123 = vpop.f32.mrb[0].mxu0
        %v2124 = vadd.f32 0.0, %v2123
        %v2125 = vpop.f32.mrb[0].mxu0
        %v2126 = vpop.f32.mrb[0].mxu0
        %v2127 = vadd.f32 0.0, %v2126
        %v2128 = vpop.f32.mrb[0].mxu0
        %2129 = vdwg.mxu0
        %v2130 = vmul.f32 %v2100, 0.5
        %v2131 = vmul.f32 %v2103, 0.5
        %v2132 = vmul.f32 %v2108, 0.5
        %v2133 = vmul.f32 %v2111, 0.5
        %v2134 = vmul.f32 %v2116, 0.5
        %v2135 = vmul.f32 %v2119, 0.5
        %v2136 = vmul.f32 %v2124, 0.5
        %v2137 = vmul.f32 %v2127, 0.5
        %v2138 = vpack.c.bf16 %v2131, %v2130
        %v2139 = vpack.c.bf16 %v2133, %v2132
        %v2140 = vpack.c.bf16 %v2135, %v2134
        %v2141 = vpack.c.bf16 %v2137, %v2136
        %s2142 = scalar_lea.vmem [#allocation2], 192
        %2143 = vst.msk [vmem:[%s2142] sm:$0xff] %vm460, %v2138
        %2144 = vst.msk [vmem:[%s2142 + $0x8] sm:$0xff] %vm460, %v2139
        %2145 = vst.msk [vmem:[%s2142 + $0x10] sm:$0xff] %vm460, %v2140
        %2146 = vst.msk [vmem:[%s2142 + $0x18] sm:$0xff] %vm460, %v2141
        %s2147 = scalar_lea.vmem [#allocation10], 96
        %v2148 = vld [vmem:[%s2147] sm:$0xf]
        %v2149 = vld [vmem:[%s2147 + $0x4] sm:$0xf]
        %v2150 = vld [vmem:[%s2147 + $0x8] sm:$0xf]
        %v2151 = vld [vmem:[%s2147 + $0xc] sm:$0xf]
        %v2156 = vunpack.c.l.b16 %v2148
        %v2157 = vunpack.c.l.b16 %v2149
        %v2158 = vunpack.c.l.b16 %v2150
        %v2159 = vunpack.c.l.b16 %v2151
        %v2160 = vpack.c.b16 %v2157, %v2156
        %v2161 = vpack.c.b16 %v2159, %v2158
        %2164 = vmatprep.subr.bf16.mxu0 0
        %2165 = vmatpush1.bf16.msra.mxu0 %v2160
        %2166 = vmatprep.subr.bf16.mxu0 0
        %2167 = vmatpush1.bf16.msra.mxu0 %v2161
        %2168 = vmatprep.subr.bf16.mxu0 0
        %2169 = vmatpush1.bf16.msra.mxu0 0
        %2170 = vmatprep.subr.bf16.mxu0 0
        %2171 = vmatpush1.bf16.msra.mxu0 0
        %2172 = vmatprep.subr.bf16.mxu0 0
        %2173 = vmatpush1.bf16.msra.mxu0 0
        %2174 = vmatprep.subr.bf16.mxu0 0
        %2175 = vmatpush1.bf16.msra.mxu0 0
        %2176 = vmatprep.subr.bf16.mxu0 0
        %2177 = vmatpush1.bf16.msra.mxu0 0
        %2178 = vmatprep.subr.bf16.mxu0 0
        %2179 = vmatpush1.bf16.msra.mxu0 0
        %2180 = vmatprep.subr.bf16.mxu0 0
        %2181 = vmatpush1.bf16.msra.mxu0 0
        %2182 = vmatprep.subr.bf16.mxu0 0
        %2183 = vmatpush1.bf16.msra.mxu0 0
        %2184 = vmatprep.subr.bf16.mxu0 0
        %2185 = vmatpush1.bf16.msra.mxu0 0
        %2186 = vmatprep.subr.bf16.mxu0 0
        %2187 = vmatpush1.bf16.msra.mxu0 0
        %2188 = vmatprep.subr.bf16.mxu0 0
        %2189 = vmatpush1.bf16.msra.mxu0 0
        %2190 = vmatprep.subr.bf16.mxu0 0
        %2191 = vmatpush1.bf16.msra.mxu0 0
        %2192 = vmatprep.subr.bf16.mxu0 0
        %2193 = vmatpush1.bf16.msra.mxu0 0
        %2194 = vmatprep.subr.bf16.mxu0 0
        %2195 = vmatpush1.bf16.msra.mxu0 0
        %2196 = vmatprep.mubr.bf16.mxu0 0
        %2197 = vmatmul.mubr.bf16.gmra.mrb[0].mxu0 %v372
        %v2198 = vpop.f32.mrb[0].mxu0
        %v2199 = vadd.f32 0.0, %v2198
        %v2200 = vpop.f32.mrb[0].mxu0
        %v2201 = vpop.f32.mrb[0].mxu0
        %v2202 = vadd.f32 0.0, %v2201
        %v2203 = vpop.f32.mrb[0].mxu0
        %2204 = vmatprep.mubr.bf16.mxu0 0
        %2205 = vmatmul.mubr.bf16.gmra.mrb[0].mxu0 %v375
        %v2206 = vpop.f32.mrb[0].mxu0
        %v2207 = vadd.f32 0.0, %v2206
        %v2208 = vpop.f32.mrb[0].mxu0
        %v2209 = vpop.f32.mrb[0].mxu0
        %v2210 = vadd.f32 0.0, %v2209
        %v2211 = vpop.f32.mrb[0].mxu0
        %2212 = vmatprep.mubr.bf16.mxu0 0
        %2213 = vmatmul.mubr.bf16.gmra.mrb[0].mxu0 %v378
        %v2214 = vpop.f32.mrb[0].mxu0
        %v2215 = vadd.f32 0.0, %v2214
        %v2216 = vpop.f32.mrb[0].mxu0
        %v2217 = vpop.f32.mrb[0].mxu0
        %v2218 = vadd.f32 0.0, %v2217
        %v2219 = vpop.f32.mrb[0].mxu0
        %2220 = vmatprep.mubr.bf16.mxu0 0
        %2221 = vmatmul.mubr.bf16.gmra.mrb[0].mxu0 %v381
        %v2222 = vpop.f32.mrb[0].mxu0
        %v2223 = vadd.f32 0.0, %v2222
        %v2224 = vpop.f32.mrb[0].mxu0
        %v2225 = vpop.f32.mrb[0].mxu0
        %v2226 = vadd.f32 0.0, %v2225
        %v2227 = vpop.f32.mrb[0].mxu0
        %2228 = vdwg.mxu0
        %v2229 = vpack.c.bf16 %v2202, %v2199
        %v2230 = vpack.c.bf16 %v2210, %v2207
        %v2231 = vpack.c.bf16 %v2218, %v2215
        %v2232 = vpack.c.bf16 %v2226, %v2223
        %s2233 = scalar_lea.vmem [#allocation3], 192
        %2234 = vst.msk [vmem:[%s2233] sm:$0xff] %vm460, %v2229
        %2235 = vst.msk [vmem:[%s2233 + $0x8] sm:$0xff] %vm460, %v2230
        %2236 = vst.msk [vmem:[%s2233 + $0x10] sm:$0xff] %vm460, %v2231
        %2237 = vst.msk [vmem:[%s2233 + $0x18] sm:$0xff] %vm460, %v2232
        %s2238 = scalar_lea.vmem [#allocation11], 96
        %v2239 = vld [vmem:[%s2238] sm:$0xf]
        %v2240 = vld [vmem:[%s2238 + $0x4] sm:$0xf]
        %v2241 = vld [vmem:[%s2238 + $0x8] sm:$0xf]
        %v2242 = vld [vmem:[%s2238 + $0xc] sm:$0xf]
        %v2247 = vunpack.c.l.b16 %v2239
        %v2248 = vunpack.c.l.b16 %v2240
        %v2249 = vunpack.c.l.b16 %v2241
        %v2250 = vunpack.c.l.b16 %v2242
        %v2251 = vpack.c.b16 %v2248, %v2247
        %v2252 = vpack.c.b16 %v2250, %v2249
        %2255 = vmatprep.subr.bf16.mxu0 0
        %2256 = vmatpush1.bf16.msra.mxu0 %v2251
        %2257 = vmatprep.subr.bf16.mxu0 0
        %2258 = vmatpush1.bf16.msra.mxu0 %v2252
        %2259 = vmatprep.subr.bf16.mxu0 0
        %2260 = vmatpush1.bf16.msra.mxu0 0
        %2261 = vmatprep.subr.bf16.mxu0 0
        %2262 = vmatpush1.bf16.msra.mxu0 0
        %2263 = vmatprep.subr.bf16.mxu0 0
        %2264 = vmatpush1.bf16.msra.mxu0 0
        %2265 = vmatprep.subr.bf16.mxu0 0
        %2266 = vmatpush1.bf16.msra.mxu0 0
        %2267 = vmatprep.subr.bf16.mxu0 0
        %2268 = vmatpush1.bf16.msra.mxu0 0
        %2269 = vmatprep.subr.bf16.mxu0 0
        %2270 = vmatpush1.bf16.msra.mxu0 0
        %2271 = vmatprep.subr.bf16.mxu0 0
        %2272 = vmatpush1.bf16.msra.mxu0 0
        %2273 = vmatprep.subr.bf16.mxu0 0
        %2274 = vmatpush1.bf16.msra.mxu0 0
        %2275 = vmatprep.subr.bf16.mxu0 0
        %2276 = vmatpush1.bf16.msra.mxu0 0
        %2277 = vmatprep.subr.bf16.mxu0 0
        %2278 = vmatpush1.bf16.msra.mxu0 0
        %2279 = vmatprep.subr.bf16.mxu0 0
        %2280 = vmatpush1.bf16.msra.mxu0 0
        %2281 = vmatprep.subr.bf16.mxu0 0
        %2282 = vmatpush1.bf16.msra.mxu0 0
        %2283 = vmatprep.subr.bf16.mxu0 0
        %2284 = vmatpush1.bf16.msra.mxu0 0
        %2285 = vmatprep.subr.bf16.mxu0 0
        %2286 = vmatpush1.bf16.msra.mxu0 0
        %2287 = vmatprep.mubr.bf16.mxu0 0
        %2288 = vmatmul.mubr.bf16.gmra.mrb[0].mxu0 %v372
        %v2289 = vpop.f32.mrb[0].mxu0
        %v2290 = vadd.f32 0.0, %v2289
        %v2291 = vpop.f32.mrb[0].mxu0
        %v2292 = vpop.f32.mrb[0].mxu0
        %v2293 = vadd.f32 0.0, %v2292
        %v2294 = vpop.f32.mrb[0].mxu0
        %2295 = vmatprep.mubr.bf16.mxu0 0
        %2296 = vmatmul.mubr.bf16.gmra.mrb[0].mxu0 %v375
        %v2297 = vpop.f32.mrb[0].mxu0
        %v2298 = vadd.f32 0.0, %v2297
        %v2299 = vpop.f32.mrb[0].mxu0
        %v2300 = vpop.f32.mrb[0].mxu0
        %v2301 = vadd.f32 0.0, %v2300
        %v2302 = vpop.f32.mrb[0].mxu0
        %2303 = vmatprep.mubr.bf16.mxu0 0
        %2304 = vmatmul.mubr.bf16.gmra.mrb[0].mxu0 %v378
        %v2305 = vpop.f32.mrb[0].mxu0
        %v2306 = vadd.f32 0.0, %v2305
        %v2307 = vpop.f32.mrb[0].mxu0
        %v2308 = vpop.f32.mrb[0].mxu0
        %v2309 = vadd.f32 0.0, %v2308
        %v2310 = vpop.f32.mrb[0].mxu0
        %2311 = vmatprep.mubr.bf16.mxu0 0
        %2312 = vmatmul.mubr.bf16.gmra.mrb[0].mxu0 %v381
        %v2313 = vpop.f32.mrb[0].mxu0
        %v2314 = vadd.f32 0.0, %v2313
        %v2315 = vpop.f32.mrb[0].mxu0
        %v2316 = vpop.f32.mrb[0].mxu0
        %v2317 = vadd.f32 0.0, %v2316
        %v2318 = vpop.f32.mrb[0].mxu0
        %2319 = vdwg.mxu0
        %v2320 = vpack.c.bf16 %v2293, %v2290
        %v2321 = vpack.c.bf16 %v2301, %v2298
        %v2322 = vpack.c.bf16 %v2309, %v2306
        %v2323 = vpack.c.bf16 %v2317, %v2314
        %s2324 = scalar_lea.vmem [#allocation4], 192
        %2325 = vst.msk [vmem:[%s2324] sm:$0xff] %vm460, %v2320
        %2326 = vst.msk [vmem:[%s2324 + $0x8] sm:$0xff] %vm460, %v2321
        %2327 = vst.msk [vmem:[%s2324 + $0x10] sm:$0xff] %vm460, %v2322
        %2328 = vst.msk [vmem:[%s2324 + $0x18] sm:$0xff] %vm460, %v2323
        %s2329 = scalar_lea.vmem [#allocation8], 112
        %v2330 = vld [vmem:[%s2329] sm:$0xf]
        %v2331 = vld [vmem:[%s2329 + $0x4] sm:$0xf]
        %v2332 = vld [vmem:[%s2329 + $0x8] sm:$0xf]
        %v2333 = vld [vmem:[%s2329 + $0xc] sm:$0xf]
        %v2338 = vunpack.c.l.b16 %v2330
        %v2339 = vunpack.c.l.b16 %v2331
        %v2340 = vunpack.c.l.b16 %v2332
        %v2341 = vunpack.c.l.b16 %v2333
        %v2342 = vpack.c.b16 %v2339, %v2338
        %v2343 = vpack.c.b16 %v2341, %v2340
        %2346 = vmatprep.subr.bf16.mxu0 0
        %2347 = vmatpush1.bf16.msra.mxu0 %v2342
        %2348 = vmatprep.subr.bf16.mxu0 0
        %2349 = vmatpush1.bf16.msra.mxu0 %v2343
        %2350 = vmatprep.subr.bf16.mxu0 0
        %2351 = vmatpush1.bf16.msra.mxu0 0
        %2352 = vmatprep.subr.bf16.mxu0 0
        %2353 = vmatpush1.bf16.msra.mxu0 0
        %2354 = vmatprep.subr.bf16.mxu0 0
        %2355 = vmatpush1.bf16.msra.mxu0 0
        %2356 = vmatprep.subr.bf16.mxu0 0
        %2357 = vmatpush1.bf16.msra.mxu0 0
        %2358 = vmatprep.subr.bf16.mxu0 0
        %2359 = vmatpush1.bf16.msra.mxu0 0
        %2360 = vmatprep.subr.bf16.mxu0 0
        %2361 = vmatpush1.bf16.msra.mxu0 0
        %2362 = vmatprep.subr.bf16.mxu0 0
        %2363 = vmatpush1.bf16.msra.mxu0 0
        %2364 = vmatprep.subr.bf16.mxu0 0
        %2365 = vmatpush1.bf16.msra.mxu0 0
        %2366 = vmatprep.subr.bf16.mxu0 0
        %2367 = vmatpush1.bf16.msra.mxu0 0
        %2368 = vmatprep.subr.bf16.mxu0 0
        %2369 = vmatpush1.bf16.msra.mxu0 0
        %2370 = vmatprep.subr.bf16.mxu0 0
        %2371 = vmatpush1.bf16.msra.mxu0 0
        %2372 = vmatprep.subr.bf16.mxu0 0
        %2373 = vmatpush1.bf16.msra.mxu0 0
        %2374 = vmatprep.subr.bf16.mxu0 0
        %2375 = vmatpush1.bf16.msra.mxu0 0
        %2376 = vmatprep.subr.bf16.mxu0 0
        %2377 = vmatpush1.bf16.msra.mxu0 0
        %2378 = vmatprep.mubr.bf16.mxu0 0
        %2379 = vmatmul.mubr.bf16.gmra.mrb[0].mxu0 %v372
        %v2380 = vpop.f32.mrb[0].mxu0
        %v2381 = vadd.f32 0.0, %v2380
        %v2382 = vpop.f32.mrb[0].mxu0
        %v2383 = vpop.f32.mrb[0].mxu0
        %v2384 = vadd.f32 0.0, %v2383
        %v2385 = vpop.f32.mrb[0].mxu0
        %2386 = vmatprep.mubr.bf16.mxu0 0
        %2387 = vmatmul.mubr.bf16.gmra.mrb[0].mxu0 %v375
        %v2388 = vpop.f32.mrb[0].mxu0
        %v2389 = vadd.f32 0.0, %v2388
        %v2390 = vpop.f32.mrb[0].mxu0
        %v2391 = vpop.f32.mrb[0].mxu0
        %v2392 = vadd.f32 0.0, %v2391
        %v2393 = vpop.f32.mrb[0].mxu0
        %2394 = vmatprep.mubr.bf16.mxu0 0
        %2395 = vmatmul.mubr.bf16.gmra.mrb[0].mxu0 %v378
        %v2396 = vpop.f32.mrb[0].mxu0
        %v2397 = vadd.f32 0.0, %v2396
        %v2398 = vpop.f32.mrb[0].mxu0
        %v2399 = vpop.f32.mrb[0].mxu0
        %v2400 = vadd.f32 0.0, %v2399
        %v2401 = vpop.f32.mrb[0].mxu0
        %2402 = vmatprep.mubr.bf16.mxu0 0
        %2403 = vmatmul.mubr.bf16.gmra.mrb[0].mxu0 %v381
        %v2404 = vpop.f32.mrb[0].mxu0
        %v2405 = vadd.f32 0.0, %v2404
        %v2406 = vpop.f32.mrb[0].mxu0
        %v2407 = vpop.f32.mrb[0].mxu0
        %v2408 = vadd.f32 0.0, %v2407
        %v2409 = vpop.f32.mrb[0].mxu0
        %2410 = vdwg.mxu0
        %v2411 = vmul.f32 %v2381, 0.5
        %v2412 = vmul.f32 %v2384, 0.5
        %v2413 = vmul.f32 %v2389, 0.5
        %v2414 = vmul.f32 %v2392, 0.5
        %v2415 = vmul.f32 %v2397, 0.5
        %v2416 = vmul.f32 %v2400, 0.5
        %v2417 = vmul.f32 %v2405, 0.5
        %v2418 = vmul.f32 %v2408, 0.5
        %v2419 = vpack.c.bf16 %v2412, %v2411
        %v2420 = vpack.c.bf16 %v2414, %v2413
        %v2421 = vpack.c.bf16 %v2416, %v2415
        %v2422 = vpack.c.bf16 %v2418, %v2417
        %s2423 = scalar_lea.vmem [#allocation2], 224
        %2424 = vst.msk [vmem:[%s2423] sm:$0xff] %vm460, %v2419
        %2425 = vst.msk [vmem:[%s2423 + $0x8] sm:$0xff] %vm460, %v2420
        %2426 = vst.msk [vmem:[%s2423 + $0x10] sm:$0xff] %vm460, %v2421
        %2427 = vst.msk [vmem:[%s2423 + $0x18] sm:$0xff] %vm460, %v2422
        %s2428 = scalar_lea.vmem [#allocation10], 112
        %v2429 = vld [vmem:[%s2428] sm:$0xf]
        %v2430 = vld [vmem:[%s2428 + $0x4] sm:$0xf]
        %v2431 = vld [vmem:[%s2428 + $0x8] sm:$0xf]
        %v2432 = vld [vmem:[%s2428 + $0xc] sm:$0xf]
        %v2437 = vunpack.c.l.b16 %v2429
        %v2438 = vunpack.c.l.b16 %v2430
        %v2439 = vunpack.c.l.b16 %v2431
        %v2440 = vunpack.c.l.b16 %v2432
        %v2441 = vpack.c.b16 %v2438, %v2437
        %v2442 = vpack.c.b16 %v2440, %v2439
        %2445 = vmatprep.subr.bf16.mxu0 0
        %2446 = vmatpush1.bf16.msra.mxu0 %v2441
        %2447 = vmatprep.subr.bf16.mxu0 0
        %2448 = vmatpush1.bf16.msra.mxu0 %v2442
        %2449 = vmatprep.subr.bf16.mxu0 0
        %2450 = vmatpush1.bf16.msra.mxu0 0
        %2451 = vmatprep.subr.bf16.mxu0 0
        %2452 = vmatpush1.bf16.msra.mxu0 0
        %2453 = vmatprep.subr.bf16.mxu0 0
        %2454 = vmatpush1.bf16.msra.mxu0 0
        %2455 = vmatprep.subr.bf16.mxu0 0
        %2456 = vmatpush1.bf16.msra.mxu0 0
        %2457 = vmatprep.subr.bf16.mxu0 0
        %2458 = vmatpush1.bf16.msra.mxu0 0
        %2459 = vmatprep.subr.bf16.mxu0 0
        %2460 = vmatpush1.bf16.msra.mxu0 0
        %2461 = vmatprep.subr.bf16.mxu0 0
        %2462 = vmatpush1.bf16.msra.mxu0 0
        %2463 = vmatprep.subr.bf16.mxu0 0
        %2464 = vmatpush1.bf16.msra.mxu0 0
        %2465 = vmatprep.subr.bf16.mxu0 0
        %2466 = vmatpush1.bf16.msra.mxu0 0
        %2467 = vmatprep.subr.bf16.mxu0 0
        %2468 = vmatpush1.bf16.msra.mxu0 0
        %2469 = vmatprep.subr.bf16.mxu0 0
        %2470 = vmatpush1.bf16.msra.mxu0 0
        %2471 = vmatprep.subr.bf16.mxu0 0
        %2472 = vmatpush1.bf16.msra.mxu0 0
        %2473 = vmatprep.subr.bf16.mxu0 0
        %2474 = vmatpush1.bf16.msra.mxu0 0
        %2475 = vmatprep.subr.bf16.mxu0 0
        %2476 = vmatpush1.bf16.msra.mxu0 0
        %2477 = vmatprep.mubr.bf16.mxu0 0
        %2478 = vmatmul.mubr.bf16.gmra.mrb[0].mxu0 %v372
        %v2479 = vpop.f32.mrb[0].mxu0
        %v2480 = vadd.f32 0.0, %v2479
        %v2481 = vpop.f32.mrb[0].mxu0
        %v2482 = vpop.f32.mrb[0].mxu0
        %v2483 = vadd.f32 0.0, %v2482
        %v2484 = vpop.f32.mrb[0].mxu0
        %2485 = vmatprep.mubr.bf16.mxu0 0
        %2486 = vmatmul.mubr.bf16.gmra.mrb[0].mxu0 %v375
        %v2487 = vpop.f32.mrb[0].mxu0
        %v2488 = vadd.f32 0.0, %v2487
        %v2489 = vpop.f32.mrb[0].mxu0
        %v2490 = vpop.f32.mrb[0].mxu0
        %v2491 = vadd.f32 0.0, %v2490
        %v2492 = vpop.f32.mrb[0].mxu0
        %2493 = vmatprep.mubr.bf16.mxu0 0
        %2494 = vmatmul.mubr.bf16.gmra.mrb[0].mxu0 %v378
        %v2495 = vpop.f32.mrb[0].mxu0
        %v2496 = vadd.f32 0.0, %v2495
        %v2497 = vpop.f32.mrb[0].mxu0
        %v2498 = vpop.f32.mrb[0].mxu0
        %v2499 = vadd.f32 0.0, %v2498
        %v2500 = vpop.f32.mrb[0].mxu0
        %2501 = vmatprep.mubr.bf16.mxu0 0
        %2502 = vmatmul.mubr.bf16.gmra.mrb[0].mxu0 %v381
        %v2503 = vpop.f32.mrb[0].mxu0
        %v2504 = vadd.f32 0.0, %v2503
        %v2505 = vpop.f32.mrb[0].mxu0
        %v2506 = vpop.f32.mrb[0].mxu0
        %v2507 = vadd.f32 0.0, %v2506
        %v2508 = vpop.f32.mrb[0].mxu0
        %2509 = vdwg.mxu0
        %v2510 = vpack.c.bf16 %v2483, %v2480
        %v2511 = vpack.c.bf16 %v2491, %v2488
        %v2512 = vpack.c.bf16 %v2499, %v2496
        %v2513 = vpack.c.bf16 %v2507, %v2504
        %s2514 = scalar_lea.vmem [#allocation3], 224
        %2515 = vst.msk [vmem:[%s2514] sm:$0xff] %vm460, %v2510
        %2516 = vst.msk [vmem:[%s2514 + $0x8] sm:$0xff] %vm460, %v2511
        %2517 = vst.msk [vmem:[%s2514 + $0x10] sm:$0xff] %vm460, %v2512
        %2518 = vst.msk [vmem:[%s2514 + $0x18] sm:$0xff] %vm460, %v2513
        %s2519 = scalar_lea.vmem [#allocation11], 112
        %v2520 = vld [vmem:[%s2519] sm:$0xf]
        %v2521 = vld [vmem:[%s2519 + $0x4] sm:$0xf]
        %v2522 = vld [vmem:[%s2519 + $0x8] sm:$0xf]
        %v2523 = vld [vmem:[%s2519 + $0xc] sm:$0xf]
        %v2528 = vunpack.c.l.b16 %v2520
        %v2529 = vunpack.c.l.b16 %v2521
        %v2530 = vunpack.c.l.b16 %v2522
        %v2531 = vunpack.c.l.b16 %v2523
        %v2532 = vpack.c.b16 %v2529, %v2528
        %v2533 = vpack.c.b16 %v2531, %v2530
        %2536 = vmatprep.subr.bf16.mxu0 0
        %2537 = vmatpush1.bf16.msra.mxu0 %v2532
        %2538 = vmatprep.subr.bf16.mxu0 0
        %2539 = vmatpush1.bf16.msra.mxu0 %v2533
        %2540 = vmatprep.subr.bf16.mxu0 0
        %2541 = vmatpush1.bf16.msra.mxu0 0
        %2542 = vmatprep.subr.bf16.mxu0 0
        %2543 = vmatpush1.bf16.msra.mxu0 0
        %2544 = vmatprep.subr.bf16.mxu0 0
        %2545 = vmatpush1.bf16.msra.mxu0 0
        %2546 = vmatprep.subr.bf16.mxu0 0
        %2547 = vmatpush1.bf16.msra.mxu0 0
        %2548 = vmatprep.subr.bf16.mxu0 0
        %2549 = vmatpush1.bf16.msra.mxu0 0
        %2550 = vmatprep.subr.bf16.mxu0 0
        %2551 = vmatpush1.bf16.msra.mxu0 0
        %2552 = vmatprep.subr.bf16.mxu0 0
        %2553 = vmatpush1.bf16.msra.mxu0 0
        %2554 = vmatprep.subr.bf16.mxu0 0
        %2555 = vmatpush1.bf16.msra.mxu0 0
        %2556 = vmatprep.subr.bf16.mxu0 0
        %2557 = vmatpush1.bf16.msra.mxu0 0
        %2558 = vmatprep.subr.bf16.mxu0 0
        %2559 = vmatpush1.bf16.msra.mxu0 0
        %2560 = vmatprep.subr.bf16.mxu0 0
        %2561 = vmatpush1.bf16.msra.mxu0 0
        %2562 = vmatprep.subr.bf16.mxu0 0
        %2563 = vmatpush1.bf16.msra.mxu0 0
        %2564 = vmatprep.subr.bf16.mxu0 0
        %2565 = vmatpush1.bf16.msra.mxu0 0
        %2566 = vmatprep.subr.bf16.mxu0 0
        %2567 = vmatpush1.bf16.msra.mxu0 0
        %2568 = vmatprep.mubr.bf16.mxu0 0
        %2569 = vmatmul.mubr.bf16.gmra.mrb[0].mxu0 %v372
        %v2570 = vpop.f32.mrb[0].mxu0
        %v2571 = vadd.f32 0.0, %v2570
        %v2572 = vpop.f32.mrb[0].mxu0
        %v2573 = vpop.f32.mrb[0].mxu0
        %v2574 = vadd.f32 0.0, %v2573
        %v2575 = vpop.f32.mrb[0].mxu0
        %2576 = vmatprep.mubr.bf16.mxu0 0
        %2577 = vmatmul.mubr.bf16.gmra.mrb[0].mxu0 %v375
        %v2578 = vpop.f32.mrb[0].mxu0
        %v2579 = vadd.f32 0.0, %v2578
        %v2580 = vpop.f32.mrb[0].mxu0
        %v2581 = vpop.f32.mrb[0].mxu0
        %v2582 = vadd.f32 0.0, %v2581
        %v2583 = vpop.f32.mrb[0].mxu0
        %2584 = vmatprep.mubr.bf16.mxu0 0
        %2585 = vmatmul.mubr.bf16.gmra.mrb[0].mxu0 %v378
        %v2586 = vpop.f32.mrb[0].mxu0
        %v2587 = vadd.f32 0.0, %v2586
        %v2588 = vpop.f32.mrb[0].mxu0
        %v2589 = vpop.f32.mrb[0].mxu0
        %v2590 = vadd.f32 0.0, %v2589
        %v2591 = vpop.f32.mrb[0].mxu0
        %2592 = vmatprep.mubr.bf16.mxu0 0
        %2593 = vmatmul.mubr.bf16.gmra.mrb[0].mxu0 %v381
        %v2594 = vpop.f32.mrb[0].mxu0
        %v2595 = vadd.f32 0.0, %v2594
        %v2596 = vpop.f32.mrb[0].mxu0
        %v2597 = vpop.f32.mrb[0].mxu0
        %v2598 = vadd.f32 0.0, %v2597
        %v2599 = vpop.f32.mrb[0].mxu0
        %2600 = vdwg.mxu0
        %v2601 = vpack.c.bf16 %v2574, %v2571
        %v2602 = vpack.c.bf16 %v2582, %v2579
        %v2603 = vpack.c.bf16 %v2590, %v2587
        %v2604 = vpack.c.bf16 %v2598, %v2595
        %s2605 = scalar_lea.vmem [#allocation4], 224
        %2606 = vst.msk [vmem:[%s2605] sm:$0xff] %vm460, %v2601
        %2607 = vst.msk [vmem:[%s2605 + $0x8] sm:$0xff] %vm460, %v2602
        %2608 = vst.msk [vmem:[%s2605 + $0x10] sm:$0xff] %vm460, %v2603
        %2609 = vst.msk [vmem:[%s2605 + $0x18] sm:$0xff] %vm460, %v2604
        %v2610 = vld [vmem:[#allocation2] sm:$0xff]
        %v2611 = vld [vmem:[#allocation2 + $0x8] sm:$0xff]
        %v2612 = vld [vmem:[#allocation2 + $0x10] sm:$0xff]
        %v2613 = vld [vmem:[#allocation2 + $0x18] sm:$0xff]
        %v2614 = vld [vmem:[#allocation2 + $0x20] sm:$0xff]
        %v2615 = vld [vmem:[#allocation2 + $0x28] sm:$0xff]
        %v2616 = vld [vmem:[#allocation2 + $0x30] sm:$0xff]
        %v2617 = vld [vmem:[#allocation2 + $0x38] sm:$0xff]
        %v2618 = vld [vmem:[#allocation2 + $0x40] sm:$0xff]
        %v2619 = vld [vmem:[#allocation2 + $0x48] sm:$0xff]
        %v2620 = vld [vmem:[#allocation2 + $0x50] sm:$0xff]
        %v2621 = vld [vmem:[#allocation2 + $0x58] sm:$0xff]
        %v2622 = vld [vmem:[#allocation2 + $0x60] sm:$0xff]
        %v2623 = vld [vmem:[#allocation2 + $0x68] sm:$0xff]
        %v2624 = vld [vmem:[#allocation2 + $0x70] sm:$0xff]
        %v2625 = vld [vmem:[#allocation2 + $0x78] sm:$0xff]
        %v2626 = vld [vmem:[#allocation2 + $0x80] sm:$0xff]
        %v2627 = vld [vmem:[#allocation2 + $0x88] sm:$0xff]
        %v2628 = vld [vmem:[#allocation2 + $0x90] sm:$0xff]
        %v2629 = vld [vmem:[#allocation2 + $0x98] sm:$0xff]
        %v2630 = vld [vmem:[#allocation2 + $0xa0] sm:$0xff]
        %v2631 = vld [vmem:[#allocation2 + $0xa8] sm:$0xff]
        %v2632 = vld [vmem:[#allocation2 + $0xb0] sm:$0xff]
        %v2633 = vld [vmem:[#allocation2 + $0xb8] sm:$0xff]
        %v2634 = vld [vmem:[#allocation2 + $0xc0] sm:$0xff]
        %v2635 = vld [vmem:[#allocation2 + $0xc8] sm:$0xff]
        %v2636 = vld [vmem:[#allocation2 + $0xd0] sm:$0xff]
        %v2637 = vld [vmem:[#allocation2 + $0xd8] sm:$0xff]
        %v2638 = vld [vmem:[#allocation2 + $0xe0] sm:$0xff]
        %v2639 = vld [vmem:[#allocation2 + $0xe8] sm:$0xff]
        %v2640 = vld [vmem:[#allocation2 + $0xf0] sm:$0xff]
        %v2641 = vld [vmem:[#allocation2 + $0xf8] sm:$0xff]
        %v2642 = vld [vmem:[#allocation3] sm:$0xff]
        %v2643 = vld [vmem:[#allocation3 + $0x8] sm:$0xff]
        %v2644 = vld [vmem:[#allocation3 + $0x10] sm:$0xff]
        %v2645 = vld [vmem:[#allocation3 + $0x18] sm:$0xff]
        %v2646 = vld [vmem:[#allocation3 + $0x20] sm:$0xff]
        %v2647 = vld [vmem:[#allocation3 + $0x28] sm:$0xff]
        %v2648 = vld [vmem:[#allocation3 + $0x30] sm:$0xff]
        %v2649 = vld [vmem:[#allocation3 + $0x38] sm:$0xff]
        %v2650 = vld [vmem:[#allocation3 + $0x40] sm:$0xff]
        %v2651 = vld [vmem:[#allocation3 + $0x48] sm:$0xff]
        %v2652 = vld [vmem:[#allocation3 + $0x50] sm:$0xff]
        %v2653 = vld [vmem:[#allocation3 + $0x58] sm:$0xff]
        %v2654 = vld [vmem:[#allocation3 + $0x60] sm:$0xff]
        %v2655 = vld [vmem:[#allocation3 + $0x68] sm:$0xff]
        %v2656 = vld [vmem:[#allocation3 + $0x70] sm:$0xff]
        %v2657 = vld [vmem:[#allocation3 + $0x78] sm:$0xff]
        %v2658 = vld [vmem:[#allocation3 + $0x80] sm:$0xff]
        %v2659 = vld [vmem:[#allocation3 + $0x88] sm:$0xff]
        %v2660 = vld [vmem:[#allocation3 + $0x90] sm:$0xff]
        %v2661 = vld [vmem:[#allocation3 + $0x98] sm:$0xff]
        %v2662 = vld [vmem:[#allocation3 + $0xa0] sm:$0xff]
        %v2663 = vld [vmem:[#allocation3 + $0xa8] sm:$0xff]
        %v2664 = vld [vmem:[#allocation3 + $0xb0] sm:$0xff]
        %v2665 = vld [vmem:[#allocation3 + $0xb8] sm:$0xff]
        %v2666 = vld [vmem:[#allocation3 + $0xc0] sm:$0xff]
        %v2667 = vld [vmem:[#allocation3 + $0xc8] sm:$0xff]
        %v2668 = vld [vmem:[#allocation3 + $0xd0] sm:$0xff]
        %v2669 = vld [vmem:[#allocation3 + $0xd8] sm:$0xff]
        %v2670 = vld [vmem:[#allocation3 + $0xe0] sm:$0xff]
        %v2671 = vld [vmem:[#allocation3 + $0xe8] sm:$0xff]
        %v2672 = vld [vmem:[#allocation3 + $0xf0] sm:$0xff]
        %v2673 = vld [vmem:[#allocation3 + $0xf8] sm:$0xff]
        %v2674 = vld [vmem:[#allocation4] sm:$0xff]
        %v2675 = vld [vmem:[#allocation4 + $0x8] sm:$0xff]
        %v2676 = vld [vmem:[#allocation4 + $0x10] sm:$0xff]
        %v2677 = vld [vmem:[#allocation4 + $0x18] sm:$0xff]
        %v2678 = vld [vmem:[#allocation4 + $0x20] sm:$0xff]
        %v2679 = vld [vmem:[#allocation4 + $0x28] sm:$0xff]
        %v2680 = vld [vmem:[#allocation4 + $0x30] sm:$0xff]
        %v2681 = vld [vmem:[#allocation4 + $0x38] sm:$0xff]
        %v2682 = vld [vmem:[#allocation4 + $0x40] sm:$0xff]
        %v2683 = vld [vmem:[#allocation4 + $0x48] sm:$0xff]
        %v2684 = vld [vmem:[#allocation4 + $0x50] sm:$0xff]
        %v2685 = vld [vmem:[#allocation4 + $0x58] sm:$0xff]
        %v2686 = vld [vmem:[#allocation4 + $0x60] sm:$0xff]
        %v2687 = vld [vmem:[#allocation4 + $0x68] sm:$0xff]
        %v2688 = vld [vmem:[#allocation4 + $0x70] sm:$0xff]
        %v2689 = vld [vmem:[#allocation4 + $0x78] sm:$0xff]
        %v2690 = vld [vmem:[#allocation4 + $0x80] sm:$0xff]
        %v2691 = vld [vmem:[#allocation4 + $0x88] sm:$0xff]
        %v2692 = vld [vmem:[#allocation4 + $0x90] sm:$0xff]
        %v2693 = vld [vmem:[#allocation4 + $0x98] sm:$0xff]
        %v2694 = vld [vmem:[#allocation4 + $0xa0] sm:$0xff]
        %v2695 = vld [vmem:[#allocation4 + $0xa8] sm:$0xff]
        %v2696 = vld [vmem:[#allocation4 + $0xb0] sm:$0xff]
        %v2697 = vld [vmem:[#allocation4 + $0xb8] sm:$0xff]
        %v2698 = vld [vmem:[#allocation4 + $0xc0] sm:$0xff]
        %v2699 = vld [vmem:[#allocation4 + $0xc8] sm:$0xff]
        %v2700 = vld [vmem:[#allocation4 + $0xd0] sm:$0xff]
        %v2701 = vld [vmem:[#allocation4 + $0xd8] sm:$0xff]
        %v2702 = vld [vmem:[#allocation4 + $0xe0] sm:$0xff]
        %v2703 = vld [vmem:[#allocation4 + $0xe8] sm:$0xff]
        %v2704 = vld [vmem:[#allocation4 + $0xf0] sm:$0xff]
        %v2705 = vld [vmem:[#allocation4 + $0xf8] sm:$0xff]
        %v2707 = vsel %vm460, %v2610, 0
        %v2710 = vsel %vm460, %v2611, 0
        %v2713 = vsel %vm460, %v2612, 0
        %v2716 = vsel %vm460, %v2613, 0
        %v2719 = vsel %vm460, %v2642, 0
        %v2722 = vsel %vm460, %v2643, 0
        %v2725 = vsel %vm460, %v2644, 0
        %v2728 = vsel %vm460, %v2645, 0
        %2730 = vmatprep.subr.bf16.mxu0 0
        %2731 = vmatpush1.bf16.xpose.msra.mxu0 %v2719
        %2732 = vmatprep.subr.bf16.mxu0 0
        %2733 = vmatpush1.bf16.xpose.msra.mxu0 %v2722
        %2734 = vmatprep.subr.bf16.mxu0 0
        %2735 = vmatpush1.bf16.xpose.msra.mxu0 %v2725
        %2736 = vmatprep.subr.bf16.mxu0 0
        %2737 = vmatpush1.bf16.xpose.msra.mxu0 %v2728
        %2738 = vmatprep.subr.bf16.mxu0 0
        %2739 = vmatpush1.bf16.xpose.msra.mxu0 0
        %2740 = vmatprep.subr.bf16.mxu0 0
        %2741 = vmatpush1.bf16.xpose.msra.mxu0 0
        %2742 = vmatprep.subr.bf16.mxu0 0
        %2743 = vmatpush1.bf16.xpose.msra.mxu0 0
        %2744 = vmatprep.subr.bf16.mxu0 0
        %2745 = vmatpush1.bf16.xpose.msra.mxu0 0
        %2746 = vmatprep.subr.bf16.mxu0 0
        %2747 = vmatpush1.bf16.xpose.msra.mxu0 0
        %2748 = vmatprep.subr.bf16.mxu0 0
        %2749 = vmatpush1.bf16.xpose.msra.mxu0 0
        %2750 = vmatprep.subr.bf16.mxu0 0
        %2751 = vmatpush1.bf16.xpose.msra.mxu0 0
        %2752 = vmatprep.subr.bf16.mxu0 0
        %2753 = vmatpush1.bf16.xpose.msra.mxu0 0
        %2754 = vmatprep.subr.bf16.mxu0 0
        %2755 = vmatpush1.bf16.xpose.msra.mxu0 0
        %2756 = vmatprep.subr.bf16.mxu0 0
        %2757 = vmatpush1.bf16.xpose.msra.mxu0 0
        %2758 = vmatprep.subr.bf16.mxu0 0
        %2759 = vmatpush1.bf16.xpose.msra.mxu0 0
        %2760 = vmatprep.subr.bf16.mxu0 0
        %2761 = vmatpush1.bf16.xpose.msra.mxu0 0
        %2762 = vmatprep.mubr.bf16.mxu0 0
        %2763 = vmatmul.mubr.bf16.gmra.mrb[0].mxu0 %v2707
        %v2764 = vpop.f32.mrb[0].mxu0
        %v2765 = vadd.f32 0.0, %v2764
        %v2766 = vpop.f32.mrb[0].mxu0
        %v2767 = vpop.f32.mrb[0].mxu0
        %v2768 = vadd.f32 0.0, %v2767
        %v2769 = vpop.f32.mrb[0].mxu0
        %2770 = vmatprep.mubr.bf16.mxu0 0
        %2771 = vmatmul.mubr.bf16.gmra.mrb[0].mxu0 %v2710
        %v2772 = vpop.f32.mrb[0].mxu0
        %v2773 = vadd.f32 0.0, %v2772
        %v2774 = vpop.f32.mrb[0].mxu0
        %v2775 = vpop.f32.mrb[0].mxu0
        %v2776 = vadd.f32 0.0, %v2775
        %v2777 = vpop.f32.mrb[0].mxu0
        %2778 = vmatprep.mubr.bf16.mxu0 0
        %2779 = vmatmul.mubr.bf16.gmra.mrb[0].mxu0 %v2713
        %v2780 = vpop.f32.mrb[0].mxu0
        %v2781 = vadd.f32 0.0, %v2780
        %v2782 = vpop.f32.mrb[0].mxu0
        %v2783 = vpop.f32.mrb[0].mxu0
        %v2784 = vadd.f32 0.0, %v2783
        %v2785 = vpop.f32.mrb[0].mxu0
        %2786 = vmatprep.mubr.bf16.mxu0 0
        %2787 = vmatmul.mubr.bf16.gmra.mrb[0].mxu0 %v2716
        %v2788 = vpop.f32.mrb[0].mxu0
        %v2789 = vadd.f32 0.0, %v2788
        %v2790 = vpop.f32.mrb[0].mxu0
        %v2791 = vpop.f32.mrb[0].mxu0
        %v2792 = vadd.f32 0.0, %v2791
        %v2793 = vpop.f32.mrb[0].mxu0
        %2794 = vdwg.mxu0
        %v2796 = vsel %vm460, %v2614, 0
        %v2799 = vsel %vm460, %v2615, 0
        %v2802 = vsel %vm460, %v2616, 0
        %v2805 = vsel %vm460, %v2617, 0
        %v2808 = vsel %vm460, %v2646, 0
        %v2811 = vsel %vm460, %v2647, 0
        %v2814 = vsel %vm460, %v2648, 0
        %v2817 = vsel %vm460, %v2649, 0
        %2819 = vmatprep.subr.bf16.mxu0 0
        %2820 = vmatpush1.bf16.xpose.msra.mxu0 %v2808
        %2821 = vmatprep.subr.bf16.mxu0 0
        %2822 = vmatpush1.bf16.xpose.msra.mxu0 %v2811
        %2823 = vmatprep.subr.bf16.mxu0 0
        %2824 = vmatpush1.bf16.xpose.msra.mxu0 %v2814
        %2825 = vmatprep.subr.bf16.mxu0 0
        %2826 = vmatpush1.bf16.xpose.msra.mxu0 %v2817
        %2827 = vmatprep.subr.bf16.mxu0 0
        %2828 = vmatpush1.bf16.xpose.msra.mxu0 0
        %2829 = vmatprep.subr.bf16.mxu0 0
        %2830 = vmatpush1.bf16.xpose.msra.mxu0 0
        %2831 = vmatprep.subr.bf16.mxu0 0
        %2832 = vmatpush1.bf16.xpose.msra.mxu0 0
        %2833 = vmatprep.subr.bf16.mxu0 0
        %2834 = vmatpush1.bf16.xpose.msra.mxu0 0
        %2835 = vmatprep.subr.bf16.mxu0 0
        %2836 = vmatpush1.bf16.xpose.msra.mxu0 0
        %2837 = vmatprep.subr.bf16.mxu0 0
        %2838 = vmatpush1.bf16.xpose.msra.mxu0 0
        %2839 = vmatprep.subr.bf16.mxu0 0
        %2840 = vmatpush1.bf16.xpose.msra.mxu0 0
        %2841 = vmatprep.subr.bf16.mxu0 0
        %2842 = vmatpush1.bf16.xpose.msra.mxu0 0
        %2843 = vmatprep.subr.bf16.mxu0 0
        %2844 = vmatpush1.bf16.xpose.msra.mxu0 0
        %2845 = vmatprep.subr.bf16.mxu0 0
        %2846 = vmatpush1.bf16.xpose.msra.mxu0 0
        %2847 = vmatprep.subr.bf16.mxu0 0
        %2848 = vmatpush1.bf16.xpose.msra.mxu0 0
        %2849 = vmatprep.subr.bf16.mxu0 0
        %2850 = vmatpush1.bf16.xpose.msra.mxu0 0
        %2851 = vmatprep.mubr.bf16.mxu0 0
        %2852 = vmatmul.mubr.bf16.gmra.mrb[0].mxu0 %v2796
        %v2853 = vpop.f32.mrb[0].mxu0
        %v2854 = vadd.f32 0.0, %v2853
        %v2855 = vpop.f32.mrb[0].mxu0
        %v2856 = vpop.f32.mrb[0].mxu0
        %v2857 = vadd.f32 0.0, %v2856
        %v2858 = vpop.f32.mrb[0].mxu0
        %2859 = vmatprep.mubr.bf16.mxu0 0
        %2860 = vmatmul.mubr.bf16.gmra.mrb[0].mxu0 %v2799
        %v2861 = vpop.f32.mrb[0].mxu0
        %v2862 = vadd.f32 0.0, %v2861
        %v2863 = vpop.f32.mrb[0].mxu0
        %v2864 = vpop.f32.mrb[0].mxu0
        %v2865 = vadd.f32 0.0, %v2864
        %v2866 = vpop.f32.mrb[0].mxu0
        %2867 = vmatprep.mubr.bf16.mxu0 0
        %2868 = vmatmul.mubr.bf16.gmra.mrb[0].mxu0 %v2802
        %v2869 = vpop.f32.mrb[0].mxu0
        %v2870 = vadd.f32 0.0, %v2869
        %v2871 = vpop.f32.mrb[0].mxu0
        %v2872 = vpop.f32.mrb[0].mxu0
        %v2873 = vadd.f32 0.0, %v2872
        %v2874 = vpop.f32.mrb[0].mxu0
        %2875 = vmatprep.mubr.bf16.mxu0 0
        %2876 = vmatmul.mubr.bf16.gmra.mrb[0].mxu0 %v2805
        %v2877 = vpop.f32.mrb[0].mxu0
        %v2878 = vadd.f32 0.0, %v2877
        %v2879 = vpop.f32.mrb[0].mxu0
        %v2880 = vpop.f32.mrb[0].mxu0
        %v2881 = vadd.f32 0.0, %v2880
        %v2882 = vpop.f32.mrb[0].mxu0
        %2883 = vdwg.mxu0
        %v2885 = vsel %vm460, %v2618, 0
        %v2888 = vsel %vm460, %v2619, 0
        %v2891 = vsel %vm460, %v2620, 0
        %v2894 = vsel %vm460, %v2621, 0
        %v2897 = vsel %vm460, %v2650, 0
        %v2900 = vsel %vm460, %v2651, 0
        %v2903 = vsel %vm460, %v2652, 0
        %v2906 = vsel %vm460, %v2653, 0
        %2908 = vmatprep.subr.bf16.mxu0 0
        %2909 = vmatpush1.bf16.xpose.msra.mxu0 %v2897
        %2910 = vmatprep.subr.bf16.mxu0 0
        %2911 = vmatpush1.bf16.xpose.msra.mxu0 %v2900
        %2912 = vmatprep.subr.bf16.mxu0 0
        %2913 = vmatpush1.bf16.xpose.msra.mxu0 %v2903
        %2914 = vmatprep.subr.bf16.mxu0 0
        %2915 = vmatpush1.bf16.xpose.msra.mxu0 %v2906
        %2916 = vmatprep.subr.bf16.mxu0 0
        %2917 = vmatpush1.bf16.xpose.msra.mxu0 0
        %2918 = vmatprep.subr.bf16.mxu0 0
        %2919 = vmatpush1.bf16.xpose.msra.mxu0 0
        %2920 = vmatprep.subr.bf16.mxu0 0
        %2921 = vmatpush1.bf16.xpose.msra.mxu0 0
        %2922 = vmatprep.subr.bf16.mxu0 0
        %2923 = vmatpush1.bf16.xpose.msra.mxu0 0
        %2924 = vmatprep.subr.bf16.mxu0 0
        %2925 = vmatpush1.bf16.xpose.msra.mxu0 0
        %2926 = vmatprep.subr.bf16.mxu0 0
        %2927 = vmatpush1.bf16.xpose.msra.mxu0 0
        %2928 = vmatprep.subr.bf16.mxu0 0
        %2929 = vmatpush1.bf16.xpose.msra.mxu0 0
        %2930 = vmatprep.subr.bf16.mxu0 0
        %2931 = vmatpush1.bf16.xpose.msra.mxu0 0
        %2932 = vmatprep.subr.bf16.mxu0 0
        %2933 = vmatpush1.bf16.xpose.msra.mxu0 0
        %2934 = vmatprep.subr.bf16.mxu0 0
        %2935 = vmatpush1.bf16.xpose.msra.mxu0 0
        %2936 = vmatprep.subr.bf16.mxu0 0
        %2937 = vmatpush1.bf16.xpose.msra.mxu0 0
        %2938 = vmatprep.subr.bf16.mxu0 0
        %2939 = vmatpush1.bf16.xpose.msra.mxu0 0
        %2940 = vmatprep.mubr.bf16.mxu0 0
        %2941 = vmatmul.mubr.bf16.gmra.mrb[0].mxu0 %v2885
        %v2942 = vpop.f32.mrb[0].mxu0
        %v2943 = vadd.f32 0.0, %v2942
        %v2944 = vpop.f32.mrb[0].mxu0
        %v2945 = vpop.f32.mrb[0].mxu0
        %v2946 = vadd.f32 0.0, %v2945
        %v2947 = vpop.f32.mrb[0].mxu0
        %2948 = vmatprep.mubr.bf16.mxu0 0
        %2949 = vmatmul.mubr.bf16.gmra.mrb[0].mxu0 %v2888
        %v2950 = vpop.f32.mrb[0].mxu0
        %v2951 = vadd.f32 0.0, %v2950
        %v2952 = vpop.f32.mrb[0].mxu0
        %v2953 = vpop.f32.mrb[0].mxu0
        %v2954 = vadd.f32 0.0, %v2953
        %v2955 = vpop.f32.mrb[0].mxu0
        %2956 = vmatprep.mubr.bf16.mxu0 0
        %2957 = vmatmul.mubr.bf16.gmra.mrb[0].mxu0 %v2891
        %v2958 = vpop.f32.mrb[0].mxu0
        %v2959 = vadd.f32 0.0, %v2958
        %v2960 = vpop.f32.mrb[0].mxu0
        %v2961 = vpop.f32.mrb[0].mxu0
        %v2962 = vadd.f32 0.0, %v2961
        %v2963 = vpop.f32.mrb[0].mxu0
        %2964 = vmatprep.mubr.bf16.mxu0 0
        %2965 = vmatmul.mubr.bf16.gmra.mrb[0].mxu0 %v2894
        %v2966 = vpop.f32.mrb[0].mxu0
        %v2967 = vadd.f32 0.0, %v2966
        %v2968 = vpop.f32.mrb[0].mxu0
        %v2969 = vpop.f32.mrb[0].mxu0
        %v2970 = vadd.f32 0.0, %v2969
        %v2971 = vpop.f32.mrb[0].mxu0
        %2972 = vdwg.mxu0
        %v2974 = vsel %vm460, %v2622, 0
        %v2977 = vsel %vm460, %v2623, 0
        %v2980 = vsel %vm460, %v2624, 0
        %v2983 = vsel %vm460, %v2625, 0
        %v2986 = vsel %vm460, %v2654, 0
        %v2989 = vsel %vm460, %v2655, 0
        %v2992 = vsel %vm460, %v2656, 0
        %v2995 = vsel %vm460, %v2657, 0
        %2997 = vmatprep.subr.bf16.mxu0 0
        %2998 = vmatpush1.bf16.xpose.msra.mxu0 %v2986
        %2999 = vmatprep.subr.bf16.mxu0 0
        %3000 = vmatpush1.bf16.xpose.msra.mxu0 %v2989
        %3001 = vmatprep.subr.bf16.mxu0 0
        %3002 = vmatpush1.bf16.xpose.msra.mxu0 %v2992
        %3003 = vmatprep.subr.bf16.mxu0 0
        %3004 = vmatpush1.bf16.xpose.msra.mxu0 %v2995
        %3005 = vmatprep.subr.bf16.mxu0 0
        %3006 = vmatpush1.bf16.xpose.msra.mxu0 0
        %3007 = vmatprep.subr.bf16.mxu0 0
        %3008 = vmatpush1.bf16.xpose.msra.mxu0 0
        %3009 = vmatprep.subr.bf16.mxu0 0
        %3010 = vmatpush1.bf16.xpose.msra.mxu0 0
        %3011 = vmatprep.subr.bf16.mxu0 0
        %3012 = vmatpush1.bf16.xpose.msra.mxu0 0
        %3013 = vmatprep.subr.bf16.mxu0 0
        %3014 = vmatpush1.bf16.xpose.msra.mxu0 0
        %3015 = vmatprep.subr.bf16.mxu0 0
        %3016 = vmatpush1.bf16.xpose.msra.mxu0 0
        %3017 = vmatprep.subr.bf16.mxu0 0
        %3018 = vmatpush1.bf16.xpose.msra.mxu0 0
        %3019 = vmatprep.subr.bf16.mxu0 0
        %3020 = vmatpush1.bf16.xpose.msra.mxu0 0
        %3021 = vmatprep.subr.bf16.mxu0 0
        %3022 = vmatpush1.bf16.xpose.msra.mxu0 0
        %3023 = vmatprep.subr.bf16.mxu0 0
        %3024 = vmatpush1.bf16.xpose.msra.mxu0 0
        %3025 = vmatprep.subr.bf16.mxu0 0
        %3026 = vmatpush1.bf16.xpose.msra.mxu0 0
        %3027 = vmatprep.subr.bf16.mxu0 0
        %3028 = vmatpush1.bf16.xpose.msra.mxu0 0
        %3029 = vmatprep.mubr.bf16.mxu0 0
        %3030 = vmatmul.mubr.bf16.gmra.mrb[0].mxu0 %v2974
        %v3031 = vpop.f32.mrb[0].mxu0
        %v3032 = vadd.f32 0.0, %v3031
        %v3033 = vpop.f32.mrb[0].mxu0
        %v3034 = vpop.f32.mrb[0].mxu0
        %v3035 = vadd.f32 0.0, %v3034
        %v3036 = vpop.f32.mrb[0].mxu0
        %3037 = vmatprep.mubr.bf16.mxu0 0
        %3038 = vmatmul.mubr.bf16.gmra.mrb[0].mxu0 %v2977
        %v3039 = vpop.f32.mrb[0].mxu0
        %v3040 = vadd.f32 0.0, %v3039
        %v3041 = vpop.f32.mrb[0].mxu0
        %v3042 = vpop.f32.mrb[0].mxu0
        %v3043 = vadd.f32 0.0, %v3042
        %v3044 = vpop.f32.mrb[0].mxu0
        %3045 = vmatprep.mubr.bf16.mxu0 0
        %3046 = vmatmul.mubr.bf16.gmra.mrb[0].mxu0 %v2980
        %v3047 = vpop.f32.mrb[0].mxu0
        %v3048 = vadd.f32 0.0, %v3047
        %v3049 = vpop.f32.mrb[0].mxu0
        %v3050 = vpop.f32.mrb[0].mxu0
        %v3051 = vadd.f32 0.0, %v3050
        %v3052 = vpop.f32.mrb[0].mxu0
        %3053 = vmatprep.mubr.bf16.mxu0 0
        %3054 = vmatmul.mubr.bf16.gmra.mrb[0].mxu0 %v2983
        %v3055 = vpop.f32.mrb[0].mxu0
        %v3056 = vadd.f32 0.0, %v3055
        %v3057 = vpop.f32.mrb[0].mxu0
        %v3058 = vpop.f32.mrb[0].mxu0
        %v3059 = vadd.f32 0.0, %v3058
        %v3060 = vpop.f32.mrb[0].mxu0
        %3061 = vdwg.mxu0
        %v3063 = vsel %vm460, %v2626, 0
        %v3066 = vsel %vm460, %v2627, 0
        %v3069 = vsel %vm460, %v2628, 0
        %v3072 = vsel %vm460, %v2629, 0
        %v3075 = vsel %vm460, %v2658, 0
        %v3078 = vsel %vm460, %v2659, 0
        %v3081 = vsel %vm460, %v2660, 0
        %v3084 = vsel %vm460, %v2661, 0
        %3086 = vmatprep.subr.bf16.mxu0 0
        %3087 = vmatpush1.bf16.xpose.msra.mxu0 %v3075
        %3088 = vmatprep.subr.bf16.mxu0 0
        %3089 = vmatpush1.bf16.xpose.msra.mxu0 %v3078
        %3090 = vmatprep.subr.bf16.mxu0 0
        %3091 = vmatpush1.bf16.xpose.msra.mxu0 %v3081
        %3092 = vmatprep.subr.bf16.mxu0 0
        %3093 = vmatpush1.bf16.xpose.msra.mxu0 %v3084
        %3094 = vmatprep.subr.bf16.mxu0 0
        %3095 = vmatpush1.bf16.xpose.msra.mxu0 0
        %3096 = vmatprep.subr.bf16.mxu0 0
        %3097 = vmatpush1.bf16.xpose.msra.mxu0 0
        %3098 = vmatprep.subr.bf16.mxu0 0
        %3099 = vmatpush1.bf16.xpose.msra.mxu0 0
        %3100 = vmatprep.subr.bf16.mxu0 0
        %3101 = vmatpush1.bf16.xpose.msra.mxu0 0
        %3102 = vmatprep.subr.bf16.mxu0 0
        %3103 = vmatpush1.bf16.xpose.msra.mxu0 0
        %3104 = vmatprep.subr.bf16.mxu0 0
        %3105 = vmatpush1.bf16.xpose.msra.mxu0 0
        %3106 = vmatprep.subr.bf16.mxu0 0
        %3107 = vmatpush1.bf16.xpose.msra.mxu0 0
        %3108 = vmatprep.subr.bf16.mxu0 0
        %3109 = vmatpush1.bf16.xpose.msra.mxu0 0
        %3110 = vmatprep.subr.bf16.mxu0 0
        %3111 = vmatpush1.bf16.xpose.msra.mxu0 0
        %3112 = vmatprep.subr.bf16.mxu0 0
        %3113 = vmatpush1.bf16.xpose.msra.mxu0 0
        %3114 = vmatprep.subr.bf16.mxu0 0
        %3115 = vmatpush1.bf16.xpose.msra.mxu0 0
        %3116 = vmatprep.subr.bf16.mxu0 0
        %3117 = vmatpush1.bf16.xpose.msra.mxu0 0
        %3118 = vmatprep.mubr.bf16.mxu0 0
        %3119 = vmatmul.mubr.bf16.gmra.mrb[0].mxu0 %v3063
        %v3120 = vpop.f32.mrb[0].mxu0
        %v3121 = vadd.f32 0.0, %v3120
        %v3122 = vpop.f32.mrb[0].mxu0
        %v3123 = vpop.f32.mrb[0].mxu0
        %v3124 = vadd.f32 0.0, %v3123
        %v3125 = vpop.f32.mrb[0].mxu0
        %3126 = vmatprep.mubr.bf16.mxu0 0
        %3127 = vmatmul.mubr.bf16.gmra.mrb[0].mxu0 %v3066
        %v3128 = vpop.f32.mrb[0].mxu0
        %v3129 = vadd.f32 0.0, %v3128
        %v3130 = vpop.f32.mrb[0].mxu0
        %v3131 = vpop.f32.mrb[0].mxu0
        %v3132 = vadd.f32 0.0, %v3131
        %v3133 = vpop.f32.mrb[0].mxu0
        %3134 = vmatprep.mubr.bf16.mxu0 0
        %3135 = vmatmul.mubr.bf16.gmra.mrb[0].mxu0 %v3069
        %v3136 = vpop.f32.mrb[0].mxu0
        %v3137 = vadd.f32 0.0, %v3136
        %v3138 = vpop.f32.mrb[0].mxu0
        %v3139 = vpop.f32.mrb[0].mxu0
        %v3140 = vadd.f32 0.0, %v3139
        %v3141 = vpop.f32.mrb[0].mxu0
        %3142 = vmatprep.mubr.bf16.mxu0 0
        %3143 = vmatmul.mubr.bf16.gmra.mrb[0].mxu0 %v3072
        %v3144 = vpop.f32.mrb[0].mxu0
        %v3145 = vadd.f32 0.0, %v3144
        %v3146 = vpop.f32.mrb[0].mxu0
        %v3147 = vpop.f32.mrb[0].mxu0
        %v3148 = vadd.f32 0.0, %v3147
        %v3149 = vpop.f32.mrb[0].mxu0
        %3150 = vdwg.mxu0
        %v3152 = vsel %vm460, %v2630, 0
        %v3155 = vsel %vm460, %v2631, 0
        %v3158 = vsel %vm460, %v2632, 0
        %v3161 = vsel %vm460, %v2633, 0
        %v3164 = vsel %vm460, %v2662, 0
        %v3167 = vsel %vm460, %v2663, 0
        %v3170 = vsel %vm460, %v2664, 0
        %v3173 = vsel %vm460, %v2665, 0
        %3175 = vmatprep.subr.bf16.mxu0 0
        %3176 = vmatpush1.bf16.xpose.msra.mxu0 %v3164
        %3177 = vmatprep.subr.bf16.mxu0 0
        %3178 = vmatpush1.bf16.xpose.msra.mxu0 %v3167
        %3179 = vmatprep.subr.bf16.mxu0 0
        %3180 = vmatpush1.bf16.xpose.msra.mxu0 %v3170
        %3181 = vmatprep.subr.bf16.mxu0 0
        %3182 = vmatpush1.bf16.xpose.msra.mxu0 %v3173
        %3183 = vmatprep.subr.bf16.mxu0 0
        %3184 = vmatpush1.bf16.xpose.msra.mxu0 0
        %3185 = vmatprep.subr.bf16.mxu0 0
        %3186 = vmatpush1.bf16.xpose.msra.mxu0 0
        %3187 = vmatprep.subr.bf16.mxu0 0
        %3188 = vmatpush1.bf16.xpose.msra.mxu0 0
        %3189 = vmatprep.subr.bf16.mxu0 0
        %3190 = vmatpush1.bf16.xpose.msra.mxu0 0
        %3191 = vmatprep.subr.bf16.mxu0 0
        %3192 = vmatpush1.bf16.xpose.msra.mxu0 0
        %3193 = vmatprep.subr.bf16.mxu0 0
        %3194 = vmatpush1.bf16.xpose.msra.mxu0 0
        %3195 = vmatprep.subr.bf16.mxu0 0
        %3196 = vmatpush1.bf16.xpose.msra.mxu0 0
        %3197 = vmatprep.subr.bf16.mxu0 0
        %3198 = vmatpush1.bf16.xpose.msra.mxu0 0
        %3199 = vmatprep.subr.bf16.mxu0 0
        %3200 = vmatpush1.bf16.xpose.msra.mxu0 0
        %3201 = vmatprep.subr.bf16.mxu0 0
        %3202 = vmatpush1.bf16.xpose.msra.mxu0 0
        %3203 = vmatprep.subr.bf16.mxu0 0
        %3204 = vmatpush1.bf16.xpose.msra.mxu0 0
        %3205 = vmatprep.subr.bf16.mxu0 0
        %3206 = vmatpush1.bf16.xpose.msra.mxu0 0
        %3207 = vmatprep.mubr.bf16.mxu0 0
        %3208 = vmatmul.mubr.bf16.gmra.mrb[0].mxu0 %v3152
        %v3209 = vpop.f32.mrb[0].mxu0
        %v3210 = vadd.f32 0.0, %v3209
        %v3211 = vpop.f32.mrb[0].mxu0
        %v3212 = vpop.f32.mrb[0].mxu0
        %v3213 = vadd.f32 0.0, %v3212
        %v3214 = vpop.f32.mrb[0].mxu0
        %3215 = vmatprep.mubr.bf16.mxu0 0
        %3216 = vmatmul.mubr.bf16.gmra.mrb[0].mxu0 %v3155
        %v3217 = vpop.f32.mrb[0].mxu0
        %v3218 = vadd.f32 0.0, %v3217
        %v3219 = vpop.f32.mrb[0].mxu0
        %v3220 = vpop.f32.mrb[0].mxu0
        %v3221 = vadd.f32 0.0, %v3220
        %v3222 = vpop.f32.mrb[0].mxu0
        %3223 = vmatprep.mubr.bf16.mxu0 0
        %3224 = vmatmul.mubr.bf16.gmra.mrb[0].mxu0 %v3158
        %v3225 = vpop.f32.mrb[0].mxu0
        %v3226 = vadd.f32 0.0, %v3225
        %v3227 = vpop.f32.mrb[0].mxu0
        %v3228 = vpop.f32.mrb[0].mxu0
        %v3229 = vadd.f32 0.0, %v3228
        %v3230 = vpop.f32.mrb[0].mxu0
        %3231 = vmatprep.mubr.bf16.mxu0 0
        %3232 = vmatmul.mubr.bf16.gmra.mrb[0].mxu0 %v3161
        %v3233 = vpop.f32.mrb[0].mxu0
        %v3234 = vadd.f32 0.0, %v3233
        %v3235 = vpop.f32.mrb[0].mxu0
        %v3236 = vpop.f32.mrb[0].mxu0
        %v3237 = vadd.f32 0.0, %v3236
        %v3238 = vpop.f32.mrb[0].mxu0
        %3239 = vdwg.mxu0
        %v3241 = vsel %vm460, %v2634, 0
        %v3244 = vsel %vm460, %v2635, 0
        %v3247 = vsel %vm460, %v2636, 0
        %v3250 = vsel %vm460, %v2637, 0
        %v3253 = vsel %vm460, %v2666, 0
        %v3256 = vsel %vm460, %v2667, 0
        %v3259 = vsel %vm460, %v2668, 0
        %v3262 = vsel %vm460, %v2669, 0
        %3264 = vmatprep.subr.bf16.mxu0 0
        %3265 = vmatpush1.bf16.xpose.msra.mxu0 %v3253
        %3266 = vmatprep.subr.bf16.mxu0 0
        %3267 = vmatpush1.bf16.xpose.msra.mxu0 %v3256
        %3268 = vmatprep.subr.bf16.mxu0 0
        %3269 = vmatpush1.bf16.xpose.msra.mxu0 %v3259
        %3270 = vmatprep.subr.bf16.mxu0 0
        %3271 = vmatpush1.bf16.xpose.msra.mxu0 %v3262
        %3272 = vmatprep.subr.bf16.mxu0 0
        %3273 = vmatpush1.bf16.xpose.msra.mxu0 0
        %3274 = vmatprep.subr.bf16.mxu0 0
        %3275 = vmatpush1.bf16.xpose.msra.mxu0 0
        %3276 = vmatprep.subr.bf16.mxu0 0
        %3277 = vmatpush1.bf16.xpose.msra.mxu0 0
        %3278 = vmatprep.subr.bf16.mxu0 0
        %3279 = vmatpush1.bf16.xpose.msra.mxu0 0
        %3280 = vmatprep.subr.bf16.mxu0 0
        %3281 = vmatpush1.bf16.xpose.msra.mxu0 0
        %3282 = vmatprep.subr.bf16.mxu0 0
        %3283 = vmatpush1.bf16.xpose.msra.mxu0 0
        %3284 = vmatprep.subr.bf16.mxu0 0
        %3285 = vmatpush1.bf16.xpose.msra.mxu0 0
        %3286 = vmatprep.subr.bf16.mxu0 0
        %3287 = vmatpush1.bf16.xpose.msra.mxu0 0
        %3288 = vmatprep.subr.bf16.mxu0 0
        %3289 = vmatpush1.bf16.xpose.msra.mxu0 0
        %3290 = vmatprep.subr.bf16.mxu0 0
        %3291 = vmatpush1.bf16.xpose.msra.mxu0 0
        %3292 = vmatprep.subr.bf16.mxu0 0
        %3293 = vmatpush1.bf16.xpose.msra.mxu0 0
        %3294 = vmatprep.subr.bf16.mxu0 0
        %3295 = vmatpush1.bf16.xpose.msra.mxu0 0
        %3296 = vmatprep.mubr.bf16.mxu0 0
        %3297 = vmatmul.mubr.bf16.gmra.mrb[0].mxu0 %v3241
        %v3298 = vpop.f32.mrb[0].mxu0
        %v3299 = vadd.f32 0.0, %v3298
        %v3300 = vpop.f32.mrb[0].mxu0
        %v3301 = vpop.f32.mrb[0].mxu0
        %v3302 = vadd.f32 0.0, %v3301
        %v3303 = vpop.f32.mrb[0].mxu0
        %3304 = vmatprep.mubr.bf16.mxu0 0
        %3305 = vmatmul.mubr.bf16.gmra.mrb[0].mxu0 %v3244
        %v3306 = vpop.f32.mrb[0].mxu0
        %v3307 = vadd.f32 0.0, %v3306
        %v3308 = vpop.f32.mrb[0].mxu0
        %v3309 = vpop.f32.mrb[0].mxu0
        %v3310 = vadd.f32 0.0, %v3309
        %v3311 = vpop.f32.mrb[0].mxu0
        %3312 = vmatprep.mubr.bf16.mxu0 0
        %3313 = vmatmul.mubr.bf16.gmra.mrb[0].mxu0 %v3247
        %v3314 = vpop.f32.mrb[0].mxu0
        %v3315 = vadd.f32 0.0, %v3314
        %v3316 = vpop.f32.mrb[0].mxu0
        %v3317 = vpop.f32.mrb[0].mxu0
        %v3318 = vadd.f32 0.0, %v3317
        %v3319 = vpop.f32.mrb[0].mxu0
        %3320 = vmatprep.mubr.bf16.mxu0 0
        %3321 = vmatmul.mubr.bf16.gmra.mrb[0].mxu0 %v3250
        %v3322 = vpop.f32.mrb[0].mxu0
        %v3323 = vadd.f32 0.0, %v3322
        %v3324 = vpop.f32.mrb[0].mxu0
        %v3325 = vpop.f32.mrb[0].mxu0
        %v3326 = vadd.f32 0.0, %v3325
        %v3327 = vpop.f32.mrb[0].mxu0
        %3328 = vdwg.mxu0
        %v3330 = vsel %vm460, %v2638, 0
        %v3333 = vsel %vm460, %v2639, 0
        %v3336 = vsel %vm460, %v2640, 0
        %v3339 = vsel %vm460, %v2641, 0
        %v3342 = vsel %vm460, %v2670, 0
        %v3345 = vsel %vm460, %v2671, 0
        %v3348 = vsel %vm460, %v2672, 0
        %v3351 = vsel %vm460, %v2673, 0
        %3353 = vmatprep.subr.bf16.mxu0 0
        %3354 = vmatpush1.bf16.xpose.msra.mxu0 %v3342
        %3355 = vmatprep.subr.bf16.mxu0 0
        %3356 = vmatpush1.bf16.xpose.msra.mxu0 %v3345
        %3357 = vmatprep.subr.bf16.mxu0 0
        %3358 = vmatpush1.bf16.xpose.msra.mxu0 %v3348
        %3359 = vmatprep.subr.bf16.mxu0 0
        %3360 = vmatpush1.bf16.xpose.msra.mxu0 %v3351
        %3361 = vmatprep.subr.bf16.mxu0 0
        %3362 = vmatpush1.bf16.xpose.msra.mxu0 0
        %3363 = vmatprep.subr.bf16.mxu0 0
        %3364 = vmatpush1.bf16.xpose.msra.mxu0 0
        %3365 = vmatprep.subr.bf16.mxu0 0
        %3366 = vmatpush1.bf16.xpose.msra.mxu0 0
        %3367 = vmatprep.subr.bf16.mxu0 0
        %3368 = vmatpush1.bf16.xpose.msra.mxu0 0
        %3369 = vmatprep.subr.bf16.mxu0 0
        %3370 = vmatpush1.bf16.xpose.msra.mxu0 0
        %3371 = vmatprep.subr.bf16.mxu0 0
        %3372 = vmatpush1.bf16.xpose.msra.mxu0 0
        %3373 = vmatprep.subr.bf16.mxu0 0
        %3374 = vmatpush1.bf16.xpose.msra.mxu0 0
        %3375 = vmatprep.subr.bf16.mxu0 0
        %3376 = vmatpush1.bf16.xpose.msra.mxu0 0
        %3377 = vmatprep.subr.bf16.mxu0 0
        %3378 = vmatpush1.bf16.xpose.msra.mxu0 0
        %3379 = vmatprep.subr.bf16.mxu0 0
        %3380 = vmatpush1.bf16.xpose.msra.mxu0 0
        %3381 = vmatprep.subr.bf16.mxu0 0
        %3382 = vmatpush1.bf16.xpose.msra.mxu0 0
        %3383 = vmatprep.subr.bf16.mxu0 0
        %3384 = vmatpush1.bf16.xpose.msra.mxu0 0
        %3385 = vmatprep.mubr.bf16.mxu0 0
        %3386 = vmatmul.mubr.bf16.gmra.mrb[0].mxu0 %v3330
        %v3387 = vpop.f32.mrb[0].mxu0
        %v3388 = vadd.f32 0.0, %v3387
        %v3389 = vpop.f32.mrb[0].mxu0
        %v3390 = vpop.f32.mrb[0].mxu0
        %v3391 = vadd.f32 0.0, %v3390
        %v3392 = vpop.f32.mrb[0].mxu0
        %3393 = vmatprep.mubr.bf16.mxu0 0
        %3394 = vmatmul.mubr.bf16.gmra.mrb[0].mxu0 %v3333
        %v3395 = vpop.f32.mrb[0].mxu0
        %v3396 = vadd.f32 0.0, %v3395
        %v3397 = vpop.f32.mrb[0].mxu0
        %v3398 = vpop.f32.mrb[0].mxu0
        %v3399 = vadd.f32 0.0, %v3398
        %v3400 = vpop.f32.mrb[0].mxu0
        %3401 = vmatprep.mubr.bf16.mxu0 0
        %3402 = vmatmul.mubr.bf16.gmra.mrb[0].mxu0 %v3336
        %v3403 = vpop.f32.mrb[0].mxu0
        %v3404 = vadd.f32 0.0, %v3403
        %v3405 = vpop.f32.mrb[0].mxu0
        %v3406 = vpop.f32.mrb[0].mxu0
        %v3407 = vadd.f32 0.0, %v3406
        %v3408 = vpop.f32.mrb[0].mxu0
        %3409 = vmatprep.mubr.bf16.mxu0 0
        %3410 = vmatmul.mubr.bf16.gmra.mrb[0].mxu0 %v3339
        %v3411 = vpop.f32.mrb[0].mxu0
        %v3412 = vadd.f32 0.0, %v3411
        %v3413 = vpop.f32.mrb[0].mxu0
        %v3414 = vpop.f32.mrb[0].mxu0
        %v3415 = vadd.f32 0.0, %v3414
        %v3416 = vpop.f32.mrb[0].mxu0
        %3417 = vdwg.mxu0
        %vm3418 = vcmask 523264
        %v3419 = vsel %vm3418, %v2765, -inf
        %3420 = vmax.xlane.f32.xlu0 %v3419
        %v3421 = vpop.xlane.xlu0 %3420
        %v3422 = vsel %vm3418, %v2768, -inf
        %3423 = vmax.xlane.f32.xlu0 %v3422
        %v3424 = vpop.xlane.xlu0 %3423
        %v3425 = vsel %vm3418, %v2773, -inf
        %3426 = vmax.xlane.f32.xlu0 %v3425
        %v3427 = vpop.xlane.xlu0 %3426
        %v3428 = vsel %vm3418, %v2776, -inf
        %3429 = vmax.xlane.f32.xlu0 %v3428
        %v3430 = vpop.xlane.xlu0 %3429
        %v3431 = vsel %vm3418, %v2781, -inf
        %3432 = vmax.xlane.f32.xlu0 %v3431
        %v3433 = vpop.xlane.xlu0 %3432
        %v3434 = vsel %vm3418, %v2784, -inf
        %3435 = vmax.xlane.f32.xlu0 %v3434
        %v3436 = vpop.xlane.xlu0 %3435
        %v3437 = vsel %vm3418, %v2789, -inf
        %3438 = vmax.xlane.f32.xlu0 %v3437
        %v3439 = vpop.xlane.xlu0 %3438
        %v3440 = vsel %vm3418, %v2792, -inf
        %3441 = vmax.xlane.f32.xlu0 %v3440
        %v3442 = vpop.xlane.xlu0 %3441
        %v3443 = vsel %vm3418, %v2854, -inf
        %3444 = vmax.xlane.f32.xlu0 %v3443
        %v3445 = vpop.xlane.xlu0 %3444
        %v3446 = vsel %vm3418, %v2857, -inf
        %3447 = vmax.xlane.f32.xlu0 %v3446
        %v3448 = vpop.xlane.xlu0 %3447
        %v3449 = vsel %vm3418, %v2862, -inf
        %3450 = vmax.xlane.f32.xlu0 %v3449
        %v3451 = vpop.xlane.xlu0 %3450
        %v3452 = vsel %vm3418, %v2865, -inf
        %3453 = vmax.xlane.f32.xlu0 %v3452
        %v3454 = vpop.xlane.xlu0 %3453
        %v3455 = vsel %vm3418, %v2870, -inf
        %3456 = vmax.xlane.f32.xlu0 %v3455
        %v3457 = vpop.xlane.xlu0 %3456
        %v3458 = vsel %vm3418, %v2873, -inf
        %3459 = vmax.xlane.f32.xlu0 %v3458
        %v3460 = vpop.xlane.xlu0 %3459
        %v3461 = vsel %vm3418, %v2878, -inf
        %3462 = vmax.xlane.f32.xlu0 %v3461
        %v3463 = vpop.xlane.xlu0 %3462
        %v3464 = vsel %vm3418, %v2881, -inf
        %3465 = vmax.xlane.f32.xlu0 %v3464
        %v3466 = vpop.xlane.xlu0 %3465
        %v3467 = vsel %vm3418, %v2943, -inf
        %3468 = vmax.xlane.f32.xlu0 %v3467
        %v3469 = vpop.xlane.xlu0 %3468
        %v3470 = vsel %vm3418, %v2946, -inf
        %3471 = vmax.xlane.f32.xlu0 %v3470
        %v3472 = vpop.xlane.xlu0 %3471
        %v3473 = vsel %vm3418, %v2951, -inf
        %3474 = vmax.xlane.f32.xlu0 %v3473
        %v3475 = vpop.xlane.xlu0 %3474
        %v3476 = vsel %vm3418, %v2954, -inf
        %3477 = vmax.xlane.f32.xlu0 %v3476
        %v3478 = vpop.xlane.xlu0 %3477
        %v3479 = vsel %vm3418, %v2959, -inf
        %3480 = vmax.xlane.f32.xlu0 %v3479
        %v3481 = vpop.xlane.xlu0 %3480
        %v3482 = vsel %vm3418, %v2962, -inf
        %3483 = vmax.xlane.f32.xlu0 %v3482
        %v3484 = vpop.xlane.xlu0 %3483
        %v3485 = vsel %vm3418, %v2967, -inf
        %3486 = vmax.xlane.f32.xlu0 %v3485
        %v3487 = vpop.xlane.xlu0 %3486
        %v3488 = vsel %vm3418, %v2970, -inf
        %3489 = vmax.xlane.f32.xlu0 %v3488
        %v3490 = vpop.xlane.xlu0 %3489
        %v3491 = vsel %vm3418, %v3032, -inf
        %3492 = vmax.xlane.f32.xlu0 %v3491
        %v3493 = vpop.xlane.xlu0 %3492
        %v3494 = vsel %vm3418, %v3035, -inf
        %3495 = vmax.xlane.f32.xlu0 %v3494
        %v3496 = vpop.xlane.xlu0 %3495
        %v3497 = vsel %vm3418, %v3040, -inf
        %3498 = vmax.xlane.f32.xlu0 %v3497
        %v3499 = vpop.xlane.xlu0 %3498
        %v3500 = vsel %vm3418, %v3043, -inf
        %3501 = vmax.xlane.f32.xlu0 %v3500
        %v3502 = vpop.xlane.xlu0 %3501
        %v3503 = vsel %vm3418, %v3048, -inf
        %3504 = vmax.xlane.f32.xlu0 %v3503
        %v3505 = vpop.xlane.xlu0 %3504
        %v3506 = vsel %vm3418, %v3051, -inf
        %3507 = vmax.xlane.f32.xlu0 %v3506
        %v3508 = vpop.xlane.xlu0 %3507
        %v3509 = vsel %vm3418, %v3056, -inf
        %3510 = vmax.xlane.f32.xlu0 %v3509
        %v3511 = vpop.xlane.xlu0 %3510
        %v3512 = vsel %vm3418, %v3059, -inf
        %3513 = vmax.xlane.f32.xlu0 %v3512
        %v3514 = vpop.xlane.xlu0 %3513
        %v3515 = vsel %vm3418, %v3121, -inf
        %3516 = vmax.xlane.f32.xlu0 %v3515
        %v3517 = vpop.xlane.xlu0 %3516
        %v3518 = vsel %vm3418, %v3124, -inf
        %3519 = vmax.xlane.f32.xlu0 %v3518
        %v3520 = vpop.xlane.xlu0 %3519
        %v3521 = vsel %vm3418, %v3129, -inf
        %3522 = vmax.xlane.f32.xlu0 %v3521
        %v3523 = vpop.xlane.xlu0 %3522
        %v3524 = vsel %vm3418, %v3132, -inf
        %3525 = vmax.xlane.f32.xlu0 %v3524
        %v3526 = vpop.xlane.xlu0 %3525
        %v3527 = vsel %vm3418, %v3137, -inf
        %3528 = vmax.xlane.f32.xlu0 %v3527
        %v3529 = vpop.xlane.xlu0 %3528
        %v3530 = vsel %vm3418, %v3140, -inf
        %3531 = vmax.xlane.f32.xlu0 %v3530
        %v3532 = vpop.xlane.xlu0 %3531
        %v3533 = vsel %vm3418, %v3145, -inf
        %3534 = vmax.xlane.f32.xlu0 %v3533
        %v3535 = vpop.xlane.xlu0 %3534
        %v3536 = vsel %vm3418, %v3148, -inf
        %3537 = vmax.xlane.f32.xlu0 %v3536
        %v3538 = vpop.xlane.xlu0 %3537
        %v3539 = vsel %vm3418, %v3210, -inf
        %3540 = vmax.xlane.f32.xlu0 %v3539
        %v3541 = vpop.xlane.xlu0 %3540
        %v3542 = vsel %vm3418, %v3213, -inf
        %3543 = vmax.xlane.f32.xlu0 %v3542
        %v3544 = vpop.xlane.xlu0 %3543
        %v3545 = vsel %vm3418, %v3218, -inf
        %3546 = vmax.xlane.f32.xlu0 %v3545
        %v3547 = vpop.xlane.xlu0 %3546
        %v3548 = vsel %vm3418, %v3221, -inf
        %3549 = vmax.xlane.f32.xlu0 %v3548
        %v3550 = vpop.xlane.xlu0 %3549
        %v3551 = vsel %vm3418, %v3226, -inf
        %3552 = vmax.xlane.f32.xlu0 %v3551
        %v3553 = vpop.xlane.xlu0 %3552
        %v3554 = vsel %vm3418, %v3229, -inf
        %3555 = vmax.xlane.f32.xlu0 %v3554
        %v3556 = vpop.xlane.xlu0 %3555
        %v3557 = vsel %vm3418, %v3234, -inf
        %3558 = vmax.xlane.f32.xlu0 %v3557
        %v3559 = vpop.xlane.xlu0 %3558
        %v3560 = vsel %vm3418, %v3237, -inf
        %3561 = vmax.xlane.f32.xlu0 %v3560
        %v3562 = vpop.xlane.xlu0 %3561
        %v3563 = vsel %vm3418, %v3299, -inf
        %3564 = vmax.xlane.f32.xlu0 %v3563
        %v3565 = vpop.xlane.xlu0 %3564
        %v3566 = vsel %vm3418, %v3302, -inf
        %3567 = vmax.xlane.f32.xlu0 %v3566
        %v3568 = vpop.xlane.xlu0 %3567
        %v3569 = vsel %vm3418, %v3307, -inf
        %3570 = vmax.xlane.f32.xlu0 %v3569
        %v3571 = vpop.xlane.xlu0 %3570
        %v3572 = vsel %vm3418, %v3310, -inf
        %3573 = vmax.xlane.f32.xlu0 %v3572
        %v3574 = vpop.xlane.xlu0 %3573
        %v3575 = vsel %vm3418, %v3315, -inf
        %3576 = vmax.xlane.f32.xlu0 %v3575
        %v3577 = vpop.xlane.xlu0 %3576
        %v3578 = vsel %vm3418, %v3318, -inf
        %3579 = vmax.xlane.f32.xlu0 %v3578
        %v3580 = vpop.xlane.xlu0 %3579
        %v3581 = vsel %vm3418, %v3323, -inf
        %3582 = vmax.xlane.f32.xlu0 %v3581
        %v3583 = vpop.xlane.xlu0 %3582
        %v3584 = vsel %vm3418, %v3326, -inf
        %3585 = vmax.xlane.f32.xlu0 %v3584
        %v3586 = vpop.xlane.xlu0 %3585
        %v3587 = vsel %vm3418, %v3388, -inf
        %3588 = vmax.xlane.f32.xlu0 %v3587
        %v3589 = vpop.xlane.xlu0 %3588
        %v3590 = vsel %vm3418, %v3391, -inf
        %3591 = vmax.xlane.f32.xlu0 %v3590
        %v3592 = vpop.xlane.xlu0 %3591
        %v3593 = vsel %vm3418, %v3396, -inf
        %3594 = vmax.xlane.f32.xlu0 %v3593
        %v3595 = vpop.xlane.xlu0 %3594
        %v3596 = vsel %vm3418, %v3399, -inf
        %3597 = vmax.xlane.f32.xlu0 %v3596
        %v3598 = vpop.xlane.xlu0 %3597
        %v3599 = vsel %vm3418, %v3404, -inf
        %3600 = vmax.xlane.f32.xlu0 %v3599
        %v3601 = vpop.xlane.xlu0 %3600
        %v3602 = vsel %vm3418, %v3407, -inf
        %3603 = vmax.xlane.f32.xlu0 %v3602
        %v3604 = vpop.xlane.xlu0 %3603
        %v3605 = vsel %vm3418, %v3412, -inf
        %3606 = vmax.xlane.f32.xlu0 %v3605
        %v3607 = vpop.xlane.xlu0 %3606
        %v3608 = vsel %vm3418, %v3415, -inf
        %3609 = vmax.xlane.f32.xlu0 %v3608
        %v3610 = vpop.xlane.xlu0 %3609
        %v3611 = vsub.f32 %v2765, %v3421
        %v3612 = vsub.f32 %v2768, %v3424
        %v3613 = vsub.f32 %v2773, %v3427
        %v3614 = vsub.f32 %v2776, %v3430
        %v3615 = vsub.f32 %v2781, %v3433
        %v3616 = vsub.f32 %v2784, %v3436
        %v3617 = vsub.f32 %v2789, %v3439
        %v3618 = vsub.f32 %v2792, %v3442
        %v3619 = vsub.f32 %v2854, %v3445
        %v3620 = vsub.f32 %v2857, %v3448
        %v3621 = vsub.f32 %v2862, %v3451
        %v3622 = vsub.f32 %v2865, %v3454
        %v3623 = vsub.f32 %v2870, %v3457
        %v3624 = vsub.f32 %v2873, %v3460
        %v3625 = vsub.f32 %v2878, %v3463
        %v3626 = vsub.f32 %v2881, %v3466
        %v3627 = vsub.f32 %v2943, %v3469
        %v3628 = vsub.f32 %v2946, %v3472
        %v3629 = vsub.f32 %v2951, %v3475
        %v3630 = vsub.f32 %v2954, %v3478
        %v3631 = vsub.f32 %v2959, %v3481
        %v3632 = vsub.f32 %v2962, %v3484
        %v3633 = vsub.f32 %v2967, %v3487
        %v3634 = vsub.f32 %v2970, %v3490
        %v3635 = vsub.f32 %v3032, %v3493
        %v3636 = vsub.f32 %v3035, %v3496
        %v3637 = vsub.f32 %v3040, %v3499
        %v3638 = vsub.f32 %v3043, %v3502
        %v3639 = vsub.f32 %v3048, %v3505
        %v3640 = vsub.f32 %v3051, %v3508
        %v3641 = vsub.f32 %v3056, %v3511
        %v3642 = vsub.f32 %v3059, %v3514
        %v3643 = vsub.f32 %v3121, %v3517
        %v3644 = vsub.f32 %v3124, %v3520
        %v3645 = vsub.f32 %v3129, %v3523
        %v3646 = vsub.f32 %v3132, %v3526
        %v3647 = vsub.f32 %v3137, %v3529
        %v3648 = vsub.f32 %v3140, %v3532
        %v3649 = vsub.f32 %v3145, %v3535
        %v3650 = vsub.f32 %v3148, %v3538
        %v3651 = vsub.f32 %v3210, %v3541
        %v3652 = vsub.f32 %v3213, %v3544
        %v3653 = vsub.f32 %v3218, %v3547
        %v3654 = vsub.f32 %v3221, %v3550
        %v3655 = vsub.f32 %v3226, %v3553
        %v3656 = vsub.f32 %v3229, %v3556
        %v3657 = vsub.f32 %v3234, %v3559
        %v3658 = vsub.f32 %v3237, %v3562
        %v3659 = vsub.f32 %v3299, %v3565
        %v3660 = vsub.f32 %v3302, %v3568
        %v3661 = vsub.f32 %v3307, %v3571
        %v3662 = vsub.f32 %v3310, %v3574
        %v3663 = vsub.f32 %v3315, %v3577
        %v3664 = vsub.f32 %v3318, %v3580
        %v3665 = vsub.f32 %v3323, %v3583
        %v3666 = vsub.f32 %v3326, %v3586
        %v3667 = vsub.f32 %v3388, %v3589
        %v3668 = vsub.f32 %v3391, %v3592
        %v3669 = vsub.f32 %v3396, %v3595
        %v3670 = vsub.f32 %v3399, %v3598
        %v3671 = vsub.f32 %v3404, %v3601
        %v3672 = vsub.f32 %v3407, %v3604
        %v3673 = vsub.f32 %v3412, %v3607
        %v3674 = vsub.f32 %v3415, %v3610
        %v3675 = vmul.f32 %v3611, 1.442695
        %v3676 = vpow.pop %v3675
        %v3677 = vmul.f32 %v3612, 1.442695
        %v3678 = vpow.pop %v3677
        %v3679 = vmul.f32 %v3613, 1.442695
        %v3680 = vpow.pop %v3679
        %v3681 = vmul.f32 %v3614, 1.442695
        %v3682 = vpow.pop %v3681
        %v3683 = vmul.f32 %v3615, 1.442695
        %v3684 = vpow.pop %v3683
        %v3685 = vmul.f32 %v3616, 1.442695
        %v3686 = vpow.pop %v3685
        %v3687 = vmul.f32 %v3617, 1.442695
        %v3688 = vpow.pop %v3687
        %v3689 = vmul.f32 %v3618, 1.442695
        %v3690 = vpow.pop %v3689
        %v3691 = vmul.f32 %v3619, 1.442695
        %v3692 = vpow.pop %v3691
        %v3693 = vmul.f32 %v3620, 1.442695
        %v3694 = vpow.pop %v3693
        %v3695 = vmul.f32 %v3621, 1.442695
        %v3696 = vpow.pop %v3695
        %v3697 = vmul.f32 %v3622, 1.442695
        %v3698 = vpow.pop %v3697
        %v3699 = vmul.f32 %v3623, 1.442695
        %v3700 = vpow.pop %v3699
        %v3701 = vmul.f32 %v3624, 1.442695
        %v3702 = vpow.pop %v3701
        %v3703 = vmul.f32 %v3625, 1.442695
        %v3704 = vpow.pop %v3703
        %v3705 = vmul.f32 %v3626, 1.442695
        %v3706 = vpow.pop %v3705
        %v3707 = vmul.f32 %v3627, 1.442695
        %v3708 = vpow.pop %v3707
        %v3709 = vmul.f32 %v3628, 1.442695
        %v3710 = vpow.pop %v3709
        %v3711 = vmul.f32 %v3629, 1.442695
        %v3712 = vpow.pop %v3711
        %v3713 = vmul.f32 %v3630, 1.442695
        %v3714 = vpow.pop %v3713
        %v3715 = vmul.f32 %v3631, 1.442695
        %v3716 = vpow.pop %v3715
        %v3717 = vmul.f32 %v3632, 1.442695
        %v3718 = vpow.pop %v3717
        %v3719 = vmul.f32 %v3633, 1.442695
        %v3720 = vpow.pop %v3719
        %v3721 = vmul.f32 %v3634, 1.442695
        %v3722 = vpow.pop %v3721
        %v3723 = vmul.f32 %v3635, 1.442695
        %v3724 = vpow.pop %v3723
        %v3725 = vmul.f32 %v3636, 1.442695
        %v3726 = vpow.pop %v3725
        %v3727 = vmul.f32 %v3637, 1.442695
        %v3728 = vpow.pop %v3727
        %v3729 = vmul.f32 %v3638, 1.442695
        %v3730 = vpow.pop %v3729
        %v3731 = vmul.f32 %v3639, 1.442695
        %v3732 = vpow.pop %v3731
        %v3733 = vmul.f32 %v3640, 1.442695
        %v3734 = vpow.pop %v3733
        %v3735 = vmul.f32 %v3641, 1.442695
        %v3736 = vpow.pop %v3735
        %v3737 = vmul.f32 %v3642, 1.442695
        %v3738 = vpow.pop %v3737
        %v3739 = vmul.f32 %v3643, 1.442695
        %v3740 = vpow.pop %v3739
        %v3741 = vmul.f32 %v3644, 1.442695
        %v3742 = vpow.pop %v3741
        %v3743 = vmul.f32 %v3645, 1.442695
        %v3744 = vpow.pop %v3743
        %v3745 = vmul.f32 %v3646, 1.442695
        %v3746 = vpow.pop %v3745
        %v3747 = vmul.f32 %v3647, 1.442695
        %v3748 = vpow.pop %v3747
        %v3749 = vmul.f32 %v3648, 1.442695
        %v3750 = vpow.pop %v3749
        %v3751 = vmul.f32 %v3649, 1.442695
        %v3752 = vpow.pop %v3751
        %v3753 = vmul.f32 %v3650, 1.442695
        %v3754 = vpow.pop %v3753
        %v3755 = vmul.f32 %v3651, 1.442695
        %v3756 = vpow.pop %v3755
        %v3757 = vmul.f32 %v3652, 1.442695
        %v3758 = vpow.pop %v3757
        %v3759 = vmul.f32 %v3653, 1.442695
        %v3760 = vpow.pop %v3759
        %v3761 = vmul.f32 %v3654, 1.442695
        %v3762 = vpow.pop %v3761
        %v3763 = vmul.f32 %v3655, 1.442695
        %v3764 = vpow.pop %v3763
        %v3765 = vmul.f32 %v3656, 1.442695
        %v3766 = vpow.pop %v3765
        %v3767 = vmul.f32 %v3657, 1.442695
        %v3768 = vpow.pop %v3767
        %v3769 = vmul.f32 %v3658, 1.442695
        %v3770 = vpow.pop %v3769
        %v3771 = vmul.f32 %v3659, 1.442695
        %v3772 = vpow.pop %v3771
        %v3773 = vmul.f32 %v3660, 1.442695
        %v3774 = vpow.pop %v3773
        %v3775 = vmul.f32 %v3661, 1.442695
        %v3776 = vpow.pop %v3775
        %v3777 = vmul.f32 %v3662, 1.442695
        %v3778 = vpow.pop %v3777
        %v3779 = vmul.f32 %v3663, 1.442695
        %v3780 = vpow.pop %v3779
        %v3781 = vmul.f32 %v3664, 1.442695
        %v3782 = vpow.pop %v3781
        %v3783 = vmul.f32 %v3665, 1.442695
        %v3784 = vpow.pop %v3783
        %v3785 = vmul.f32 %v3666, 1.442695
        %v3786 = vpow.pop %v3785
        %v3787 = vmul.f32 %v3667, 1.442695
        %v3788 = vpow.pop %v3787
        %v3789 = vmul.f32 %v3668, 1.442695
        %v3790 = vpow.pop %v3789
        %v3791 = vmul.f32 %v3669, 1.442695
        %v3792 = vpow.pop %v3791
        %v3793 = vmul.f32 %v3670, 1.442695
        %v3794 = vpow.pop %v3793
        %v3795 = vmul.f32 %v3671, 1.442695
        %v3796 = vpow.pop %v3795
        %v3797 = vmul.f32 %v3672, 1.442695
        %v3798 = vpow.pop %v3797
        %v3799 = vmul.f32 %v3673, 1.442695
        %v3800 = vpow.pop %v3799
        %v3801 = vmul.f32 %v3674, 1.442695
        %v3802 = vpow.pop %v3801
        %v3803 = vsel %vm3418, %v3676, 0.0
        %3804 = vadd.xlane.f32.xlu0 %v3803
        %v3805 = vpop.xlane.xlu0 %3804
        %v3806 = vsel %vm3418, %v3678, 0.0
        %3807 = vadd.xlane.f32.xlu0 %v3806
        %v3808 = vpop.xlane.xlu0 %3807
        %v3809 = vsel %vm3418, %v3680, 0.0
        %3810 = vadd.xlane.f32.xlu0 %v3809
        %v3811 = vpop.xlane.xlu0 %3810
        %v3812 = vsel %vm3418, %v3682, 0.0
        %3813 = vadd.xlane.f32.xlu0 %v3812
        %v3814 = vpop.xlane.xlu0 %3813
        %v3815 = vsel %vm3418, %v3684, 0.0
        %3816 = vadd.xlane.f32.xlu0 %v3815
        %v3817 = vpop.xlane.xlu0 %3816
        %v3818 = vsel %vm3418, %v3686, 0.0
        %3819 = vadd.xlane.f32.xlu0 %v3818
        %v3820 = vpop.xlane.xlu0 %3819
        %v3821 = vsel %vm3418, %v3688, 0.0
        %3822 = vadd.xlane.f32.xlu0 %v3821
        %v3823 = vpop.xlane.xlu0 %3822
        %v3824 = vsel %vm3418, %v3690, 0.0
        %3825 = vadd.xlane.f32.xlu0 %v3824
        %v3826 = vpop.xlane.xlu0 %3825
        %v3827 = vsel %vm3418, %v3692, 0.0
        %3828 = vadd.xlane.f32.xlu0 %v3827
        %v3829 = vpop.xlane.xlu0 %3828
        %v3830 = vsel %vm3418, %v3694, 0.0
        %3831 = vadd.xlane.f32.xlu0 %v3830
        %v3832 = vpop.xlane.xlu0 %3831
        %v3833 = vsel %vm3418, %v3696, 0.0
        %3834 = vadd.xlane.f32.xlu0 %v3833
        %v3835 = vpop.xlane.xlu0 %3834
        %v3836 = vsel %vm3418, %v3698, 0.0
        %3837 = vadd.xlane.f32.xlu0 %v3836
        %v3838 = vpop.xlane.xlu0 %3837
        %v3839 = vsel %vm3418, %v3700, 0.0
        %3840 = vadd.xlane.f32.xlu0 %v3839
        %v3841 = vpop.xlane.xlu0 %3840
        %v3842 = vsel %vm3418, %v3702, 0.0
        %3843 = vadd.xlane.f32.xlu0 %v3842
        %v3844 = vpop.xlane.xlu0 %3843
        %v3845 = vsel %vm3418, %v3704, 0.0
        %3846 = vadd.xlane.f32.xlu0 %v3845
        %v3847 = vpop.xlane.xlu0 %3846
        %v3848 = vsel %vm3418, %v3706, 0.0
        %3849 = vadd.xlane.f32.xlu0 %v3848
        %v3850 = vpop.xlane.xlu0 %3849
        %v3851 = vsel %vm3418, %v3708, 0.0
        %3852 = vadd.xlane.f32.xlu0 %v3851
        %v3853 = vpop.xlane.xlu0 %3852
        %v3854 = vsel %vm3418, %v3710, 0.0
        %3855 = vadd.xlane.f32.xlu0 %v3854
        %v3856 = vpop.xlane.xlu0 %3855
        %v3857 = vsel %vm3418, %v3712, 0.0
        %3858 = vadd.xlane.f32.xlu0 %v3857
        %v3859 = vpop.xlane.xlu0 %3858
        %v3860 = vsel %vm3418, %v3714, 0.0
        %3861 = vadd.xlane.f32.xlu0 %v3860
        %v3862 = vpop.xlane.xlu0 %3861
        %v3863 = vsel %vm3418, %v3716, 0.0
        %3864 = vadd.xlane.f32.xlu0 %v3863
        %v3865 = vpop.xlane.xlu0 %3864
        %v3866 = vsel %vm3418, %v3718, 0.0
        %3867 = vadd.xlane.f32.xlu0 %v3866
        %v3868 = vpop.xlane.xlu0 %3867
        %v3869 = vsel %vm3418, %v3720, 0.0
        %3870 = vadd.xlane.f32.xlu0 %v3869
        %v3871 = vpop.xlane.xlu0 %3870
        %v3872 = vsel %vm3418, %v3722, 0.0
        %3873 = vadd.xlane.f32.xlu0 %v3872
        %v3874 = vpop.xlane.xlu0 %3873
        %v3875 = vsel %vm3418, %v3724, 0.0
        %3876 = vadd.xlane.f32.xlu0 %v3875
        %v3877 = vpop.xlane.xlu0 %3876
        %v3878 = vsel %vm3418, %v3726, 0.0
        %3879 = vadd.xlane.f32.xlu0 %v3878
        %v3880 = vpop.xlane.xlu0 %3879
        %v3881 = vsel %vm3418, %v3728, 0.0
        %3882 = vadd.xlane.f32.xlu0 %v3881
        %v3883 = vpop.xlane.xlu0 %3882
        %v3884 = vsel %vm3418, %v3730, 0.0
        %3885 = vadd.xlane.f32.xlu0 %v3884
        %v3886 = vpop.xlane.xlu0 %3885
        %v3887 = vsel %vm3418, %v3732, 0.0
        %3888 = vadd.xlane.f32.xlu0 %v3887
        %v3889 = vpop.xlane.xlu0 %3888
        %v3890 = vsel %vm3418, %v3734, 0.0
        %3891 = vadd.xlane.f32.xlu0 %v3890
        %v3892 = vpop.xlane.xlu0 %3891
        %v3893 = vsel %vm3418, %v3736, 0.0
        %3894 = vadd.xlane.f32.xlu0 %v3893
        %v3895 = vpop.xlane.xlu0 %3894
        %v3896 = vsel %vm3418, %v3738, 0.0
        %3897 = vadd.xlane.f32.xlu0 %v3896
        %v3898 = vpop.xlane.xlu0 %3897
        %v3899 = vsel %vm3418, %v3740, 0.0
        %3900 = vadd.xlane.f32.xlu0 %v3899
        %v3901 = vpop.xlane.xlu0 %3900
        %v3902 = vsel %vm3418, %v3742, 0.0
        %3903 = vadd.xlane.f32.xlu0 %v3902
        %v3904 = vpop.xlane.xlu0 %3903
        %v3905 = vsel %vm3418, %v3744, 0.0
        %3906 = vadd.xlane.f32.xlu0 %v3905
        %v3907 = vpop.xlane.xlu0 %3906
        %v3908 = vsel %vm3418, %v3746, 0.0
        %3909 = vadd.xlane.f32.xlu0 %v3908
        %v3910 = vpop.xlane.xlu0 %3909
        %v3911 = vsel %vm3418, %v3748, 0.0
        %3912 = vadd.xlane.f32.xlu0 %v3911
        %v3913 = vpop.xlane.xlu0 %3912
        %v3914 = vsel %vm3418, %v3750, 0.0
        %3915 = vadd.xlane.f32.xlu0 %v3914
        %v3916 = vpop.xlane.xlu0 %3915
        %v3917 = vsel %vm3418, %v3752, 0.0
        %3918 = vadd.xlane.f32.xlu0 %v3917
        %v3919 = vpop.xlane.xlu0 %3918
        %v3920 = vsel %vm3418, %v3754, 0.0
        %3921 = vadd.xlane.f32.xlu0 %v3920
        %v3922 = vpop.xlane.xlu0 %3921
        %v3923 = vsel %vm3418, %v3756, 0.0
        %3924 = vadd.xlane.f32.xlu0 %v3923
        %v3925 = vpop.xlane.xlu0 %3924
        %v3926 = vsel %vm3418, %v3758, 0.0
        %3927 = vadd.xlane.f32.xlu0 %v3926
        %v3928 = vpop.xlane.xlu0 %3927
        %v3929 = vsel %vm3418, %v3760, 0.0
        %3930 = vadd.xlane.f32.xlu0 %v3929
        %v3931 = vpop.xlane.xlu0 %3930
        %v3932 = vsel %vm3418, %v3762, 0.0
        %3933 = vadd.xlane.f32.xlu0 %v3932
        %v3934 = vpop.xlane.xlu0 %3933
        %v3935 = vsel %vm3418, %v3764, 0.0
        %3936 = vadd.xlane.f32.xlu0 %v3935
        %v3937 = vpop.xlane.xlu0 %3936
        %v3938 = vsel %vm3418, %v3766, 0.0
        %3939 = vadd.xlane.f32.xlu0 %v3938
        %v3940 = vpop.xlane.xlu0 %3939
        %v3941 = vsel %vm3418, %v3768, 0.0
        %3942 = vadd.xlane.f32.xlu0 %v3941
        %v3943 = vpop.xlane.xlu0 %3942
        %v3944 = vsel %vm3418, %v3770, 0.0
        %3945 = vadd.xlane.f32.xlu0 %v3944
        %v3946 = vpop.xlane.xlu0 %3945
        %v3947 = vsel %vm3418, %v3772, 0.0
        %3948 = vadd.xlane.f32.xlu0 %v3947
        %v3949 = vpop.xlane.xlu0 %3948
        %v3950 = vsel %vm3418, %v3774, 0.0
        %3951 = vadd.xlane.f32.xlu0 %v3950
        %v3952 = vpop.xlane.xlu0 %3951
        %v3953 = vsel %vm3418, %v3776, 0.0
        %3954 = vadd.xlane.f32.xlu0 %v3953
        %v3955 = vpop.xlane.xlu0 %3954
        %v3956 = vsel %vm3418, %v3778, 0.0
        %3957 = vadd.xlane.f32.xlu0 %v3956
        %v3958 = vpop.xlane.xlu0 %3957
        %v3959 = vsel %vm3418, %v3780, 0.0
        %3960 = vadd.xlane.f32.xlu0 %v3959
        %v3961 = vpop.xlane.xlu0 %3960
        %v3962 = vsel %vm3418, %v3782, 0.0
        %3963 = vadd.xlane.f32.xlu0 %v3962
        %v3964 = vpop.xlane.xlu0 %3963
        %v3965 = vsel %vm3418, %v3784, 0.0
        %3966 = vadd.xlane.f32.xlu0 %v3965
        %v3967 = vpop.xlane.xlu0 %3966
        %v3968 = vsel %vm3418, %v3786, 0.0
        %3969 = vadd.xlane.f32.xlu0 %v3968
        %v3970 = vpop.xlane.xlu0 %3969
        %v3971 = vsel %vm3418, %v3788, 0.0
        %3972 = vadd.xlane.f32.xlu0 %v3971
        %v3973 = vpop.xlane.xlu0 %3972
        %v3974 = vsel %vm3418, %v3790, 0.0
        %3975 = vadd.xlane.f32.xlu0 %v3974
        %v3976 = vpop.xlane.xlu0 %3975
        %v3977 = vsel %vm3418, %v3792, 0.0
        %3978 = vadd.xlane.f32.xlu0 %v3977
        %v3979 = vpop.xlane.xlu0 %3978
        %v3980 = vsel %vm3418, %v3794, 0.0
        %3981 = vadd.xlane.f32.xlu0 %v3980
        %v3982 = vpop.xlane.xlu0 %3981
        %v3983 = vsel %vm3418, %v3796, 0.0
        %3984 = vadd.xlane.f32.xlu0 %v3983
        %v3985 = vpop.xlane.xlu0 %3984
        %v3986 = vsel %vm3418, %v3798, 0.0
        %3987 = vadd.xlane.f32.xlu0 %v3986
        %v3988 = vpop.xlane.xlu0 %3987
        %v3989 = vsel %vm3418, %v3800, 0.0
        %3990 = vadd.xlane.f32.xlu0 %v3989
        %v3991 = vpop.xlane.xlu0 %3990
        %v3992 = vsel %vm3418, %v3802, 0.0
        %3993 = vadd.xlane.f32.xlu0 %v3992
        %v3994 = vpop.xlane.xlu0 %3993
        %v3995 = vrcp.pop %v3805
        %v3996 = vrcp.pop %v3808
        %v3997 = vrcp.pop %v3811
        %v3998 = vrcp.pop %v3814
        %v3999 = vrcp.pop %v3817
        %v4000 = vrcp.pop %v3820
        %v4001 = vrcp.pop %v3823
        %v4002 = vrcp.pop %v3826
        %v4003 = vrcp.pop %v3829
        %v4004 = vrcp.pop %v3832
        %v4005 = vrcp.pop %v3835
        %v4006 = vrcp.pop %v3838
        %v4007 = vrcp.pop %v3841
        %v4008 = vrcp.pop %v3844
        %v4009 = vrcp.pop %v3847
        %v4010 = vrcp.pop %v3850
        %v4011 = vrcp.pop %v3853
        %v4012 = vrcp.pop %v3856
        %v4013 = vrcp.pop %v3859
        %v4014 = vrcp.pop %v3862
        %v4015 = vrcp.pop %v3865
        %v4016 = vrcp.pop %v3868
        %v4017 = vrcp.pop %v3871
        %v4018 = vrcp.pop %v3874
        %v4019 = vrcp.pop %v3877
        %v4020 = vrcp.pop %v3880
        %v4021 = vrcp.pop %v3883
        %v4022 = vrcp.pop %v3886
        %v4023 = vrcp.pop %v3889
        %v4024 = vrcp.pop %v3892
        %v4025 = vrcp.pop %v3895
        %v4026 = vrcp.pop %v3898
        %v4027 = vrcp.pop %v3901
        %v4028 = vrcp.pop %v3904
        %v4029 = vrcp.pop %v3907
        %v4030 = vrcp.pop %v3910
        %v4031 = vrcp.pop %v3913
        %v4032 = vrcp.pop %v3916
        %v4033 = vrcp.pop %v3919
        %v4034 = vrcp.pop %v3922
        %v4035 = vrcp.pop %v3925
        %v4036 = vrcp.pop %v3928
        %v4037 = vrcp.pop %v3931
        %v4038 = vrcp.pop %v3934
        %v4039 = vrcp.pop %v3937
        %v4040 = vrcp.pop %v3940
        %v4041 = vrcp.pop %v3943
        %v4042 = vrcp.pop %v3946
        %v4043 = vrcp.pop %v3949
        %v4044 = vrcp.pop %v3952
        %v4045 = vrcp.pop %v3955
        %v4046 = vrcp.pop %v3958
        %v4047 = vrcp.pop %v3961
        %v4048 = vrcp.pop %v3964
        %v4049 = vrcp.pop %v3967
        %v4050 = vrcp.pop %v3970
        %v4051 = vrcp.pop %v3973
        %v4052 = vrcp.pop %v3976
        %v4053 = vrcp.pop %v3979
        %v4054 = vrcp.pop %v3982
        %v4055 = vrcp.pop %v3985
        %v4056 = vrcp.pop %v3988
        %v4057 = vrcp.pop %v3991
        %v4058 = vrcp.pop %v3994
        %v4059 = vmul.f32 %v3676, %v3995
        %v4060 = vmul.f32 %v3678, %v3996
        %v4061 = vmul.f32 %v3680, %v3997
        %v4062 = vmul.f32 %v3682, %v3998
        %v4063 = vmul.f32 %v3684, %v3999
        %v4064 = vmul.f32 %v3686, %v4000
        %v4065 = vmul.f32 %v3688, %v4001
        %v4066 = vmul.f32 %v3690, %v4002
        %v4067 = vmul.f32 %v3692, %v4003
        %v4068 = vmul.f32 %v3694, %v4004
        %v4069 = vmul.f32 %v3696, %v4005
        %v4070 = vmul.f32 %v3698, %v4006
        %v4071 = vmul.f32 %v3700, %v4007
        %v4072 = vmul.f32 %v3702, %v4008
        %v4073 = vmul.f32 %v3704, %v4009
        %v4074 = vmul.f32 %v3706, %v4010
        %v4075 = vmul.f32 %v3708, %v4011
        %v4076 = vmul.f32 %v3710, %v4012
        %v4077 = vmul.f32 %v3712, %v4013
        %v4078 = vmul.f32 %v3714, %v4014
        %v4079 = vmul.f32 %v3716, %v4015
        %v4080 = vmul.f32 %v3718, %v4016
        %v4081 = vmul.f32 %v3720, %v4017
        %v4082 = vmul.f32 %v3722, %v4018
        %v4083 = vmul.f32 %v3724, %v4019
        %v4084 = vmul.f32 %v3726, %v4020
        %v4085 = vmul.f32 %v3728, %v4021
        %v4086 = vmul.f32 %v3730, %v4022
        %v4087 = vmul.f32 %v3732, %v4023
        %v4088 = vmul.f32 %v3734, %v4024
        %v4089 = vmul.f32 %v3736, %v4025
        %v4090 = vmul.f32 %v3738, %v4026
        %v4091 = vmul.f32 %v3740, %v4027
        %v4092 = vmul.f32 %v3742, %v4028
        %v4093 = vmul.f32 %v3744, %v4029
        %v4094 = vmul.f32 %v3746, %v4030
        %v4095 = vmul.f32 %v3748, %v4031
        %v4096 = vmul.f32 %v3750, %v4032
        %v4097 = vmul.f32 %v3752, %v4033
        %v4098 = vmul.f32 %v3754, %v4034
        %v4099 = vmul.f32 %v3756, %v4035
        %v4100 = vmul.f32 %v3758, %v4036
        %v4101 = vmul.f32 %v3760, %v4037
        %v4102 = vmul.f32 %v3762, %v4038
        %v4103 = vmul.f32 %v3764, %v4039
        %v4104 = vmul.f32 %v3766, %v4040
        %v4105 = vmul.f32 %v3768, %v4041
        %v4106 = vmul.f32 %v3770, %v4042
        %v4107 = vmul.f32 %v3772, %v4043
        %v4108 = vmul.f32 %v3774, %v4044
        %v4109 = vmul.f32 %v3776, %v4045
        %v4110 = vmul.f32 %v3778, %v4046
        %v4111 = vmul.f32 %v3780, %v4047
        %v4112 = vmul.f32 %v3782, %v4048
        %v4113 = vmul.f32 %v3784, %v4049
        %v4114 = vmul.f32 %v3786, %v4050
        %v4115 = vmul.f32 %v3788, %v4051
        %v4116 = vmul.f32 %v3790, %v4052
        %v4117 = vmul.f32 %v3792, %v4053
        %v4118 = vmul.f32 %v3794, %v4054
        %v4119 = vmul.f32 %v3796, %v4055
        %v4120 = vmul.f32 %v3798, %v4056
        %v4121 = vmul.f32 %v3800, %v4057
        %v4122 = vmul.f32 %v3802, %v4058
        %v4123 = vpack.c.bf16 %v4060, %v4059
        %v4124 = vpack.c.bf16 %v4062, %v4061
        %v4125 = vpack.c.bf16 %v4064, %v4063
        %v4126 = vpack.c.bf16 %v4066, %v4065
        %v4127 = vpack.c.bf16 %v4068, %v4067
        %v4128 = vpack.c.bf16 %v4070, %v4069
        %v4129 = vpack.c.bf16 %v4072, %v4071
        %v4130 = vpack.c.bf16 %v4074, %v4073
        %v4131 = vpack.c.bf16 %v4076, %v4075
        %v4132 = vpack.c.bf16 %v4078, %v4077
        %v4133 = vpack.c.bf16 %v4080, %v4079
        %v4134 = vpack.c.bf16 %v4082, %v4081
        %v4135 = vpack.c.bf16 %v4084, %v4083
        %v4136 = vpack.c.bf16 %v4086, %v4085
        %v4137 = vpack.c.bf16 %v4088, %v4087
        %v4138 = vpack.c.bf16 %v4090, %v4089
        %v4139 = vpack.c.bf16 %v4092, %v4091
        %v4140 = vpack.c.bf16 %v4094, %v4093
        %v4141 = vpack.c.bf16 %v4096, %v4095
        %v4142 = vpack.c.bf16 %v4098, %v4097
        %v4143 = vpack.c.bf16 %v4100, %v4099
        %v4144 = vpack.c.bf16 %v4102, %v4101
        %v4145 = vpack.c.bf16 %v4104, %v4103
        %v4146 = vpack.c.bf16 %v4106, %v4105
        %v4147 = vpack.c.bf16 %v4108, %v4107
        %v4148 = vpack.c.bf16 %v4110, %v4109
        %v4149 = vpack.c.bf16 %v4112, %v4111
        %v4150 = vpack.c.bf16 %v4114, %v4113
        %v4151 = vpack.c.bf16 %v4116, %v4115
        %v4152 = vpack.c.bf16 %v4118, %v4117
        %v4153 = vpack.c.bf16 %v4120, %v4119
        %v4154 = vpack.c.bf16 %v4122, %v4121
        %v4156 = vsel %vm3418, %v4123, 0
        %v4159 = vsel %vm3418, %v4124, 0
        %v4162 = vsel %vm3418, %v4125, 0
        %v4165 = vsel %vm3418, %v4126, 0
        %4167 = vmatprep.subr.bf16.mxu0 0
        %4168 = vmatpush1.bf16.msra.mxu0 %v2674
        %4169 = vmatprep.subr.bf16.mxu0 0
        %4170 = vmatpush1.bf16.msra.mxu0 %v2675
        %4171 = vmatprep.subr.bf16.mxu0 0
        %4172 = vmatpush1.bf16.msra.mxu0 %v2676
        %4173 = vmatprep.subr.bf16.mxu0 0
        %4174 = vmatpush1.bf16.msra.mxu0 %v2677
        %4175 = vmatprep.subr.bf16.mxu0 0
        %4176 = vmatpush1.bf16.msra.mxu0 0
        %4177 = vmatprep.subr.bf16.mxu0 0
        %4178 = vmatpush1.bf16.msra.mxu0 0
        %4179 = vmatprep.subr.bf16.mxu0 0
        %4180 = vmatpush1.bf16.msra.mxu0 0
        %4181 = vmatprep.subr.bf16.mxu0 0
        %4182 = vmatpush1.bf16.msra.mxu0 0
        %4183 = vmatprep.subr.bf16.mxu0 0
        %4184 = vmatpush1.bf16.msra.mxu0 0
        %4185 = vmatprep.subr.bf16.mxu0 0
        %4186 = vmatpush1.bf16.msra.mxu0 0
        %4187 = vmatprep.subr.bf16.mxu0 0
        %4188 = vmatpush1.bf16.msra.mxu0 0
        %4189 = vmatprep.subr.bf16.mxu0 0
        %4190 = vmatpush1.bf16.msra.mxu0 0
        %4191 = vmatprep.subr.bf16.mxu0 0
        %4192 = vmatpush1.bf16.msra.mxu0 0
        %4193 = vmatprep.subr.bf16.mxu0 0
        %4194 = vmatpush1.bf16.msra.mxu0 0
        %4195 = vmatprep.subr.bf16.mxu0 0
        %4196 = vmatpush1.bf16.msra.mxu0 0
        %4197 = vmatprep.subr.bf16.mxu0 0
        %4198 = vmatpush1.bf16.msra.mxu0 0
        %4199 = vmatprep.mubr.bf16.mxu0 0
        %4200 = vmatmul.mubr.bf16.gmra.mrb[0].mxu0 %v4156
        %v4201 = vpop.f32.mrb[0].mxu0
        %v4202 = vadd.f32 0.0, %v4201
        %v4203 = vpop.f32.mrb[0].mxu0
        %v4204 = vpop.f32.mrb[0].mxu0
        %v4205 = vadd.f32 0.0, %v4204
        %v4206 = vpop.f32.mrb[0].mxu0
        %4207 = vmatprep.mubr.bf16.mxu0 0
        %4208 = vmatmul.mubr.bf16.gmra.mrb[0].mxu0 %v4159
        %v4209 = vpop.f32.mrb[0].mxu0
        %v4210 = vadd.f32 0.0, %v4209
        %v4211 = vpop.f32.mrb[0].mxu0
        %v4212 = vpop.f32.mrb[0].mxu0
        %v4213 = vadd.f32 0.0, %v4212
        %v4214 = vpop.f32.mrb[0].mxu0
        %4215 = vmatprep.mubr.bf16.mxu0 0
        %4216 = vmatmul.mubr.bf16.gmra.mrb[0].mxu0 %v4162
        %v4217 = vpop.f32.mrb[0].mxu0
        %v4218 = vadd.f32 0.0, %v4217
        %v4219 = vpop.f32.mrb[0].mxu0
        %v4220 = vpop.f32.mrb[0].mxu0
        %v4221 = vadd.f32 0.0, %v4220
        %v4222 = vpop.f32.mrb[0].mxu0
        %4223 = vmatprep.mubr.bf16.mxu0 0
        %4224 = vmatmul.mubr.bf16.gmra.mrb[0].mxu0 %v4165
        %v4225 = vpop.f32.mrb[0].mxu0
        %v4226 = vadd.f32 0.0, %v4225
        %v4227 = vpop.f32.mrb[0].mxu0
        %v4228 = vpop.f32.mrb[0].mxu0
        %v4229 = vadd.f32 0.0, %v4228
        %v4230 = vpop.f32.mrb[0].mxu0
        %4231 = vdwg.mxu0
        %v4233 = vsel %vm3418, %v4127, 0
        %v4236 = vsel %vm3418, %v4128, 0
        %v4239 = vsel %vm3418, %v4129, 0
        %v4242 = vsel %vm3418, %v4130, 0
        %4244 = vmatprep.subr.bf16.mxu0 0
        %4245 = vmatpush1.bf16.msra.mxu0 %v2678
        %4246 = vmatprep.subr.bf16.mxu0 0
        %4247 = vmatpush1.bf16.msra.mxu0 %v2679
        %4248 = vmatprep.subr.bf16.mxu0 0
        %4249 = vmatpush1.bf16.msra.mxu0 %v2680
        %4250 = vmatprep.subr.bf16.mxu0 0
        %4251 = vmatpush1.bf16.msra.mxu0 %v2681
        %4252 = vmatprep.subr.bf16.mxu0 0
        %4253 = vmatpush1.bf16.msra.mxu0 0
        %4254 = vmatprep.subr.bf16.mxu0 0
        %4255 = vmatpush1.bf16.msra.mxu0 0
        %4256 = vmatprep.subr.bf16.mxu0 0
        %4257 = vmatpush1.bf16.msra.mxu0 0
        %4258 = vmatprep.subr.bf16.mxu0 0
        %4259 = vmatpush1.bf16.msra.mxu0 0
        %4260 = vmatprep.subr.bf16.mxu0 0
        %4261 = vmatpush1.bf16.msra.mxu0 0
        %4262 = vmatprep.subr.bf16.mxu0 0
        %4263 = vmatpush1.bf16.msra.mxu0 0
        %4264 = vmatprep.subr.bf16.mxu0 0
        %4265 = vmatpush1.bf16.msra.mxu0 0
        %4266 = vmatprep.subr.bf16.mxu0 0
        %4267 = vmatpush1.bf16.msra.mxu0 0
        %4268 = vmatprep.subr.bf16.mxu0 0
        %4269 = vmatpush1.bf16.msra.mxu0 0
        %4270 = vmatprep.subr.bf16.mxu0 0
        %4271 = vmatpush1.bf16.msra.mxu0 0
        %4272 = vmatprep.subr.bf16.mxu0 0
        %4273 = vmatpush1.bf16.msra.mxu0 0
        %4274 = vmatprep.subr.bf16.mxu0 0
        %4275 = vmatpush1.bf16.msra.mxu0 0
        %4276 = vmatprep.mubr.bf16.mxu0 0
        %4277 = vmatmul.mubr.bf16.gmra.mrb[0].mxu0 %v4233
        %v4278 = vpop.f32.mrb[0].mxu0
        %v4279 = vadd.f32 0.0, %v4278
        %v4280 = vpop.f32.mrb[0].mxu0
        %v4281 = vpop.f32.mrb[0].mxu0
        %v4282 = vadd.f32 0.0, %v4281
        %v4283 = vpop.f32.mrb[0].mxu0
        %4284 = vmatprep.mubr.bf16.mxu0 0
        %4285 = vmatmul.mubr.bf16.gmra.mrb[0].mxu0 %v4236
        %v4286 = vpop.f32.mrb[0].mxu0
        %v4287 = vadd.f32 0.0, %v4286
        %v4288 = vpop.f32.mrb[0].mxu0
        %v4289 = vpop.f32.mrb[0].mxu0
        %v4290 = vadd.f32 0.0, %v4289
        %v4291 = vpop.f32.mrb[0].mxu0
        %4292 = vmatprep.mubr.bf16.mxu0 0
        %4293 = vmatmul.mubr.bf16.gmra.mrb[0].mxu0 %v4239
        %v4294 = vpop.f32.mrb[0].mxu0
        %v4295 = vadd.f32 0.0, %v4294
        %v4296 = vpop.f32.mrb[0].mxu0
        %v4297 = vpop.f32.mrb[0].mxu0
        %v4298 = vadd.f32 0.0, %v4297
        %v4299 = vpop.f32.mrb[0].mxu0
        %4300 = vmatprep.mubr.bf16.mxu0 0
        %4301 = vmatmul.mubr.bf16.gmra.mrb[0].mxu0 %v4242
        %v4302 = vpop.f32.mrb[0].mxu0
        %v4303 = vadd.f32 0.0, %v4302
        %v4304 = vpop.f32.mrb[0].mxu0
        %v4305 = vpop.f32.mrb[0].mxu0
        %v4306 = vadd.f32 0.0, %v4305
        %v4307 = vpop.f32.mrb[0].mxu0
        %4308 = vdwg.mxu0
        %v4310 = vsel %vm3418, %v4131, 0
        %v4313 = vsel %vm3418, %v4132, 0
        %v4316 = vsel %vm3418, %v4133, 0
        %v4319 = vsel %vm3418, %v4134, 0
        %4321 = vmatprep.subr.bf16.mxu0 0
        %4322 = vmatpush1.bf16.msra.mxu0 %v2682
        %4323 = vmatprep.subr.bf16.mxu0 0
        %4324 = vmatpush1.bf16.msra.mxu0 %v2683
        %4325 = vmatprep.subr.bf16.mxu0 0
        %4326 = vmatpush1.bf16.msra.mxu0 %v2684
        %4327 = vmatprep.subr.bf16.mxu0 0
        %4328 = vmatpush1.bf16.msra.mxu0 %v2685
        %4329 = vmatprep.subr.bf16.mxu0 0
        %4330 = vmatpush1.bf16.msra.mxu0 0
        %4331 = vmatprep.subr.bf16.mxu0 0
        %4332 = vmatpush1.bf16.msra.mxu0 0
        %4333 = vmatprep.subr.bf16.mxu0 0
        %4334 = vmatpush1.bf16.msra.mxu0 0
        %4335 = vmatprep.subr.bf16.mxu0 0
        %4336 = vmatpush1.bf16.msra.mxu0 0
        %4337 = vmatprep.subr.bf16.mxu0 0
        %4338 = vmatpush1.bf16.msra.mxu0 0
        %4339 = vmatprep.subr.bf16.mxu0 0
        %4340 = vmatpush1.bf16.msra.mxu0 0
        %4341 = vmatprep.subr.bf16.mxu0 0
        %4342 = vmatpush1.bf16.msra.mxu0 0
        %4343 = vmatprep.subr.bf16.mxu0 0
        %4344 = vmatpush1.bf16.msra.mxu0 0
        %4345 = vmatprep.subr.bf16.mxu0 0
        %4346 = vmatpush1.bf16.msra.mxu0 0
        %4347 = vmatprep.subr.bf16.mxu0 0
        %4348 = vmatpush1.bf16.msra.mxu0 0
        %4349 = vmatprep.subr.bf16.mxu0 0
        %4350 = vmatpush1.bf16.msra.mxu0 0
        %4351 = vmatprep.subr.bf16.mxu0 0
        %4352 = vmatpush1.bf16.msra.mxu0 0
        %4353 = vmatprep.mubr.bf16.mxu0 0
        %4354 = vmatmul.mubr.bf16.gmra.mrb[0].mxu0 %v4310
        %v4355 = vpop.f32.mrb[0].mxu0
        %v4356 = vadd.f32 0.0, %v4355
        %v4357 = vpop.f32.mrb[0].mxu0
        %v4358 = vpop.f32.mrb[0].mxu0
        %v4359 = vadd.f32 0.0, %v4358
        %v4360 = vpop.f32.mrb[0].mxu0
        %4361 = vmatprep.mubr.bf16.mxu0 0
        %4362 = vmatmul.mubr.bf16.gmra.mrb[0].mxu0 %v4313
        %v4363 = vpop.f32.mrb[0].mxu0
        %v4364 = vadd.f32 0.0, %v4363
        %v4365 = vpop.f32.mrb[0].mxu0
        %v4366 = vpop.f32.mrb[0].mxu0
        %v4367 = vadd.f32 0.0, %v4366
        %v4368 = vpop.f32.mrb[0].mxu0
        %4369 = vmatprep.mubr.bf16.mxu0 0
        %4370 = vmatmul.mubr.bf16.gmra.mrb[0].mxu0 %v4316
        %v4371 = vpop.f32.mrb[0].mxu0
        %v4372 = vadd.f32 0.0, %v4371
        %v4373 = vpop.f32.mrb[0].mxu0
        %v4374 = vpop.f32.mrb[0].mxu0
        %v4375 = vadd.f32 0.0, %v4374
        %v4376 = vpop.f32.mrb[0].mxu0
        %4377 = vmatprep.mubr.bf16.mxu0 0
        %4378 = vmatmul.mubr.bf16.gmra.mrb[0].mxu0 %v4319
        %v4379 = vpop.f32.mrb[0].mxu0
        %v4380 = vadd.f32 0.0, %v4379
        %v4381 = vpop.f32.mrb[0].mxu0
        %v4382 = vpop.f32.mrb[0].mxu0
        %v4383 = vadd.f32 0.0, %v4382
        %v4384 = vpop.f32.mrb[0].mxu0
        %4385 = vdwg.mxu0
        %v4387 = vsel %vm3418, %v4135, 0
        %v4390 = vsel %vm3418, %v4136, 0
        %v4393 = vsel %vm3418, %v4137, 0
        %v4396 = vsel %vm3418, %v4138, 0
        %4398 = vmatprep.subr.bf16.mxu0 0
        %4399 = vmatpush1.bf16.msra.mxu0 %v2686
        %4400 = vmatprep.subr.bf16.mxu0 0
        %4401 = vmatpush1.bf16.msra.mxu0 %v2687
        %4402 = vmatprep.subr.bf16.mxu0 0
        %4403 = vmatpush1.bf16.msra.mxu0 %v2688
        %4404 = vmatprep.subr.bf16.mxu0 0
        %4405 = vmatpush1.bf16.msra.mxu0 %v2689
        %4406 = vmatprep.subr.bf16.mxu0 0
        %4407 = vmatpush1.bf16.msra.mxu0 0
        %4408 = vmatprep.subr.bf16.mxu0 0
        %4409 = vmatpush1.bf16.msra.mxu0 0
        %4410 = vmatprep.subr.bf16.mxu0 0
        %4411 = vmatpush1.bf16.msra.mxu0 0
        %4412 = vmatprep.subr.bf16.mxu0 0
        %4413 = vmatpush1.bf16.msra.mxu0 0
        %4414 = vmatprep.subr.bf16.mxu0 0
        %4415 = vmatpush1.bf16.msra.mxu0 0
        %4416 = vmatprep.subr.bf16.mxu0 0
        %4417 = vmatpush1.bf16.msra.mxu0 0
        %4418 = vmatprep.subr.bf16.mxu0 0
        %4419 = vmatpush1.bf16.msra.mxu0 0
        %4420 = vmatprep.subr.bf16.mxu0 0
        %4421 = vmatpush1.bf16.msra.mxu0 0
        %4422 = vmatprep.subr.bf16.mxu0 0
        %4423 = vmatpush1.bf16.msra.mxu0 0
        %4424 = vmatprep.subr.bf16.mxu0 0
        %4425 = vmatpush1.bf16.msra.mxu0 0
        %4426 = vmatprep.subr.bf16.mxu0 0
        %4427 = vmatpush1.bf16.msra.mxu0 0
        %4428 = vmatprep.subr.bf16.mxu0 0
        %4429 = vmatpush1.bf16.msra.mxu0 0
        %4430 = vmatprep.mubr.bf16.mxu0 0
        %4431 = vmatmul.mubr.bf16.gmra.mrb[0].mxu0 %v4387
        %v4432 = vpop.f32.mrb[0].mxu0
        %v4433 = vadd.f32 0.0, %v4432
        %v4434 = vpop.f32.mrb[0].mxu0
        %v4435 = vpop.f32.mrb[0].mxu0
        %v4436 = vadd.f32 0.0, %v4435
        %v4437 = vpop.f32.mrb[0].mxu0
        %4438 = vmatprep.mubr.bf16.mxu0 0
        %4439 = vmatmul.mubr.bf16.gmra.mrb[0].mxu0 %v4390
        %v4440 = vpop.f32.mrb[0].mxu0
        %v4441 = vadd.f32 0.0, %v4440
        %v4442 = vpop.f32.mrb[0].mxu0
        %v4443 = vpop.f32.mrb[0].mxu0
        %v4444 = vadd.f32 0.0, %v4443
        %v4445 = vpop.f32.mrb[0].mxu0
        %4446 = vmatprep.mubr.bf16.mxu0 0
        %4447 = vmatmul.mubr.bf16.gmra.mrb[0].mxu0 %v4393
        %v4448 = vpop.f32.mrb[0].mxu0
        %v4449 = vadd.f32 0.0, %v4448
        %v4450 = vpop.f32.mrb[0].mxu0
        %v4451 = vpop.f32.mrb[0].mxu0
        %v4452 = vadd.f32 0.0, %v4451
        %v4453 = vpop.f32.mrb[0].mxu0
        %4454 = vmatprep.mubr.bf16.mxu0 0
        %4455 = vmatmul.mubr.bf16.gmra.mrb[0].mxu0 %v4396
        %v4456 = vpop.f32.mrb[0].mxu0
        %v4457 = vadd.f32 0.0, %v4456
        %v4458 = vpop.f32.mrb[0].mxu0
        %v4459 = vpop.f32.mrb[0].mxu0
        %v4460 = vadd.f32 0.0, %v4459
        %v4461 = vpop.f32.mrb[0].mxu0
        %4462 = vdwg.mxu0
        %v4464 = vsel %vm3418, %v4139, 0
        %v4467 = vsel %vm3418, %v4140, 0
        %v4470 = vsel %vm3418, %v4141, 0
        %v4473 = vsel %vm3418, %v4142, 0
        %4475 = vmatprep.subr.bf16.mxu0 0
        %4476 = vmatpush1.bf16.msra.mxu0 %v2690
        %4477 = vmatprep.subr.bf16.mxu0 0
        %4478 = vmatpush1.bf16.msra.mxu0 %v2691
        %4479 = vmatprep.subr.bf16.mxu0 0
        %4480 = vmatpush1.bf16.msra.mxu0 %v2692
        %4481 = vmatprep.subr.bf16.mxu0 0
        %4482 = vmatpush1.bf16.msra.mxu0 %v2693
        %4483 = vmatprep.subr.bf16.mxu0 0
        %4484 = vmatpush1.bf16.msra.mxu0 0
        %4485 = vmatprep.subr.bf16.mxu0 0
        %4486 = vmatpush1.bf16.msra.mxu0 0
        %4487 = vmatprep.subr.bf16.mxu0 0
        %4488 = vmatpush1.bf16.msra.mxu0 0
        %4489 = vmatprep.subr.bf16.mxu0 0
        %4490 = vmatpush1.bf16.msra.mxu0 0
        %4491 = vmatprep.subr.bf16.mxu0 0
        %4492 = vmatpush1.bf16.msra.mxu0 0
        %4493 = vmatprep.subr.bf16.mxu0 0
        %4494 = vmatpush1.bf16.msra.mxu0 0
        %4495 = vmatprep.subr.bf16.mxu0 0
        %4496 = vmatpush1.bf16.msra.mxu0 0
        %4497 = vmatprep.subr.bf16.mxu0 0
        %4498 = vmatpush1.bf16.msra.mxu0 0
        %4499 = vmatprep.subr.bf16.mxu0 0
        %4500 = vmatpush1.bf16.msra.mxu0 0
        %4501 = vmatprep.subr.bf16.mxu0 0
        %4502 = vmatpush1.bf16.msra.mxu0 0
        %4503 = vmatprep.subr.bf16.mxu0 0
        %4504 = vmatpush1.bf16.msra.mxu0 0
        %4505 = vmatprep.subr.bf16.mxu0 0
        %4506 = vmatpush1.bf16.msra.mxu0 0
        %4507 = vmatprep.mubr.bf16.mxu0 0
        %4508 = vmatmul.mubr.bf16.gmra.mrb[0].mxu0 %v4464
        %v4509 = vpop.f32.mrb[0].mxu0
        %v4510 = vadd.f32 0.0, %v4509
        %v4511 = vpop.f32.mrb[0].mxu0
        %v4512 = vpop.f32.mrb[0].mxu0
        %v4513 = vadd.f32 0.0, %v4512
        %v4514 = vpop.f32.mrb[0].mxu0
        %4515 = vmatprep.mubr.bf16.mxu0 0
        %4516 = vmatmul.mubr.bf16.gmra.mrb[0].mxu0 %v4467
        %v4517 = vpop.f32.mrb[0].mxu0
        %v4518 = vadd.f32 0.0, %v4517
        %v4519 = vpop.f32.mrb[0].mxu0
        %v4520 = vpop.f32.mrb[0].mxu0
        %v4521 = vadd.f32 0.0, %v4520
        %v4522 = vpop.f32.mrb[0].mxu0
        %4523 = vmatprep.mubr.bf16.mxu0 0
        %4524 = vmatmul.mubr.bf16.gmra.mrb[0].mxu0 %v4470
        %v4525 = vpop.f32.mrb[0].mxu0
        %v4526 = vadd.f32 0.0, %v4525
        %v4527 = vpop.f32.mrb[0].mxu0
        %v4528 = vpop.f32.mrb[0].mxu0
        %v4529 = vadd.f32 0.0, %v4528
        %v4530 = vpop.f32.mrb[0].mxu0
        %4531 = vmatprep.mubr.bf16.mxu0 0
        %4532 = vmatmul.mubr.bf16.gmra.mrb[0].mxu0 %v4473
        %v4533 = vpop.f32.mrb[0].mxu0
        %v4534 = vadd.f32 0.0, %v4533
        %v4535 = vpop.f32.mrb[0].mxu0
        %v4536 = vpop.f32.mrb[0].mxu0
        %v4537 = vadd.f32 0.0, %v4536
        %v4538 = vpop.f32.mrb[0].mxu0
        %4539 = vdwg.mxu0
        %v4541 = vsel %vm3418, %v4143, 0
        %v4544 = vsel %vm3418, %v4144, 0
        %v4547 = vsel %vm3418, %v4145, 0
        %v4550 = vsel %vm3418, %v4146, 0
        %4552 = vmatprep.subr.bf16.mxu0 0
        %4553 = vmatpush1.bf16.msra.mxu0 %v2694
        %4554 = vmatprep.subr.bf16.mxu0 0
        %4555 = vmatpush1.bf16.msra.mxu0 %v2695
        %4556 = vmatprep.subr.bf16.mxu0 0
        %4557 = vmatpush1.bf16.msra.mxu0 %v2696
        %4558 = vmatprep.subr.bf16.mxu0 0
        %4559 = vmatpush1.bf16.msra.mxu0 %v2697
        %4560 = vmatprep.subr.bf16.mxu0 0
        %4561 = vmatpush1.bf16.msra.mxu0 0
        %4562 = vmatprep.subr.bf16.mxu0 0
        %4563 = vmatpush1.bf16.msra.mxu0 0
        %4564 = vmatprep.subr.bf16.mxu0 0
        %4565 = vmatpush1.bf16.msra.mxu0 0
        %4566 = vmatprep.subr.bf16.mxu0 0
        %4567 = vmatpush1.bf16.msra.mxu0 0
        %4568 = vmatprep.subr.bf16.mxu0 0
        %4569 = vmatpush1.bf16.msra.mxu0 0
        %4570 = vmatprep.subr.bf16.mxu0 0
        %4571 = vmatpush1.bf16.msra.mxu0 0
        %4572 = vmatprep.subr.bf16.mxu0 0
        %4573 = vmatpush1.bf16.msra.mxu0 0
        %4574 = vmatprep.subr.bf16.mxu0 0
        %4575 = vmatpush1.bf16.msra.mxu0 0
        %4576 = vmatprep.subr.bf16.mxu0 0
        %4577 = vmatpush1.bf16.msra.mxu0 0
        %4578 = vmatprep.subr.bf16.mxu0 0
        %4579 = vmatpush1.bf16.msra.mxu0 0
        %4580 = vmatprep.subr.bf16.mxu0 0
        %4581 = vmatpush1.bf16.msra.mxu0 0
        %4582 = vmatprep.subr.bf16.mxu0 0
        %4583 = vmatpush1.bf16.msra.mxu0 0
        %4584 = vmatprep.mubr.bf16.mxu0 0
        %4585 = vmatmul.mubr.bf16.gmra.mrb[0].mxu0 %v4541
        %v4586 = vpop.f32.mrb[0].mxu0
        %v4587 = vadd.f32 0.0, %v4586
        %v4588 = vpop.f32.mrb[0].mxu0
        %v4589 = vpop.f32.mrb[0].mxu0
        %v4590 = vadd.f32 0.0, %v4589
        %v4591 = vpop.f32.mrb[0].mxu0
        %4592 = vmatprep.mubr.bf16.mxu0 0
        %4593 = vmatmul.mubr.bf16.gmra.mrb[0].mxu0 %v4544
        %v4594 = vpop.f32.mrb[0].mxu0
        %v4595 = vadd.f32 0.0, %v4594
        %v4596 = vpop.f32.mrb[0].mxu0
        %v4597 = vpop.f32.mrb[0].mxu0
        %v4598 = vadd.f32 0.0, %v4597
        %v4599 = vpop.f32.mrb[0].mxu0
        %4600 = vmatprep.mubr.bf16.mxu0 0
        %4601 = vmatmul.mubr.bf16.gmra.mrb[0].mxu0 %v4547
        %v4602 = vpop.f32.mrb[0].mxu0
        %v4603 = vadd.f32 0.0, %v4602
        %v4604 = vpop.f32.mrb[0].mxu0
        %v4605 = vpop.f32.mrb[0].mxu0
        %v4606 = vadd.f32 0.0, %v4605
        %v4607 = vpop.f32.mrb[0].mxu0
        %4608 = vmatprep.mubr.bf16.mxu0 0
        %4609 = vmatmul.mubr.bf16.gmra.mrb[0].mxu0 %v4550
        %v4610 = vpop.f32.mrb[0].mxu0
        %v4611 = vadd.f32 0.0, %v4610
        %v4612 = vpop.f32.mrb[0].mxu0
        %v4613 = vpop.f32.mrb[0].mxu0
        %v4614 = vadd.f32 0.0, %v4613
        %v4615 = vpop.f32.mrb[0].mxu0
        %4616 = vdwg.mxu0
        %v4618 = vsel %vm3418, %v4147, 0
        %v4621 = vsel %vm3418, %v4148, 0
        %v4624 = vsel %vm3418, %v4149, 0
        %v4627 = vsel %vm3418, %v4150, 0
        %4629 = vmatprep.subr.bf16.mxu0 0
        %4630 = vmatpush1.bf16.msra.mxu0 %v2698
        %4631 = vmatprep.subr.bf16.mxu0 0
        %4632 = vmatpush1.bf16.msra.mxu0 %v2699
        %4633 = vmatprep.subr.bf16.mxu0 0
        %4634 = vmatpush1.bf16.msra.mxu0 %v2700
        %4635 = vmatprep.subr.bf16.mxu0 0
        %4636 = vmatpush1.bf16.msra.mxu0 %v2701
        %4637 = vmatprep.subr.bf16.mxu0 0
        %4638 = vmatpush1.bf16.msra.mxu0 0
        %4639 = vmatprep.subr.bf16.mxu0 0
        %4640 = vmatpush1.bf16.msra.mxu0 0
        %4641 = vmatprep.subr.bf16.mxu0 0
        %4642 = vmatpush1.bf16.msra.mxu0 0
        %4643 = vmatprep.subr.bf16.mxu0 0
        %4644 = vmatpush1.bf16.msra.mxu0 0
        %4645 = vmatprep.subr.bf16.mxu0 0
        %4646 = vmatpush1.bf16.msra.mxu0 0
        %4647 = vmatprep.subr.bf16.mxu0 0
        %4648 = vmatpush1.bf16.msra.mxu0 0
        %4649 = vmatprep.subr.bf16.mxu0 0
        %4650 = vmatpush1.bf16.msra.mxu0 0
        %4651 = vmatprep.subr.bf16.mxu0 0
        %4652 = vmatpush1.bf16.msra.mxu0 0
        %4653 = vmatprep.subr.bf16.mxu0 0
        %4654 = vmatpush1.bf16.msra.mxu0 0
        %4655 = vmatprep.subr.bf16.mxu0 0
        %4656 = vmatpush1.bf16.msra.mxu0 0
        %4657 = vmatprep.subr.bf16.mxu0 0
        %4658 = vmatpush1.bf16.msra.mxu0 0
        %4659 = vmatprep.subr.bf16.mxu0 0
        %4660 = vmatpush1.bf16.msra.mxu0 0
        %4661 = vmatprep.mubr.bf16.mxu0 0
        %4662 = vmatmul.mubr.bf16.gmra.mrb[0].mxu0 %v4618
        %v4663 = vpop.f32.mrb[0].mxu0
        %v4664 = vadd.f32 0.0, %v4663
        %v4665 = vpop.f32.mrb[0].mxu0
        %v4666 = vpop.f32.mrb[0].mxu0
        %v4667 = vadd.f32 0.0, %v4666
        %v4668 = vpop.f32.mrb[0].mxu0
        %4669 = vmatprep.mubr.bf16.mxu0 0
        %4670 = vmatmul.mubr.bf16.gmra.mrb[0].mxu0 %v4621
        %v4671 = vpop.f32.mrb[0].mxu0
        %v4672 = vadd.f32 0.0, %v4671
        %v4673 = vpop.f32.mrb[0].mxu0
        %v4674 = vpop.f32.mrb[0].mxu0
        %v4675 = vadd.f32 0.0, %v4674
        %v4676 = vpop.f32.mrb[0].mxu0
        %4677 = vmatprep.mubr.bf16.mxu0 0
        %4678 = vmatmul.mubr.bf16.gmra.mrb[0].mxu0 %v4624
        %v4679 = vpop.f32.mrb[0].mxu0
        %v4680 = vadd.f32 0.0, %v4679
        %v4681 = vpop.f32.mrb[0].mxu0
        %v4682 = vpop.f32.mrb[0].mxu0
        %v4683 = vadd.f32 0.0, %v4682
        %v4684 = vpop.f32.mrb[0].mxu0
        %4685 = vmatprep.mubr.bf16.mxu0 0
        %4686 = vmatmul.mubr.bf16.gmra.mrb[0].mxu0 %v4627
        %v4687 = vpop.f32.mrb[0].mxu0
        %v4688 = vadd.f32 0.0, %v4687
        %v4689 = vpop.f32.mrb[0].mxu0
        %v4690 = vpop.f32.mrb[0].mxu0
        %v4691 = vadd.f32 0.0, %v4690
        %v4692 = vpop.f32.mrb[0].mxu0
        %4693 = vdwg.mxu0
        %v4695 = vsel %vm3418, %v4151, 0
        %v4698 = vsel %vm3418, %v4152, 0
        %v4701 = vsel %vm3418, %v4153, 0
        %v4704 = vsel %vm3418, %v4154, 0
        %4706 = vmatprep.subr.bf16.mxu0 0
        %4707 = vmatpush1.bf16.msra.mxu0 %v2702
        %4708 = vmatprep.subr.bf16.mxu0 0
        %4709 = vmatpush1.bf16.msra.mxu0 %v2703
        %4710 = vmatprep.subr.bf16.mxu0 0
        %4711 = vmatpush1.bf16.msra.mxu0 %v2704
        %4712 = vmatprep.subr.bf16.mxu0 0
        %4713 = vmatpush1.bf16.msra.mxu0 %v2705
        %4714 = vmatprep.subr.bf16.mxu0 0
        %4715 = vmatpush1.bf16.msra.mxu0 0
        %4716 = vmatprep.subr.bf16.mxu0 0
        %4717 = vmatpush1.bf16.msra.mxu0 0
        %4718 = vmatprep.subr.bf16.mxu0 0
        %4719 = vmatpush1.bf16.msra.mxu0 0
        %4720 = vmatprep.subr.bf16.mxu0 0
        %4721 = vmatpush1.bf16.msra.mxu0 0
        %4722 = vmatprep.subr.bf16.mxu0 0
        %4723 = vmatpush1.bf16.msra.mxu0 0
        %4724 = vmatprep.subr.bf16.mxu0 0
        %4725 = vmatpush1.bf16.msra.mxu0 0
        %4726 = vmatprep.subr.bf16.mxu0 0
        %4727 = vmatpush1.bf16.msra.mxu0 0
        %4728 = vmatprep.subr.bf16.mxu0 0
        %4729 = vmatpush1.bf16.msra.mxu0 0
        %4730 = vmatprep.subr.bf16.mxu0 0
        %4731 = vmatpush1.bf16.msra.mxu0 0
        %4732 = vmatprep.subr.bf16.mxu0 0
        %4733 = vmatpush1.bf16.msra.mxu0 0
        %4734 = vmatprep.subr.bf16.mxu0 0
        %4735 = vmatpush1.bf16.msra.mxu0 0
        %4736 = vmatprep.subr.bf16.mxu0 0
        %4737 = vmatpush1.bf16.msra.mxu0 0
        %4738 = vmatprep.mubr.bf16.mxu0 0
        %4739 = vmatmul.mubr.bf16.gmra.mrb[0].mxu0 %v4695
        %v4740 = vpop.f32.mrb[0].mxu0
        %v4741 = vadd.f32 0.0, %v4740
        %v4742 = vpop.f32.mrb[0].mxu0
        %v4743 = vpop.f32.mrb[0].mxu0
        %v4744 = vadd.f32 0.0, %v4743
        %v4745 = vpop.f32.mrb[0].mxu0
        %4746 = vmatprep.mubr.bf16.mxu0 0
        %4747 = vmatmul.mubr.bf16.gmra.mrb[0].mxu0 %v4698
        %v4748 = vpop.f32.mrb[0].mxu0
        %v4749 = vadd.f32 0.0, %v4748
        %v4750 = vpop.f32.mrb[0].mxu0
        %v4751 = vpop.f32.mrb[0].mxu0
        %v4752 = vadd.f32 0.0, %v4751
        %v4753 = vpop.f32.mrb[0].mxu0
        %4754 = vmatprep.mubr.bf16.mxu0 0
        %4755 = vmatmul.mubr.bf16.gmra.mrb[0].mxu0 %v4701
        %v4756 = vpop.f32.mrb[0].mxu0
        %v4757 = vadd.f32 0.0, %v4756
        %v4758 = vpop.f32.mrb[0].mxu0
        %v4759 = vpop.f32.mrb[0].mxu0
        %v4760 = vadd.f32 0.0, %v4759
        %v4761 = vpop.f32.mrb[0].mxu0
        %4762 = vmatprep.mubr.bf16.mxu0 0
        %4763 = vmatmul.mubr.bf16.gmra.mrb[0].mxu0 %v4704
        %v4764 = vpop.f32.mrb[0].mxu0
        %v4765 = vadd.f32 0.0, %v4764
        %v4766 = vpop.f32.mrb[0].mxu0
        %v4767 = vpop.f32.mrb[0].mxu0
        %v4768 = vadd.f32 0.0, %v4767
        %v4769 = vpop.f32.mrb[0].mxu0
        %4770 = vdwg.mxu0
        %v4771 = vpack.c.bf16 %v4205, %v4202
        %v4772 = vpack.c.bf16 %v4213, %v4210
        %v4773 = vpack.c.bf16 %v4221, %v4218
        %v4774 = vpack.c.bf16 %v4229, %v4226
        %v4775 = vld [vmem:[#allocation13] sm:$0x3]
        %v4776 = vpack.c.bf16 %v4282, %v4279
        %v4777 = vpack.c.bf16 %v4290, %v4287
        %v4778 = vpack.c.bf16 %v4298, %v4295
        %v4779 = vpack.c.bf16 %v4306, %v4303
        %s4780 = scalar_lea.vmem [#allocation13], 2
        %v4781 = vld [vmem:[%s4780] sm:$0x3]
        %v4783 = vsel %vm460, %v4776, 0
        %v4786 = vsel %vm460, %v4777, 0
        %v4789 = vsel %vm460, %v4778, 0
        %v4792 = vsel %vm460, %v4779, 0
        %vm4794 = vcmask 1041408
        %v4796 = vsel %vm4794, %v4781, 0
        %4798 = vmatprep.subr.bf16.mxu0 0
        %4799 = vmatpush1.bf16.msra.mxu0 %v4796
        %4800 = vmatprep.subr.bf16.mxu0 0
        %4801 = vmatpush1.bf16.msra.mxu0 0
        %4802 = vmatprep.subr.bf16.mxu0 0
        %4803 = vmatpush1.bf16.msra.mxu0 0
        %4804 = vmatprep.subr.bf16.mxu0 0
        %4805 = vmatpush1.bf16.msra.mxu0 0
        %4806 = vmatprep.subr.bf16.mxu0 0
        %4807 = vmatpush1.bf16.msra.mxu0 0
        %4808 = vmatprep.subr.bf16.mxu0 0
        %4809 = vmatpush1.bf16.msra.mxu0 0
        %4810 = vmatprep.subr.bf16.mxu0 0
        %4811 = vmatpush1.bf16.msra.mxu0 0
        %4812 = vmatprep.subr.bf16.mxu0 0
        %4813 = vmatpush1.bf16.msra.mxu0 0
        %4814 = vmatprep.subr.bf16.mxu0 0
        %4815 = vmatpush1.bf16.msra.mxu0 0
        %4816 = vmatprep.subr.bf16.mxu0 0
        %4817 = vmatpush1.bf16.msra.mxu0 0
        %4818 = vmatprep.subr.bf16.mxu0 0
        %4819 = vmatpush1.bf16.msra.mxu0 0
        %4820 = vmatprep.subr.bf16.mxu0 0
        %4821 = vmatpush1.bf16.msra.mxu0 0
        %4822 = vmatprep.subr.bf16.mxu0 0
        %4823 = vmatpush1.bf16.msra.mxu0 0
        %4824 = vmatprep.subr.bf16.mxu0 0
        %4825 = vmatpush1.bf16.msra.mxu0 0
        %4826 = vmatprep.subr.bf16.mxu0 0
        %4827 = vmatpush1.bf16.msra.mxu0 0
        %4828 = vmatprep.subr.bf16.mxu0 0
        %4829 = vmatpush1.bf16.msra.mxu0 0
        %4830 = vmatprep.mubr.bf16.mxu0 0
        %4831 = vmatmul.mubr.bf16.gmra.mrb[0].mxu0 %v4783
        %v4832 = vpop.f32.mrb[0].mxu0
        %v4833 = vadd.f32 0.0, %v4832
        %v4834 = vpop.f32.mrb[0].mxu0
        %v4835 = vpop.f32.mrb[0].mxu0
        %v4836 = vadd.f32 0.0, %v4835
        %v4837 = vpop.f32.mrb[0].mxu0
        %4838 = vmatprep.mubr.bf16.mxu0 0
        %4839 = vmatmul.mubr.bf16.gmra.mrb[0].mxu0 %v4786
        %v4840 = vpop.f32.mrb[0].mxu0
        %v4841 = vadd.f32 0.0, %v4840
        %v4842 = vpop.f32.mrb[0].mxu0
        %v4843 = vpop.f32.mrb[0].mxu0
        %v4844 = vadd.f32 0.0, %v4843
        %v4845 = vpop.f32.mrb[0].mxu0
        %4846 = vmatprep.mubr.bf16.mxu0 0
        %4847 = vmatmul.mubr.bf16.gmra.mrb[0].mxu0 %v4789
        %v4848 = vpop.f32.mrb[0].mxu0
        %v4849 = vadd.f32 0.0, %v4848
        %v4850 = vpop.f32.mrb[0].mxu0
        %v4851 = vpop.f32.mrb[0].mxu0
        %v4852 = vadd.f32 0.0, %v4851
        %v4853 = vpop.f32.mrb[0].mxu0
        %4854 = vmatprep.mubr.bf16.mxu0 0
        %4855 = vmatmul.mubr.bf16.gmra.mrb[0].mxu0 %v4792
        %v4856 = vpop.f32.mrb[0].mxu0
        %v4857 = vadd.f32 0.0, %v4856
        %v4858 = vpop.f32.mrb[0].mxu0
        %v4859 = vpop.f32.mrb[0].mxu0
        %v4860 = vadd.f32 0.0, %v4859
        %v4861 = vpop.f32.mrb[0].mxu0
        %4862 = vdwg.mxu0
        %v4864 = vsel %vm460, %v4771, 0
        %v4867 = vsel %vm460, %v4772, 0
        %v4870 = vsel %vm460, %v4773, 0
        %v4873 = vsel %vm460, %v4774, 0
        %v4876 = vsel %vm4794, %v4775, 0
        %4878 = vmatprep.subr.bf16.mxu0 0
        %4879 = vmatpush1.bf16.msra.mxu0 %v4876
        %4880 = vmatprep.subr.bf16.mxu0 0
        %4881 = vmatpush1.bf16.msra.mxu0 0
        %4882 = vmatprep.subr.bf16.mxu0 0
        %4883 = vmatpush1.bf16.msra.mxu0 0
        %4884 = vmatprep.subr.bf16.mxu0 0
        %4885 = vmatpush1.bf16.msra.mxu0 0
        %4886 = vmatprep.subr.bf16.mxu0 0
        %4887 = vmatpush1.bf16.msra.mxu0 0
        %4888 = vmatprep.subr.bf16.mxu0 0
        %4889 = vmatpush1.bf16.msra.mxu0 0
        %4890 = vmatprep.subr.bf16.mxu0 0
        %4891 = vmatpush1.bf16.msra.mxu0 0
        %4892 = vmatprep.subr.bf16.mxu0 0
        %4893 = vmatpush1.bf16.msra.mxu0 0
        %4894 = vmatprep.subr.bf16.mxu0 0
        %4895 = vmatpush1.bf16.msra.mxu0 0
        %4896 = vmatprep.subr.bf16.mxu0 0
        %4897 = vmatpush1.bf16.msra.mxu0 0
        %4898 = vmatprep.subr.bf16.mxu0 0
        %4899 = vmatpush1.bf16.msra.mxu0 0
        %4900 = vmatprep.subr.bf16.mxu0 0
        %4901 = vmatpush1.bf16.msra.mxu0 0
        %4902 = vmatprep.subr.bf16.mxu0 0
        %4903 = vmatpush1.bf16.msra.mxu0 0
        %4904 = vmatprep.subr.bf16.mxu0 0
        %4905 = vmatpush1.bf16.msra.mxu0 0
        %4906 = vmatprep.subr.bf16.mxu0 0
        %4907 = vmatpush1.bf16.msra.mxu0 0
        %4908 = vmatprep.subr.bf16.mxu0 0
        %4909 = vmatpush1.bf16.msra.mxu0 0
        %4910 = vmatprep.mubr.bf16.mxu0 0
        %4911 = vmatmul.mubr.bf16.gmra.mrb[0].mxu0 %v4864
        %v4912 = vpop.f32.mrb[0].mxu0
        %v4913 = vadd.f32 %v4833, %v4912
        %v4914 = vpop.f32.mrb[0].mxu0
        %v4915 = vpop.f32.mrb[0].mxu0
        %v4916 = vadd.f32 %v4836, %v4915
        %v4917 = vpop.f32.mrb[0].mxu0
        %4918 = vmatprep.mubr.bf16.mxu0 0
        %4919 = vmatmul.mubr.bf16.gmra.mrb[0].mxu0 %v4867
        %v4920 = vpop.f32.mrb[0].mxu0
        %v4921 = vadd.f32 %v4841, %v4920
        %v4922 = vpop.f32.mrb[0].mxu0
        %v4923 = vpop.f32.mrb[0].mxu0
        %v4924 = vadd.f32 %v4844, %v4923
        %v4925 = vpop.f32.mrb[0].mxu0
        %4926 = vmatprep.mubr.bf16.mxu0 0
        %4927 = vmatmul.mubr.bf16.gmra.mrb[0].mxu0 %v4870
        %v4928 = vpop.f32.mrb[0].mxu0
        %v4929 = vadd.f32 %v4849, %v4928
        %v4930 = vpop.f32.mrb[0].mxu0
        %v4931 = vpop.f32.mrb[0].mxu0
        %v4932 = vadd.f32 %v4852, %v4931
        %v4933 = vpop.f32.mrb[0].mxu0
        %4934 = vmatprep.mubr.bf16.mxu0 0
        %4935 = vmatmul.mubr.bf16.gmra.mrb[0].mxu0 %v4873
        %v4936 = vpop.f32.mrb[0].mxu0
        %v4937 = vadd.f32 %v4857, %v4936
        %v4938 = vpop.f32.mrb[0].mxu0
        %v4939 = vpop.f32.mrb[0].mxu0
        %v4940 = vadd.f32 %v4860, %v4939
        %v4941 = vpop.f32.mrb[0].mxu0
        %4942 = vdwg.mxu0
        %v4943 = vpack.c.bf16 %v4359, %v4356
        %v4944 = vpack.c.bf16 %v4367, %v4364
        %v4945 = vpack.c.bf16 %v4375, %v4372
        %v4946 = vpack.c.bf16 %v4383, %v4380
        %s4947 = scalar_lea.vmem [#allocation13], 4
        %v4948 = vld [vmem:[%s4947] sm:$0x3]
        %v4950 = vsel %vm460, %v4943, 0
        %v4953 = vsel %vm460, %v4944, 0
        %v4956 = vsel %vm460, %v4945, 0
        %v4959 = vsel %vm460, %v4946, 0
        %v4962 = vsel %vm4794, %v4948, 0
        %4964 = vmatprep.subr.bf16.mxu0 0
        %4965 = vmatpush1.bf16.msra.mxu0 %v4962
        %4966 = vmatprep.subr.bf16.mxu0 0
        %4967 = vmatpush1.bf16.msra.mxu0 0
        %4968 = vmatprep.subr.bf16.mxu0 0
        %4969 = vmatpush1.bf16.msra.mxu0 0
        %4970 = vmatprep.subr.bf16.mxu0 0
        %4971 = vmatpush1.bf16.msra.mxu0 0
        %4972 = vmatprep.subr.bf16.mxu0 0
        %4973 = vmatpush1.bf16.msra.mxu0 0
        %4974 = vmatprep.subr.bf16.mxu0 0
        %4975 = vmatpush1.bf16.msra.mxu0 0
        %4976 = vmatprep.subr.bf16.mxu0 0
        %4977 = vmatpush1.bf16.msra.mxu0 0
        %4978 = vmatprep.subr.bf16.mxu0 0
        %4979 = vmatpush1.bf16.msra.mxu0 0
        %4980 = vmatprep.subr.bf16.mxu0 0
        %4981 = vmatpush1.bf16.msra.mxu0 0
        %4982 = vmatprep.subr.bf16.mxu0 0
        %4983 = vmatpush1.bf16.msra.mxu0 0
        %4984 = vmatprep.subr.bf16.mxu0 0
        %4985 = vmatpush1.bf16.msra.mxu0 0
        %4986 = vmatprep.subr.bf16.mxu0 0
        %4987 = vmatpush1.bf16.msra.mxu0 0
        %4988 = vmatprep.subr.bf16.mxu0 0
        %4989 = vmatpush1.bf16.msra.mxu0 0
        %4990 = vmatprep.subr.bf16.mxu0 0
        %4991 = vmatpush1.bf16.msra.mxu0 0
        %4992 = vmatprep.subr.bf16.mxu0 0
        %4993 = vmatpush1.bf16.msra.mxu0 0
        %4994 = vmatprep.subr.bf16.mxu0 0
        %4995 = vmatpush1.bf16.msra.mxu0 0
        %4996 = vmatprep.mubr.bf16.mxu0 0
        %4997 = vmatmul.mubr.bf16.gmra.mrb[0].mxu0 %v4950
        %v4998 = vpop.f32.mrb[0].mxu0
        %v4999 = vadd.f32 0.0, %v4998
        %v5000 = vpop.f32.mrb[0].mxu0
        %v5001 = vpop.f32.mrb[0].mxu0
        %v5002 = vadd.f32 0.0, %v5001
        %v5003 = vpop.f32.mrb[0].mxu0
        %5004 = vmatprep.mubr.bf16.mxu0 0
        %5005 = vmatmul.mubr.bf16.gmra.mrb[0].mxu0 %v4953
        %v5006 = vpop.f32.mrb[0].mxu0
        %v5007 = vadd.f32 0.0, %v5006
        %v5008 = vpop.f32.mrb[0].mxu0
        %v5009 = vpop.f32.mrb[0].mxu0
        %v5010 = vadd.f32 0.0, %v5009
        %v5011 = vpop.f32.mrb[0].mxu0
        %5012 = vmatprep.mubr.bf16.mxu0 0
        %5013 = vmatmul.mubr.bf16.gmra.mrb[0].mxu0 %v4956
        %v5014 = vpop.f32.mrb[0].mxu0
        %v5015 = vadd.f32 0.0, %v5014
        %v5016 = vpop.f32.mrb[0].mxu0
        %v5017 = vpop.f32.mrb[0].mxu0
        %v5018 = vadd.f32 0.0, %v5017
        %v5019 = vpop.f32.mrb[0].mxu0
        %5020 = vmatprep.mubr.bf16.mxu0 0
        %5021 = vmatmul.mubr.bf16.gmra.mrb[0].mxu0 %v4959
        %v5022 = vpop.f32.mrb[0].mxu0
        %v5023 = vadd.f32 0.0, %v5022
        %v5024 = vpop.f32.mrb[0].mxu0
        %v5025 = vpop.f32.mrb[0].mxu0
        %v5026 = vadd.f32 0.0, %v5025
        %v5027 = vpop.f32.mrb[0].mxu0
        %5028 = vdwg.mxu0
        %v5029 = vadd.f32 %v4913, %v4999
        %v5030 = vadd.f32 %v4916, %v5002
        %v5031 = vadd.f32 %v4921, %v5007
        %v5032 = vadd.f32 %v4924, %v5010
        %v5033 = vadd.f32 %v4929, %v5015
        %v5034 = vadd.f32 %v4932, %v5018
        %v5035 = vadd.f32 %v4937, %v5023
        %v5036 = vadd.f32 %v4940, %v5026
        %v5037 = vpack.c.bf16 %v4436, %v4433
        %v5038 = vpack.c.bf16 %v4444, %v4441
        %v5039 = vpack.c.bf16 %v4452, %v4449
        %v5040 = vpack.c.bf16 %v4460, %v4457
        %s5041 = scalar_lea.vmem [#allocation13], 6
        %v5042 = vld [vmem:[%s5041] sm:$0x3]
        %v5044 = vsel %vm460, %v5037, 0
        %v5047 = vsel %vm460, %v5038, 0
        %v5050 = vsel %vm460, %v5039, 0
        %v5053 = vsel %vm460, %v5040, 0
        %v5056 = vsel %vm4794, %v5042, 0
        %5058 = vmatprep.subr.bf16.mxu0 0
        %5059 = vmatpush1.bf16.msra.mxu0 %v5056
        %5060 = vmatprep.subr.bf16.mxu0 0
        %5061 = vmatpush1.bf16.msra.mxu0 0
        %5062 = vmatprep.subr.bf16.mxu0 0
        %5063 = vmatpush1.bf16.msra.mxu0 0
        %5064 = vmatprep.subr.bf16.mxu0 0
        %5065 = vmatpush1.bf16.msra.mxu0 0
        %5066 = vmatprep.subr.bf16.mxu0 0
        %5067 = vmatpush1.bf16.msra.mxu0 0
        %5068 = vmatprep.subr.bf16.mxu0 0
        %5069 = vmatpush1.bf16.msra.mxu0 0
        %5070 = vmatprep.subr.bf16.mxu0 0
        %5071 = vmatpush1.bf16.msra.mxu0 0
        %5072 = vmatprep.subr.bf16.mxu0 0
        %5073 = vmatpush1.bf16.msra.mxu0 0
        %5074 = vmatprep.subr.bf16.mxu0 0
        %5075 = vmatpush1.bf16.msra.mxu0 0
        %5076 = vmatprep.subr.bf16.mxu0 0
        %5077 = vmatpush1.bf16.msra.mxu0 0
        %5078 = vmatprep.subr.bf16.mxu0 0
        %5079 = vmatpush1.bf16.msra.mxu0 0
        %5080 = vmatprep.subr.bf16.mxu0 0
        %5081 = vmatpush1.bf16.msra.mxu0 0
        %5082 = vmatprep.subr.bf16.mxu0 0
        %5083 = vmatpush1.bf16.msra.mxu0 0
        %5084 = vmatprep.subr.bf16.mxu0 0
        %5085 = vmatpush1.bf16.msra.mxu0 0
        %5086 = vmatprep.subr.bf16.mxu0 0
        %5087 = vmatpush1.bf16.msra.mxu0 0
        %5088 = vmatprep.subr.bf16.mxu0 0
        %5089 = vmatpush1.bf16.msra.mxu0 0
        %5090 = vmatprep.mubr.bf16.mxu0 0
        %5091 = vmatmul.mubr.bf16.gmra.mrb[0].mxu0 %v5044
        %v5092 = vpop.f32.mrb[0].mxu0
        %v5093 = vadd.f32 0.0, %v5092
        %v5094 = vpop.f32.mrb[0].mxu0
        %v5095 = vpop.f32.mrb[0].mxu0
        %v5096 = vadd.f32 0.0, %v5095
        %v5097 = vpop.f32.mrb[0].mxu0
        %5098 = vmatprep.mubr.bf16.mxu0 0
        %5099 = vmatmul.mubr.bf16.gmra.mrb[0].mxu0 %v5047
        %v5100 = vpop.f32.mrb[0].mxu0
        %v5101 = vadd.f32 0.0, %v5100
        %v5102 = vpop.f32.mrb[0].mxu0
        %v5103 = vpop.f32.mrb[0].mxu0
        %v5104 = vadd.f32 0.0, %v5103
        %v5105 = vpop.f32.mrb[0].mxu0
        %5106 = vmatprep.mubr.bf16.mxu0 0
        %5107 = vmatmul.mubr.bf16.gmra.mrb[0].mxu0 %v5050
        %v5108 = vpop.f32.mrb[0].mxu0
        %v5109 = vadd.f32 0.0, %v5108
        %v5110 = vpop.f32.mrb[0].mxu0
        %v5111 = vpop.f32.mrb[0].mxu0
        %v5112 = vadd.f32 0.0, %v5111
        %v5113 = vpop.f32.mrb[0].mxu0
        %5114 = vmatprep.mubr.bf16.mxu0 0
        %5115 = vmatmul.mubr.bf16.gmra.mrb[0].mxu0 %v5053
        %v5116 = vpop.f32.mrb[0].mxu0
        %v5117 = vadd.f32 0.0, %v5116
        %v5118 = vpop.f32.mrb[0].mxu0
        %v5119 = vpop.f32.mrb[0].mxu0
        %v5120 = vadd.f32 0.0, %v5119
        %v5121 = vpop.f32.mrb[0].mxu0
        %5122 = vdwg.mxu0
        %v5123 = vadd.f32 %v5029, %v5093
        %v5124 = vadd.f32 %v5030, %v5096
        %v5125 = vadd.f32 %v5031, %v5101
        %v5126 = vadd.f32 %v5032, %v5104
        %v5127 = vadd.f32 %v5033, %v5109
        %v5128 = vadd.f32 %v5034, %v5112
        %v5129 = vadd.f32 %v5035, %v5117
        %v5130 = vadd.f32 %v5036, %v5120
        %v5131 = vpack.c.bf16 %v4513, %v4510
        %v5132 = vpack.c.bf16 %v4521, %v4518
        %v5133 = vpack.c.bf16 %v4529, %v4526
        %v5134 = vpack.c.bf16 %v4537, %v4534
        %s5135 = scalar_lea.vmem [#allocation13], 8
        %v5136 = vld [vmem:[%s5135] sm:$0x3]
        %v5138 = vsel %vm460, %v5131, 0
        %v5141 = vsel %vm460, %v5132, 0
        %v5144 = vsel %vm460, %v5133, 0
        %v5147 = vsel %vm460, %v5134, 0
        %v5150 = vsel %vm4794, %v5136, 0
        %5152 = vmatprep.subr.bf16.mxu0 0
        %5153 = vmatpush1.bf16.msra.mxu0 %v5150
        %5154 = vmatprep.subr.bf16.mxu0 0
        %5155 = vmatpush1.bf16.msra.mxu0 0
        %5156 = vmatprep.subr.bf16.mxu0 0
        %5157 = vmatpush1.bf16.msra.mxu0 0
        %5158 = vmatprep.subr.bf16.mxu0 0
        %5159 = vmatpush1.bf16.msra.mxu0 0
        %5160 = vmatprep.subr.bf16.mxu0 0
        %5161 = vmatpush1.bf16.msra.mxu0 0
        %5162 = vmatprep.subr.bf16.mxu0 0
        %5163 = vmatpush1.bf16.msra.mxu0 0
        %5164 = vmatprep.subr.bf16.mxu0 0
        %5165 = vmatpush1.bf16.msra.mxu0 0
        %5166 = vmatprep.subr.bf16.mxu0 0
        %5167 = vmatpush1.bf16.msra.mxu0 0
        %5168 = vmatprep.subr.bf16.mxu0 0
        %5169 = vmatpush1.bf16.msra.mxu0 0
        %5170 = vmatprep.subr.bf16.mxu0 0
        %5171 = vmatpush1.bf16.msra.mxu0 0
        %5172 = vmatprep.subr.bf16.mxu0 0
        %5173 = vmatpush1.bf16.msra.mxu0 0
        %5174 = vmatprep.subr.bf16.mxu0 0
        %5175 = vmatpush1.bf16.msra.mxu0 0
        %5176 = vmatprep.subr.bf16.mxu0 0
        %5177 = vmatpush1.bf16.msra.mxu0 0
        %5178 = vmatprep.subr.bf16.mxu0 0
        %5179 = vmatpush1.bf16.msra.mxu0 0
        %5180 = vmatprep.subr.bf16.mxu0 0
        %5181 = vmatpush1.bf16.msra.mxu0 0
        %5182 = vmatprep.subr.bf16.mxu0 0
        %5183 = vmatpush1.bf16.msra.mxu0 0
        %5184 = vmatprep.mubr.bf16.mxu0 0
        %5185 = vmatmul.mubr.bf16.gmra.mrb[0].mxu0 %v5138
        %v5186 = vpop.f32.mrb[0].mxu0
        %v5187 = vadd.f32 0.0, %v5186
        %v5188 = vpop.f32.mrb[0].mxu0
        %v5189 = vpop.f32.mrb[0].mxu0
        %v5190 = vadd.f32 0.0, %v5189
        %v5191 = vpop.f32.mrb[0].mxu0
        %5192 = vmatprep.mubr.bf16.mxu0 0
        %5193 = vmatmul.mubr.bf16.gmra.mrb[0].mxu0 %v5141
        %v5194 = vpop.f32.mrb[0].mxu0
        %v5195 = vadd.f32 0.0, %v5194
        %v5196 = vpop.f32.mrb[0].mxu0
        %v5197 = vpop.f32.mrb[0].mxu0
        %v5198 = vadd.f32 0.0, %v5197
        %v5199 = vpop.f32.mrb[0].mxu0
        %5200 = vmatprep.mubr.bf16.mxu0 0
        %5201 = vmatmul.mubr.bf16.gmra.mrb[0].mxu0 %v5144
        %v5202 = vpop.f32.mrb[0].mxu0
        %v5203 = vadd.f32 0.0, %v5202
        %v5204 = vpop.f32.mrb[0].mxu0
        %v5205 = vpop.f32.mrb[0].mxu0
        %v5206 = vadd.f32 0.0, %v5205
        %v5207 = vpop.f32.mrb[0].mxu0
        %5208 = vmatprep.mubr.bf16.mxu0 0
        %5209 = vmatmul.mubr.bf16.gmra.mrb[0].mxu0 %v5147
        %v5210 = vpop.f32.mrb[0].mxu0
        %v5211 = vadd.f32 0.0, %v5210
        %v5212 = vpop.f32.mrb[0].mxu0
        %v5213 = vpop.f32.mrb[0].mxu0
        %v5214 = vadd.f32 0.0, %v5213
        %v5215 = vpop.f32.mrb[0].mxu0
        %5216 = vdwg.mxu0
        %v5217 = vadd.f32 %v5123, %v5187
        %v5218 = vadd.f32 %v5124, %v5190
        %v5219 = vadd.f32 %v5125, %v5195
        %v5220 = vadd.f32 %v5126, %v5198
        %v5221 = vadd.f32 %v5127, %v5203
        %v5222 = vadd.f32 %v5128, %v5206
        %v5223 = vadd.f32 %v5129, %v5211
        %v5224 = vadd.f32 %v5130, %v5214
        %v5225 = vpack.c.bf16 %v4590, %v4587
        %v5226 = vpack.c.bf16 %v4598, %v4595
        %v5227 = vpack.c.bf16 %v4606, %v4603
        %v5228 = vpack.c.bf16 %v4614, %v4611
        %s5229 = scalar_lea.vmem [#allocation13], 10
        %v5230 = vld [vmem:[%s5229] sm:$0x3]
        %v5232 = vsel %vm460, %v5225, 0
        %v5235 = vsel %vm460, %v5226, 0
        %v5238 = vsel %vm460, %v5227, 0
        %v5241 = vsel %vm460, %v5228, 0
        %v5244 = vsel %vm4794, %v5230, 0
        %5246 = vmatprep.subr.bf16.mxu0 0
        %5247 = vmatpush1.bf16.msra.mxu0 %v5244
        %5248 = vmatprep.subr.bf16.mxu0 0
        %5249 = vmatpush1.bf16.msra.mxu0 0
        %5250 = vmatprep.subr.bf16.mxu0 0
        %5251 = vmatpush1.bf16.msra.mxu0 0
        %5252 = vmatprep.subr.bf16.mxu0 0
        %5253 = vmatpush1.bf16.msra.mxu0 0
        %5254 = vmatprep.subr.bf16.mxu0 0
        %5255 = vmatpush1.bf16.msra.mxu0 0
        %5256 = vmatprep.subr.bf16.mxu0 0
        %5257 = vmatpush1.bf16.msra.mxu0 0
        %5258 = vmatprep.subr.bf16.mxu0 0
        %5259 = vmatpush1.bf16.msra.mxu0 0
        %5260 = vmatprep.subr.bf16.mxu0 0
        %5261 = vmatpush1.bf16.msra.mxu0 0
        %5262 = vmatprep.subr.bf16.mxu0 0
        %5263 = vmatpush1.bf16.msra.mxu0 0
        %5264 = vmatprep.subr.bf16.mxu0 0
        %5265 = vmatpush1.bf16.msra.mxu0 0
        %5266 = vmatprep.subr.bf16.mxu0 0
        %5267 = vmatpush1.bf16.msra.mxu0 0
        %5268 = vmatprep.subr.bf16.mxu0 0
        %5269 = vmatpush1.bf16.msra.mxu0 0
        %5270 = vmatprep.subr.bf16.mxu0 0
        %5271 = vmatpush1.bf16.msra.mxu0 0
        %5272 = vmatprep.subr.bf16.mxu0 0
        %5273 = vmatpush1.bf16.msra.mxu0 0
        %5274 = vmatprep.subr.bf16.mxu0 0
        %5275 = vmatpush1.bf16.msra.mxu0 0
        %5276 = vmatprep.subr.bf16.mxu0 0
        %5277 = vmatpush1.bf16.msra.mxu0 0
        %5278 = vmatprep.mubr.bf16.mxu0 0
        %5279 = vmatmul.mubr.bf16.gmra.mrb[0].mxu0 %v5232
        %v5280 = vpop.f32.mrb[0].mxu0
        %v5281 = vadd.f32 0.0, %v5280
        %v5282 = vpop.f32.mrb[0].mxu0
        %v5283 = vpop.f32.mrb[0].mxu0
        %v5284 = vadd.f32 0.0, %v5283
        %v5285 = vpop.f32.mrb[0].mxu0
        %5286 = vmatprep.mubr.bf16.mxu0 0
        %5287 = vmatmul.mubr.bf16.gmra.mrb[0].mxu0 %v5235
        %v5288 = vpop.f32.mrb[0].mxu0
        %v5289 = vadd.f32 0.0, %v5288
        %v5290 = vpop.f32.mrb[0].mxu0
        %v5291 = vpop.f32.mrb[0].mxu0
        %v5292 = vadd.f32 0.0, %v5291
        %v5293 = vpop.f32.mrb[0].mxu0
        %5294 = vmatprep.mubr.bf16.mxu0 0
        %5295 = vmatmul.mubr.bf16.gmra.mrb[0].mxu0 %v5238
        %v5296 = vpop.f32.mrb[0].mxu0
        %v5297 = vadd.f32 0.0, %v5296
        %v5298 = vpop.f32.mrb[0].mxu0
        %v5299 = vpop.f32.mrb[0].mxu0
        %v5300 = vadd.f32 0.0, %v5299
        %v5301 = vpop.f32.mrb[0].mxu0
        %5302 = vmatprep.mubr.bf16.mxu0 0
        %5303 = vmatmul.mubr.bf16.gmra.mrb[0].mxu0 %v5241
        %v5304 = vpop.f32.mrb[0].mxu0
        %v5305 = vadd.f32 0.0, %v5304
        %v5306 = vpop.f32.mrb[0].mxu0
        %v5307 = vpop.f32.mrb[0].mxu0
        %v5308 = vadd.f32 0.0, %v5307
        %v5309 = vpop.f32.mrb[0].mxu0
        %5310 = vdwg.mxu0
        %v5311 = vadd.f32 %v5217, %v5281
        %v5312 = vadd.f32 %v5218, %v5284
        %v5313 = vadd.f32 %v5219, %v5289
        %v5314 = vadd.f32 %v5220, %v5292
        %v5315 = vadd.f32 %v5221, %v5297
        %v5316 = vadd.f32 %v5222, %v5300
        %v5317 = vadd.f32 %v5223, %v5305
        %v5318 = vadd.f32 %v5224, %v5308
        %v5319 = vpack.c.bf16 %v4667, %v4664
        %v5320 = vpack.c.bf16 %v4675, %v4672
        %v5321 = vpack.c.bf16 %v4683, %v4680
        %v5322 = vpack.c.bf16 %v4691, %v4688
        %s5323 = scalar_lea.vmem [#allocation13], 12
        %v5324 = vld [vmem:[%s5323] sm:$0x3]
        %v5326 = vsel %vm460, %v5319, 0
        %v5329 = vsel %vm460, %v5320, 0
        %v5332 = vsel %vm460, %v5321, 0
        %v5335 = vsel %vm460, %v5322, 0
        %v5338 = vsel %vm4794, %v5324, 0
        %5340 = vmatprep.subr.bf16.mxu0 0
        %5341 = vmatpush1.bf16.msra.mxu0 %v5338
        %5342 = vmatprep.subr.bf16.mxu0 0
        %5343 = vmatpush1.bf16.msra.mxu0 0
        %5344 = vmatprep.subr.bf16.mxu0 0
        %5345 = vmatpush1.bf16.msra.mxu0 0
        %5346 = vmatprep.subr.bf16.mxu0 0
        %5347 = vmatpush1.bf16.msra.mxu0 0
        %5348 = vmatprep.subr.bf16.mxu0 0
        %5349 = vmatpush1.bf16.msra.mxu0 0
        %5350 = vmatprep.subr.bf16.mxu0 0
        %5351 = vmatpush1.bf16.msra.mxu0 0
        %5352 = vmatprep.subr.bf16.mxu0 0
        %5353 = vmatpush1.bf16.msra.mxu0 0
        %5354 = vmatprep.subr.bf16.mxu0 0
        %5355 = vmatpush1.bf16.msra.mxu0 0
        %5356 = vmatprep.subr.bf16.mxu0 0
        %5357 = vmatpush1.bf16.msra.mxu0 0
        %5358 = vmatprep.subr.bf16.mxu0 0
        %5359 = vmatpush1.bf16.msra.mxu0 0
        %5360 = vmatprep.subr.bf16.mxu0 0
        %5361 = vmatpush1.bf16.msra.mxu0 0
        %5362 = vmatprep.subr.bf16.mxu0 0
        %5363 = vmatpush1.bf16.msra.mxu0 0
        %5364 = vmatprep.subr.bf16.mxu0 0
        %5365 = vmatpush1.bf16.msra.mxu0 0
        %5366 = vmatprep.subr.bf16.mxu0 0
        %5367 = vmatpush1.bf16.msra.mxu0 0
        %5368 = vmatprep.subr.bf16.mxu0 0
        %5369 = vmatpush1.bf16.msra.mxu0 0
        %5370 = vmatprep.subr.bf16.mxu0 0
        %5371 = vmatpush1.bf16.msra.mxu0 0
        %5372 = vmatprep.mubr.bf16.mxu0 0
        %5373 = vmatmul.mubr.bf16.gmra.mrb[0].mxu0 %v5326
        %v5374 = vpop.f32.mrb[0].mxu0
        %v5375 = vadd.f32 0.0, %v5374
        %v5376 = vpop.f32.mrb[0].mxu0
        %v5377 = vpop.f32.mrb[0].mxu0
        %v5378 = vadd.f32 0.0, %v5377
        %v5379 = vpop.f32.mrb[0].mxu0
        %5380 = vmatprep.mubr.bf16.mxu0 0
        %5381 = vmatmul.mubr.bf16.gmra.mrb[0].mxu0 %v5329
        %v5382 = vpop.f32.mrb[0].mxu0
        %v5383 = vadd.f32 0.0, %v5382
        %v5384 = vpop.f32.mrb[0].mxu0
        %v5385 = vpop.f32.mrb[0].mxu0
        %v5386 = vadd.f32 0.0, %v5385
        %v5387 = vpop.f32.mrb[0].mxu0
        %5388 = vmatprep.mubr.bf16.mxu0 0
        %5389 = vmatmul.mubr.bf16.gmra.mrb[0].mxu0 %v5332
        %v5390 = vpop.f32.mrb[0].mxu0
        %v5391 = vadd.f32 0.0, %v5390
        %v5392 = vpop.f32.mrb[0].mxu0
        %v5393 = vpop.f32.mrb[0].mxu0
        %v5394 = vadd.f32 0.0, %v5393
        %v5395 = vpop.f32.mrb[0].mxu0
        %5396 = vmatprep.mubr.bf16.mxu0 0
        %5397 = vmatmul.mubr.bf16.gmra.mrb[0].mxu0 %v5335
        %v5398 = vpop.f32.mrb[0].mxu0
        %v5399 = vadd.f32 0.0, %v5398
        %v5400 = vpop.f32.mrb[0].mxu0
        %v5401 = vpop.f32.mrb[0].mxu0
        %v5402 = vadd.f32 0.0, %v5401
        %v5403 = vpop.f32.mrb[0].mxu0
        %5404 = vdwg.mxu0
        %v5405 = vadd.f32 %v5311, %v5375
        %v5406 = vadd.f32 %v5312, %v5378
        %v5407 = vadd.f32 %v5313, %v5383
        %v5408 = vadd.f32 %v5314, %v5386
        %v5409 = vadd.f32 %v5315, %v5391
        %v5410 = vadd.f32 %v5316, %v5394
        %v5411 = vadd.f32 %v5317, %v5399
        %v5412 = vadd.f32 %v5318, %v5402
        %v5413 = vpack.c.bf16 %v4744, %v4741
        %v5414 = vpack.c.bf16 %v4752, %v4749
        %v5415 = vpack.c.bf16 %v4760, %v4757
        %v5416 = vpack.c.bf16 %v4768, %v4765
        %s5417 = scalar_lea.vmem [#allocation13], 14
        %v5418 = vld [vmem:[%s5417] sm:$0x3]
        %v5420 = vsel %vm460, %v5413, 0
        %v5423 = vsel %vm460, %v5414, 0
        %v5426 = vsel %vm460, %v5415, 0
        %v5429 = vsel %vm460, %v5416, 0
        %v5432 = vsel %vm4794, %v5418, 0
        %5434 = vmatprep.subr.bf16.mxu0 0
        %5435 = vmatpush1.bf16.msra.mxu0 %v5432
        %5436 = vmatprep.subr.bf16.mxu0 0
        %5437 = vmatpush1.bf16.msra.mxu0 0
        %5438 = vmatprep.subr.bf16.mxu0 0
        %5439 = vmatpush1.bf16.msra.mxu0 0
        %5440 = vmatprep.subr.bf16.mxu0 0
        %5441 = vmatpush1.bf16.msra.mxu0 0
        %5442 = vmatprep.subr.bf16.mxu0 0
        %5443 = vmatpush1.bf16.msra.mxu0 0
        %5444 = vmatprep.subr.bf16.mxu0 0
        %5445 = vmatpush1.bf16.msra.mxu0 0
        %5446 = vmatprep.subr.bf16.mxu0 0
        %5447 = vmatpush1.bf16.msra.mxu0 0
        %5448 = vmatprep.subr.bf16.mxu0 0
        %5449 = vmatpush1.bf16.msra.mxu0 0
        %5450 = vmatprep.subr.bf16.mxu0 0
        %5451 = vmatpush1.bf16.msra.mxu0 0
        %5452 = vmatprep.subr.bf16.mxu0 0
        %5453 = vmatpush1.bf16.msra.mxu0 0
        %5454 = vmatprep.subr.bf16.mxu0 0
        %5455 = vmatpush1.bf16.msra.mxu0 0
        %5456 = vmatprep.subr.bf16.mxu0 0
        %5457 = vmatpush1.bf16.msra.mxu0 0
        %5458 = vmatprep.subr.bf16.mxu0 0
        %5459 = vmatpush1.bf16.msra.mxu0 0
        %5460 = vmatprep.subr.bf16.mxu0 0
        %5461 = vmatpush1.bf16.msra.mxu0 0
        %5462 = vmatprep.subr.bf16.mxu0 0
        %5463 = vmatpush1.bf16.msra.mxu0 0
        %5464 = vmatprep.subr.bf16.mxu0 0
        %5465 = vmatpush1.bf16.msra.mxu0 0
        %5466 = vmatprep.mubr.bf16.mxu0 0
        %5467 = vmatmul.mubr.bf16.gmra.mrb[0].mxu0 %v5420
        %v5468 = vpop.f32.mrb[0].mxu0
        %v5469 = vadd.f32 0.0, %v5468
        %v5470 = vpop.f32.mrb[0].mxu0
        %v5471 = vpop.f32.mrb[0].mxu0
        %v5472 = vadd.f32 0.0, %v5471
        %v5473 = vpop.f32.mrb[0].mxu0
        %5474 = vmatprep.mubr.bf16.mxu0 0
        %5475 = vmatmul.mubr.bf16.gmra.mrb[0].mxu0 %v5423
        %v5476 = vpop.f32.mrb[0].mxu0
        %v5477 = vadd.f32 0.0, %v5476
        %v5478 = vpop.f32.mrb[0].mxu0
        %v5479 = vpop.f32.mrb[0].mxu0
        %v5480 = vadd.f32 0.0, %v5479
        %v5481 = vpop.f32.mrb[0].mxu0
        %5482 = vmatprep.mubr.bf16.mxu0 0
        %5483 = vmatmul.mubr.bf16.gmra.mrb[0].mxu0 %v5426
        %v5484 = vpop.f32.mrb[0].mxu0
        %v5485 = vadd.f32 0.0, %v5484
        %v5486 = vpop.f32.mrb[0].mxu0
        %v5487 = vpop.f32.mrb[0].mxu0
        %v5488 = vadd.f32 0.0, %v5487
        %v5489 = vpop.f32.mrb[0].mxu0
        %5490 = vmatprep.mubr.bf16.mxu0 0
        %5491 = vmatmul.mubr.bf16.gmra.mrb[0].mxu0 %v5429
        %v5492 = vpop.f32.mrb[0].mxu0
        %v5493 = vadd.f32 0.0, %v5492
        %v5494 = vpop.f32.mrb[0].mxu0
        %v5495 = vpop.f32.mrb[0].mxu0
        %v5496 = vadd.f32 0.0, %v5495
        %v5497 = vpop.f32.mrb[0].mxu0
        %5498 = vdwg.mxu0
        %v5499 = vadd.f32 %v5405, %v5469
        %v5500 = vadd.f32 %v5406, %v5472
        %v5501 = vadd.f32 %v5407, %v5477
        %v5502 = vadd.f32 %v5408, %v5480
        %v5503 = vadd.f32 %v5409, %v5485
        %v5504 = vadd.f32 %v5410, %v5488
        %v5505 = vadd.f32 %v5411, %v5493
        %v5506 = vadd.f32 %v5412, %v5496
        %v5507 = vld [vmem:[#allocation14] sm:$0x1]
        %v5509 = vlaneseq
        %v5510 = vshrl.u32 %v5509, 7
        %v5511 = vsub.s32 0, %v5510
        %v5512 = vrot.slane %v5507, %v5511
        %v5514 = vadd.f32 %v5499, %v5512
        %v5515 = vadd.f32 %v5500, %v5512
        %v5516 = vadd.f32 %v5501, %v5512
        %v5517 = vadd.f32 %v5502, %v5512
        %v5518 = vadd.f32 %v5503, %v5512
        %v5519 = vadd.f32 %v5504, %v5512
        %v5520 = vadd.f32 %v5505, %v5512
        %v5521 = vadd.f32 %v5506, %v5512
        %5522 = vst.msk [vmem:[%s340] sm:$0xff] %vm370, %v5514
        %5523 = vst.msk [vmem:[%s340 + $0x8] sm:$0xff] %vm370, %v5515
        %5524 = vst.msk [vmem:[%s340 + $0x10] sm:$0xff] %vm370, %v5516
        %5525 = vst.msk [vmem:[%s340 + $0x18] sm:$0xff] %vm370, %v5517
        %5526 = vst.msk [vmem:[%s340 + $0x20] sm:$0xff] %vm370, %v5518
        %5527 = vst.msk [vmem:[%s340 + $0x28] sm:$0xff] %vm370, %v5519
        %5528 = vst.msk [vmem:[%s340 + $0x30] sm:$0xff] %vm370, %v5520
        %5529 = vst.msk [vmem:[%s340 + $0x38] sm:$0xff] %vm370, %v5521
        %s5530 = sand.u32 %s165, 1
        %s5531 = scalar_lea.sflag [#allocation7], %s5530
        %s5532 = sand.u32 %s165, 1
        %s5533 = smul.addr %s5532, 64
        %s5534 = scalar_lea.vmem [#allocation16], %s5533
        // Predicated region
        $region69: #{tpu_custom_call.1} parent=43 // pred_check
          %p5535 = pneg %p175
        $region70: #{tpu_custom_call.1} parent=43 // pred_check_branch
          %5537 = sbr.rel (%p5535) target = $region72
        $region71: #{tpu_custom_call.1} parent=43 // pred_region
          %s5539 = ssub.s32 1024, 1024
          %5540 = vsyncadd %s5531, %s5539
          %s5541 = smul.addr %s26, 8
          %s5542 = smul.addr %s5541, 128
          %s5543 = scalar_lea.hbm %s6, %s5542
          %s5544 = sshll.u32 %s5534, 4
          %s5545 = int_to_ptr.vmem [resolvable:$true] %s5544
          %5550 = dma.vmem_to_hbm [thread:$0]  %s5545, 1024, %s5543, %s5531, 128, 128, 8
        $region72: #{tpu_custom_call.1} parent=43 // pred_fallthru
          _
      $region44: #{tpu_custom_call.1} parent=5 // pred_fallthru
        _
      %p5551 = scmp.le.s32.totalorder 2, %s21
      // Predicated region
      $region73: #{tpu_custom_call.1} parent=5 // pred_check
        %p5552 = pneg %p5551
      $region74: #{tpu_custom_call.1} parent=5 // pred_check_branch
        %5554 = sbr.rel (%p5552) target = $region76
      $region75: #{tpu_custom_call.1} parent=5 // pred_region
        %s5555 = ssub.s32 %s21, 2
        // Predicated region
        $region77: #{tpu_custom_call.1} parent=75 // pred_check
          %p5556 = pneg %p181
        $region78: #{tpu_custom_call.1} parent=75 // pred_check_branch
          %5558 = sbr.rel (%p5556) target = $region80
        $region79: #{tpu_custom_call.1} parent=75 // pred_region
          %s5559 = sand.u32 %s166, 1
          %s5560 = scalar_lea.sflag [#allocation7], %s5559
          %s5561 = sand.u32 %s166, 1
          %s5562 = smul.addr %s5561, 64
          %s5563 = scalar_lea.vmem [#allocation16], %s5562
          %5564 = dma.done %s5560, 1024
        $region80: #{tpu_custom_call.1} parent=75 // pred_fallthru
          _
      $region76: #{tpu_custom_call.1} parent=5 // pred_fallthru
        _
    $region6: #{tpu_custom_call.1} parent=1 // loop_footer
      %s25 = sadd.s32 1, %s21
    $region7: #{tpu_custom_call.1} parent=1 // loop_footer_branch
      %20 = sbr.rel target = $region3
    $region8: #{tpu_custom_call.1} parent=1 // loop_exit
      _
    %5565 = vsyncpa [#allocation6], 1
    %s5566 = scalar_lea.sflag [#allocation6], 1
    %5567 = vsyncpa %s5566, 1
    %5568 = vsyncpa [#allocation9], 1
    %5569 = vsyncpa [#allocation12], 1
    %5570 = vsyncpa [#allocation15], 1
    %5571 = vsyncpa [#allocation7], 1
    %s5572 = scalar_lea.sflag [#allocation7], 1
    %5573 = vsyncpa %s5572, 1

</llo_original>
